<compile_context>
chip_gen: v6e
topology: v6e:2x2x1
jax: 0.10.0
libtpu: 0.0.40
codegen_flags: <defaults>
</compile_context>

<pallas_src>
import jax
import jax.numpy as jnp
from jax.experimental import pallas as pl
from jax.experimental.pallas import tpu as pltpu

CHUNK_OUT = 128  # output elements per length "chunk" (one lane width)


def _make_kernel(use_vpu_conv):
    def kernel(x_ref, sel_ref, w_ref, o_ref):
        # x_ref:   (c_in, tc, chunk_in)   streaming input tile (contiguous in HBM)
        # sel_ref: (chunk_in, CHUNK_OUT)  fixed 0/1 decimation matrix (resident in VMEM)
        # w_ref:   (c_out, c_in)          Conv1d(k=1, bias=False) weight (SMEM or VMEM)
        # o_ref:   (c_out, tc, CHUNK_OUT) lane-dense output tile
        c_in = x_ref.shape[0]
        c_out = o_ref.shape[0]
        sel = sel_ref[...]

        if use_vpu_conv:
            # Per-channel decimation on the MXU (exact at HIGHEST precision), then the
            # tiny 1x1 conv as broadcast MACs on the VPU with SMEM scalar weights.
            d = [
                jax.lax.dot(
                    x_ref[ci],
                    sel,
                    precision=jax.lax.Precision.HIGHEST,
                    preferred_element_type=jnp.float32,
                )
                for ci in range(c_in)
            ]  # each (tc, CHUNK_OUT)
            for co in range(c_out):
                acc = w_ref[co, 0] * d[0]
                for ci in range(1, c_in):
                    acc = acc + w_ref[co, ci] * d[ci]
                o_ref[co, :, :] = acc.astype(o_ref.dtype)
        else:
            # Large-channel fallback: both steps on the MXU.
            c_in_, tc, chunk_in = x_ref.shape
            chunk_out = o_ref.shape[-1]
            x2 = x_ref[...].reshape(c_in_ * tc, chunk_in)
            dm = jax.lax.dot(
                x2, sel,
                precision=jax.lax.Precision.HIGHEST,
                preferred_element_type=jnp.float32,
            )  # (c_in*tc, chunk_out)
            dm = dm.reshape(c_in_, tc * chunk_out)
            out = jax.lax.dot(
                w_ref[...].astype(jnp.float32), dm,
                precision=jax.lax.Precision.HIGHEST,
                preferred_element_type=jnp.float32,
            )
            o_ref[...] = out.reshape(c_out, tc, chunk_out).astype(o_ref.dtype)

    return kernel


def _pick_chunk_tile(n_chunks, c_in, c_out, chunk_in, chunk_out, itemsize, target_bytes):
    """Chunks per grid step: multiple of 8, ~target_bytes of streaming payload/step."""
    per_chunk = max(c_in * chunk_in, c_out * chunk_out) * itemsize
    cap = max(8, (int(target_bytes) // per_chunk) // 8 * 8)
    if n_chunks >= 16:
        # keep >=2 length tiles so both v7x TensorCores get work even at batch=1
        cap = min(cap, max(8, (n_chunks // 2) // 8 * 8))
    if n_chunks <= cap:
        return max(8, -(-n_chunks // 8) * 8)  # single tile (chunks padded to mult of 8)
    t = cap
    while t >= 8:
        if n_chunks % t == 0:  # exact division -> no padding, no output slice
            return t
        t -= 8
    return cap  # ragged chunk count: wrapper pads chunks up to a multiple of cap


def downsample(x_ncl, weight, downsample_rate=0.5, target_tile_bytes=2 * 1024 * 1024):
    """x_ncl: (B, Cin, L); weight: (Cout, Cin) or (Cout, Cin, 1). Returns (B, Cout, Lout)."""
    if weight.ndim == 3:  # PyTorch Conv1d weight layout (Cout, Cin, 1)
        weight = weight[:, :, 0]
    b, c_in, l = x_ncl.shape
    c_out = weight.shape[0]

    # nn.Upsample(scale_factor=1/k, mode='nearest'): Lout = floor(L/k), out[i] = in[k*i]
    stride = int(round(1.0 / float(downsample_rate)))
    if abs(stride * downsample_rate - 1.0) > 1e-6:
        # TODO(synk): general (non 1/k) nearest scale factors are not supported.
        raise ValueError("downsample_rate must be 1/k for an integer k")
    l_out = l // stride
    if l_out <= 0:
        raise ValueError("input too short for this downsample rate")

    chunk_in = CHUNK_OUT * stride
    itemsize = x_ncl.dtype.itemsize
    n_chunks = pl.cdiv(l_out, CHUNK_OUT)
    tc = _pick_chunk_tile(
        n_chunks, c_in, c_out, chunk_in, CHUNK_OUT, itemsize, target_tile_bytes
    )
    n_chunks_pad = -(-n_chunks // tc) * tc
    n_tiles = n_chunks_pad // tc

    # Free contiguous reshape of the length axis into (chunks, chunk_in); pad/trim only
    # in the ragged case (TODO(synk): handle ragged L via partial edge blocks instead).
    target_len = n_chunks_pad * chunk_in
    if l == target_len:
        x_p = x_ncl
    elif l > target_len:
        x_p = x_ncl[:, :, :target_len]  # dropped tail is never read (>= Lout*stride)
    else:
        x_p = jnp.pad(x_ncl, ((0, 0), (0, 0), (0, target_len - l)))
    x_r = x_p.reshape(b, c_in, n_chunks_pad, chunk_in)

    # Fixed per-chunk 0/1 decimation matrix: sel[k, j] = (k == stride * j).
    sel = (
        jnp.arange(chunk_in, dtype=jnp.int32)[:, None]
        == stride * jnp.arange(CHUNK_OUT, dtype=jnp.int32)[None, :]
    ).astype(x_ncl.dtype)

    use_vpu_conv = (c_in * c_out) <= 128
    if use_vpu_conv:
        # Weight as SMEM scalars for the VPU broadcast-MAC conv.
        w_spec = pl.BlockSpec(memory_space=pltpu.MemorySpace.SMEM)
        w_arg = weight.astype(jnp.float32)
    else:
        w_spec = pl.BlockSpec((c_out, c_in), lambda i, t: (0, 0))  # resident VMEM block
        w_arg = weight

    # Double-buffered streaming blocks + resident sel; 2x margin for kernel temporaries.
    x_block = c_in * tc * chunk_in * itemsize
    o_block = c_out * tc * CHUNK_OUT * itemsize
    vmem_need = 2 * (x_block + o_block) + 2 * chunk_in * CHUNK_OUT * itemsize
    # Clamp to <=48 MiB so it also fits v7x's 64 MiB VMEM while lifting v5e/v6e defaults.
    vmem_limit = int(min(48 * 2**20, max(32 * 2**20, 2 * vmem_need)))

    out4 = pl.pallas_call(
        _make_kernel(use_vpu_conv),
        out_shape=jax.ShapeDtypeStruct((b, c_out, n_chunks_pad, CHUNK_OUT), x_ncl.dtype),
        grid_spec=pl.GridSpec(
            grid=(b, n_tiles),
            in_specs=[
                pl.BlockSpec(
                    (pl.Squeezed(), c_in, tc, chunk_in), lambda i, t: (i, 0, t, 0)
                ),
                pl.BlockSpec((chunk_in, CHUNK_OUT), lambda i, t: (0, 0)),  # resident
                w_spec,
            ],
            out_specs=pl.BlockSpec(
                (pl.Squeezed(), c_out, tc, CHUNK_OUT), lambda i, t: (i, 0, t, 0)
            ),
        ),
        compiler_params=pltpu.CompilerParams(
            dimension_semantics=("parallel", "parallel"),
            vmem_limit_bytes=vmem_limit,
        ),
    )(x_r, sel, w_arg)

    out = out4.reshape(b, c_out, n_chunks_pad * CHUNK_OUT)
    if n_chunks_pad * CHUNK_OUT != l_out:
        out = out[:, :, :l_out]  # only in the ragged / padded case
    return out  # (B, Cout, Lout), NCL layout preserved


if __name__ == "__main__":
    key = jax.random.PRNGKey(0)
    kx, kw, kx2 = jax.random.split(key, 3)

    def reference(x, w):
        # nearest "upsample" by 0.5 == take every 2nd sample, then 1x1 conv (no bias)
        return jnp.einsum("oc,bcl->bol", w, x[:, :, ::2])

    # Small shapes consistent with the module.
    B, C_IN, C_OUT, L = 2, 4, 8, 16
    x = jax.random.normal(kx, (B, C_IN, L), dtype=jnp.float32)
    w = jax.random.normal(kw, (C_OUT, C_IN), dtype=jnp.float32) * 0.1

    y = jax.block_until_ready(downsample(x, w, downsample_rate=0.5))
    assert y.shape == (B, C_OUT, L // 2), y.shape
    assert jnp.allclose(y, reference(x, w), atol=1e-5, rtol=1e-5)

    # Longer length to exercise the streaming (batch, length-tile) grid with >=2 tiles.
    L2 = 65536
    x2 = jax.random.normal(kx2, (1, C_IN, L2), dtype=jnp.float32)
    y2 = jax.block_until_ready(downsample(x2, w, downsample_rate=0.5))
    assert y2.shape == (1, C_OUT, L2 // 2), y2.shape
    assert jnp.allclose(y2, reference(x2, w), atol=1e-5, rtol=1e-5)

    print("KERNEL_OK")
</pallas_src>

<mosaic_0001>
module attributes {stable_mosaic.version = 11 : i64} {
  func.func @kernel(%arg0: i32, %arg1: i32, %arg2: memref<1x4x8x256xf32, #tpu.memory_space<vmem>>, %arg3: memref<256x128xf32, #tpu.memory_space<vmem>>, %arg4: memref<8x4xf32, #tpu.memory_space<smem>>, %arg5: memref<1x8x8x128xf32, #tpu.memory_space<vmem>>) attributes {dimension_semantics = [#tpu.dimension_semantics<parallel>, #tpu.dimension_semantics<parallel>], iteration_bounds = array<i64: 2, 1>, scalar_prefetch = 0 : i64, scratch_operands = 0 : i64, tpu.core_type = #tpu.core_type<tc>, window_params = [{transform_indices = @transform_0, window_bounds = array<i64: 1, 4, 8, 256>}, {pipeline_mode = #tpu.pipeline_mode<synchronous>, transform_indices = @transform_1, window_bounds = array<i64: 256, 128>}, {transform_indices = @transform_2, window_bounds = array<i64: 8, 4>}, {transform_indices = @transform_3, window_bounds = array<i64: 1, 8, 8, 128>}]} {
    %c0 = arith.constant 0 : index
    %c0_0 = arith.constant 0 : index
    %0 = vector.load %arg3[%c0, %c0_0] : memref<256x128xf32, #tpu.memory_space<vmem>>, vector<256x128xf32>
    %c0_1 = arith.constant 0 : index
    %c0_2 = arith.constant 0 : index
    %c0_3 = arith.constant 0 : index
    %c0_4 = arith.constant 0 : index
    %1 = vector.load %arg2[%c0_1, %c0_2, %c0_3, %c0_4] : memref<1x4x8x256xf32, #tpu.memory_space<vmem>>, vector<1x1x8x256xf32>
    %2 = vector.shape_cast %1 : vector<1x1x8x256xf32> to vector<8x256xf32>
    %cst = arith.constant dense<0.000000e+00> : vector<8x128xf32>
    %3 = tpu.matmul %2, %0, %cst {dimension_numbers = #tpu.dot_dimension_numbers<[1], [0], [0], [1], [0, 0, 1, 1], [], []>, precision = #tpu.contract_precision<fp32>} : vector<8x256xf32>, vector<256x128xf32>, vector<8x128xf32> -> vector<8x128xf32>
    %c0_5 = arith.constant 0 : index
    %c1 = arith.constant 1 : index
    %c0_6 = arith.constant 0 : index
    %c0_7 = arith.constant 0 : index
    %4 = vector.load %arg2[%c0_5, %c1, %c0_6, %c0_7] : memref<1x4x8x256xf32, #tpu.memory_space<vmem>>, vector<1x1x8x256xf32>
    %5 = vector.shape_cast %4 : vector<1x1x8x256xf32> to vector<8x256xf32>
    %cst_8 = arith.constant dense<0.000000e+00> : vector<8x128xf32>
    %6 = tpu.matmul %5, %0, %cst_8 {dimension_numbers = #tpu.dot_dimension_numbers<[1], [0], [0], [1], [0, 0, 1, 1], [], []>, precision = #tpu.contract_precision<fp32>} : vector<8x256xf32>, vector<256x128xf32>, vector<8x128xf32> -> vector<8x128xf32>
    %c0_9 = arith.constant 0 : index
    %c2 = arith.constant 2 : index
    %c0_10 = arith.constant 0 : index
    %c0_11 = arith.constant 0 : index
    %7 = vector.load %arg2[%c0_9, %c2, %c0_10, %c0_11] : memref<1x4x8x256xf32, #tpu.memory_space<vmem>>, vector<1x1x8x256xf32>
    %8 = vector.shape_cast %7 : vector<1x1x8x256xf32> to vector<8x256xf32>
    %cst_12 = arith.constant dense<0.000000e+00> : vector<8x128xf32>
    %9 = tpu.matmul %8, %0, %cst_12 {dimension_numbers = #tpu.dot_dimension_numbers<[1], [0], [0], [1], [0, 0, 1, 1], [], []>, precision = #tpu.contract_precision<fp32>} : vector<8x256xf32>, vector<256x128xf32>, vector<8x128xf32> -> vector<8x128xf32>
    %c0_13 = arith.constant 0 : index
    %c3 = arith.constant 3 : index
    %c0_14 = arith.constant 0 : index
    %c0_15 = arith.constant 0 : index
    %10 = vector.load %arg2[%c0_13, %c3, %c0_14, %c0_15] : memref<1x4x8x256xf32, #tpu.memory_space<vmem>>, vector<1x1x8x256xf32>
    %11 = vector.shape_cast %10 : vector<1x1x8x256xf32> to vector<8x256xf32>
    %cst_16 = arith.constant dense<0.000000e+00> : vector<8x128xf32>
    %12 = tpu.matmul %11, %0, %cst_16 {dimension_numbers = #tpu.dot_dimension_numbers<[1], [0], [0], [1], [0, 0, 1, 1], [], []>, precision = #tpu.contract_precision<fp32>} : vector<8x256xf32>, vector<256x128xf32>, vector<8x128xf32> -> vector<8x128xf32>
    %c0_17 = arith.constant 0 : index
    %c0_18 = arith.constant 0 : index
    %13 = memref.load %arg4[%c0_17, %c0_18] : memref<8x4xf32, #tpu.memory_space<smem>>
    %14 = vector.broadcast %13 : f32 to vector<8x128xf32>
    %15 = arith.mulf %14, %3 : vector<8x128xf32>
    %c0_19 = arith.constant 0 : index
    %c1_20 = arith.constant 1 : index
    %16 = memref.load %arg4[%c0_19, %c1_20] : memref<8x4xf32, #tpu.memory_space<smem>>
    %17 = vector.broadcast %16 : f32 to vector<8x128xf32>
    %18 = arith.mulf %17, %6 : vector<8x128xf32>
    %19 = arith.addf %15, %18 : vector<8x128xf32>
    %c0_21 = arith.constant 0 : index
    %c2_22 = arith.constant 2 : index
    %20 = memref.load %arg4[%c0_21, %c2_22] : memref<8x4xf32, #tpu.memory_space<smem>>
    %21 = vector.broadcast %20 : f32 to vector<8x128xf32>
    %22 = arith.mulf %21, %9 : vector<8x128xf32>
    %23 = arith.addf %19, %22 : vector<8x128xf32>
    %c0_23 = arith.constant 0 : index
    %c3_24 = arith.constant 3 : index
    %24 = memref.load %arg4[%c0_23, %c3_24] : memref<8x4xf32, #tpu.memory_space<smem>>
    %25 = vector.broadcast %24 : f32 to vector<8x128xf32>
    %26 = arith.mulf %25, %12 : vector<8x128xf32>
    %27 = arith.addf %23, %26 : vector<8x128xf32>
    %c0_25 = arith.constant 0 : index
    %c0_26 = arith.constant 0 : index
    %c0_27 = arith.constant 0 : index
    %c0_28 = arith.constant 0 : index
    %28 = vector.load %arg5[%c0_25, %c0_26, %c0_27, %c0_28] : memref<1x8x8x128xf32, #tpu.memory_space<vmem>>, vector<1x1x8x128xf32>
    %29 = vector.shape_cast %28 : vector<1x1x8x128xf32> to vector<8x128xf32>
    %30 = vector.shape_cast %27 : vector<8x128xf32> to vector<1x1x8x128xf32>
    tpu.vector_store %arg5[%c0_25, %c0_26, %c0_27, %c0_28], %30 {strides = array<i32>} : memref<1x8x8x128xf32, #tpu.memory_space<vmem>>, vector<1x1x8x128xf32>,
    %c1_29 = arith.constant 1 : index
    %c0_30 = arith.constant 0 : index
    %31 = memref.load %arg4[%c1_29, %c0_30] : memref<8x4xf32, #tpu.memory_space<smem>>
    %32 = vector.broadcast %31 : f32 to vector<8x128xf32>
    %33 = arith.mulf %32, %3 : vector<8x128xf32>
    %c1_31 = arith.constant 1 : index
    %c1_32 = arith.constant 1 : index
    %34 = memref.load %arg4[%c1_31, %c1_32] : memref<8x4xf32, #tpu.memory_space<smem>>
    %35 = vector.broadcast %34 : f32 to vector<8x128xf32>
    %36 = arith.mulf %35, %6 : vector<8x128xf32>
    %37 = arith.addf %33, %36 : vector<8x128xf32>
    %c1_33 = arith.constant 1 : index
    %c2_34 = arith.constant 2 : index
    %38 = memref.load %arg4[%c1_33, %c2_34] : memref<8x4xf32, #tpu.memory_space<smem>>
    %39 = vector.broadcast %38 : f32 to vector<8x128xf32>
    %40 = arith.mulf %39, %9 : vector<8x128xf32>
    %41 = arith.addf %37, %40 : vector<8x128xf32>
    %c1_35 = arith.constant 1 : index
    %c3_36 = arith.constant 3 : index
    %42 = memref.load %arg4[%c1_35, %c3_36] : memref<8x4xf32, #tpu.memory_space<smem>>
    %43 = vector.broadcast %42 : f32 to vector<8x128xf32>
    %44 = arith.mulf %43, %12 : vector<8x128xf32>
    %45 = arith.addf %41, %44 : vector<8x128xf32>
    %c0_37 = arith.constant 0 : index
    %c1_38 = arith.constant 1 : index
    %c0_39 = arith.constant 0 : index
    %c0_40 = arith.constant 0 : index
    %46 = vector.load %arg5[%c0_37, %c1_38, %c0_39, %c0_40] : memref<1x8x8x128xf32, #tpu.memory_space<vmem>>, vector<1x1x8x128xf32>
    %47 = vector.shape_cast %46 : vector<1x1x8x128xf32> to vector<8x128xf32>
    %48 = vector.shape_cast %45 : vector<8x128xf32> to vector<1x1x8x128xf32>
    tpu.vector_store %arg5[%c0_37, %c1_38, %c0_39, %c0_40], %48 {strides = array<i32>} : memref<1x8x8x128xf32, #tpu.memory_space<vmem>>, vector<1x1x8x128xf32>,
    %c2_41 = arith.constant 2 : index
    %c0_42 = arith.constant 0 : index
    %49 = memref.load %arg4[%c2_41, %c0_42] : memref<8x4xf32, #tpu.memory_space<smem>>
    %50 = vector.broadcast %49 : f32 to vector<8x128xf32>
    %51 = arith.mulf %50, %3 : vector<8x128xf32>
    %c2_43 = arith.constant 2 : index
    %c1_44 = arith.constant 1 : index
    %52 = memref.load %arg4[%c2_43, %c1_44] : memref<8x4xf32, #tpu.memory_space<smem>>
    %53 = vector.broadcast %52 : f32 to vector<8x128xf32>
    %54 = arith.mulf %53, %6 : vector<8x128xf32>
    %55 = arith.addf %51, %54 : vector<8x128xf32>
    %c2_45 = arith.constant 2 : index
    %c2_46 = arith.constant 2 : index
    %56 = memref.load %arg4[%c2_45, %c2_46] : memref<8x4xf32, #tpu.memory_space<smem>>
    %57 = vector.broadcast %56 : f32 to vector<8x128xf32>
    %58 = arith.mulf %57, %9 : vector<8x128xf32>
    %59 = arith.addf %55, %58 : vector<8x128xf32>
    %c2_47 = arith.constant 2 : index
    %c3_48 = arith.constant 3 : index
    %60 = memref.load %arg4[%c2_47, %c3_48] : memref<8x4xf32, #tpu.memory_space<smem>>
    %61 = vector.broadcast %60 : f32 to vector<8x128xf32>
    %62 = arith.mulf %61, %12 : vector<8x128xf32>
    %63 = arith.addf %59, %62 : vector<8x128xf32>
    %c0_49 = arith.constant 0 : index
    %c2_50 = arith.constant 2 : index
    %c0_51 = arith.constant 0 : index
    %c0_52 = arith.constant 0 : index
    %64 = vector.load %arg5[%c0_49, %c2_50, %c0_51, %c0_52] : memref<1x8x8x128xf32, #tpu.memory_space<vmem>>, vector<1x1x8x128xf32>
    %65 = vector.shape_cast %64 : vector<1x1x8x128xf32> to vector<8x128xf32>
    %66 = vector.shape_cast %63 : vector<8x128xf32> to vector<1x1x8x128xf32>
    tpu.vector_store %arg5[%c0_49, %c2_50, %c0_51, %c0_52], %66 {strides = array<i32>} : memref<1x8x8x128xf32, #tpu.memory_space<vmem>>, vector<1x1x8x128xf32>,
    %c3_53 = arith.constant 3 : index
    %c0_54 = arith.constant 0 : index
    %67 = memref.load %arg4[%c3_53, %c0_54] : memref<8x4xf32, #tpu.memory_space<smem>>
    %68 = vector.broadcast %67 : f32 to vector<8x128xf32>
    %69 = arith.mulf %68, %3 : vector<8x128xf32>
    %c3_55 = arith.constant 3 : index
    %c1_56 = arith.constant 1 : index
    %70 = memref.load %arg4[%c3_55, %c1_56] : memref<8x4xf32, #tpu.memory_space<smem>>
    %71 = vector.broadcast %70 : f32 to vector<8x128xf32>
    %72 = arith.mulf %71, %6 : vector<8x128xf32>
    %73 = arith.addf %69, %72 : vector<8x128xf32>
    %c3_57 = arith.constant 3 : index
    %c2_58 = arith.constant 2 : index
    %74 = memref.load %arg4[%c3_57, %c2_58] : memref<8x4xf32, #tpu.memory_space<smem>>
    %75 = vector.broadcast %74 : f32 to vector<8x128xf32>
    %76 = arith.mulf %75, %9 : vector<8x128xf32>
    %77 = arith.addf %73, %76 : vector<8x128xf32>
    %c3_59 = arith.constant 3 : index
    %c3_60 = arith.constant 3 : index
    %78 = memref.load %arg4[%c3_59, %c3_60] : memref<8x4xf32, #tpu.memory_space<smem>>
    %79 = vector.broadcast %78 : f32 to vector<8x128xf32>
    %80 = arith.mulf %79, %12 : vector<8x128xf32>
    %81 = arith.addf %77, %80 : vector<8x128xf32>
    %c0_61 = arith.constant 0 : index
    %c3_62 = arith.constant 3 : index
    %c0_63 = arith.constant 0 : index
    %c0_64 = arith.constant 0 : index
    %82 = vector.load %arg5[%c0_61, %c3_62, %c0_63, %c0_64] : memref<1x8x8x128xf32, #tpu.memory_space<vmem>>, vector<1x1x8x128xf32>
    %83 = vector.shape_cast %82 : vector<1x1x8x128xf32> to vector<8x128xf32>
    %84 = vector.shape_cast %81 : vector<8x128xf32> to vector<1x1x8x128xf32>
    tpu.vector_store %arg5[%c0_61, %c3_62, %c0_63, %c0_64], %84 {strides = array<i32>} : memref<1x8x8x128xf32, #tpu.memory_space<vmem>>, vector<1x1x8x128xf32>,
    %c4 = arith.constant 4 : index
    %c0_65 = arith.constant 0 : index
    %85 = memref.load %arg4[%c4, %c0_65] : memref<8x4xf32, #tpu.memory_space<smem>>
    %86 = vector.broadcast %85 : f32 to vector<8x128xf32>
    %87 = arith.mulf %86, %3 : vector<8x128xf32>
    %c4_66 = arith.constant 4 : index
    %c1_67 = arith.constant 1 : index
    %88 = memref.load %arg4[%c4_66, %c1_67] : memref<8x4xf32, #tpu.memory_space<smem>>
    %89 = vector.broadcast %88 : f32 to vector<8x128xf32>
    %90 = arith.mulf %89, %6 : vector<8x128xf32>
    %91 = arith.addf %87, %90 : vector<8x128xf32>
    %c4_68 = arith.constant 4 : index
    %c2_69 = arith.constant 2 : index
    %92 = memref.load %arg4[%c4_68, %c2_69] : memref<8x4xf32, #tpu.memory_space<smem>>
    %93 = vector.broadcast %92 : f32 to vector<8x128xf32>
    %94 = arith.mulf %93, %9 : vector<8x128xf32>
    %95 = arith.addf %91, %94 : vector<8x128xf32>
    %c4_70 = arith.constant 4 : index
    %c3_71 = arith.constant 3 : index
    %96 = memref.load %arg4[%c4_70, %c3_71] : memref<8x4xf32, #tpu.memory_space<smem>>
    %97 = vector.broadcast %96 : f32 to vector<8x128xf32>
    %98 = arith.mulf %97, %12 : vector<8x128xf32>
    %99 = arith.addf %95, %98 : vector<8x128xf32>
    %c0_72 = arith.constant 0 : index
    %c4_73 = arith.constant 4 : index
    %c0_74 = arith.constant 0 : index
    %c0_75 = arith.constant 0 : index
    %100 = vector.load %arg5[%c0_72, %c4_73, %c0_74, %c0_75] : memref<1x8x8x128xf32, #tpu.memory_space<vmem>>, vector<1x1x8x128xf32>
    %101 = vector.shape_cast %100 : vector<1x1x8x128xf32> to vector<8x128xf32>
    %102 = vector.shape_cast %99 : vector<8x128xf32> to vector<1x1x8x128xf32>
    tpu.vector_store %arg5[%c0_72, %c4_73, %c0_74, %c0_75], %102 {strides = array<i32>} : memref<1x8x8x128xf32, #tpu.memory_space<vmem>>, vector<1x1x8x128xf32>,
    %c5 = arith.constant 5 : index
    %c0_76 = arith.constant 0 : index
    %103 = memref.load %arg4[%c5, %c0_76] : memref<8x4xf32, #tpu.memory_space<smem>>
    %104 = vector.broadcast %103 : f32 to vector<8x128xf32>
    %105 = arith.mulf %104, %3 : vector<8x128xf32>
    %c5_77 = arith.constant 5 : index
    %c1_78 = arith.constant 1 : index
    %106 = memref.load %arg4[%c5_77, %c1_78] : memref<8x4xf32, #tpu.memory_space<smem>>
    %107 = vector.broadcast %106 : f32 to vector<8x128xf32>
    %108 = arith.mulf %107, %6 : vector<8x128xf32>
    %109 = arith.addf %105, %108 : vector<8x128xf32>
    %c5_79 = arith.constant 5 : index
    %c2_80 = arith.constant 2 : index
    %110 = memref.load %arg4[%c5_79, %c2_80] : memref<8x4xf32, #tpu.memory_space<smem>>
    %111 = vector.broadcast %110 : f32 to vector<8x128xf32>
    %112 = arith.mulf %111, %9 : vector<8x128xf32>
    %113 = arith.addf %109, %112 : vector<8x128xf32>
    %c5_81 = arith.constant 5 : index
    %c3_82 = arith.constant 3 : index
    %114 = memref.load %arg4[%c5_81, %c3_82] : memref<8x4xf32, #tpu.memory_space<smem>>
    %115 = vector.broadcast %114 : f32 to vector<8x128xf32>
    %116 = arith.mulf %115, %12 : vector<8x128xf32>
    %117 = arith.addf %113, %116 : vector<8x128xf32>
    %c0_83 = arith.constant 0 : index
    %c5_84 = arith.constant 5 : index
    %c0_85 = arith.constant 0 : index
    %c0_86 = arith.constant 0 : index
    %118 = vector.load %arg5[%c0_83, %c5_84, %c0_85, %c0_86] : memref<1x8x8x128xf32, #tpu.memory_space<vmem>>, vector<1x1x8x128xf32>
    %119 = vector.shape_cast %118 : vector<1x1x8x128xf32> to vector<8x128xf32>
    %120 = vector.shape_cast %117 : vector<8x128xf32> to vector<1x1x8x128xf32>
    tpu.vector_store %arg5[%c0_83, %c5_84, %c0_85, %c0_86], %120 {strides = array<i32>} : memref<1x8x8x128xf32, #tpu.memory_space<vmem>>, vector<1x1x8x128xf32>,
    %c6 = arith.constant 6 : index
    %c0_87 = arith.constant 0 : index
    %121 = memref.load %arg4[%c6, %c0_87] : memref<8x4xf32, #tpu.memory_space<smem>>
    %122 = vector.broadcast %121 : f32 to vector<8x128xf32>
    %123 = arith.mulf %122, %3 : vector<8x128xf32>
    %c6_88 = arith.constant 6 : index
    %c1_89 = arith.constant 1 : index
    %124 = memref.load %arg4[%c6_88, %c1_89] : memref<8x4xf32, #tpu.memory_space<smem>>
    %125 = vector.broadcast %124 : f32 to vector<8x128xf32>
    %126 = arith.mulf %125, %6 : vector<8x128xf32>
    %127 = arith.addf %123, %126 : vector<8x128xf32>
    %c6_90 = arith.constant 6 : index
    %c2_91 = arith.constant 2 : index
    %128 = memref.load %arg4[%c6_90, %c2_91] : memref<8x4xf32, #tpu.memory_space<smem>>
    %129 = vector.broadcast %128 : f32 to vector<8x128xf32>
    %130 = arith.mulf %129, %9 : vector<8x128xf32>
    %131 = arith.addf %127, %130 : vector<8x128xf32>
    %c6_92 = arith.constant 6 : index
    %c3_93 = arith.constant 3 : index
    %132 = memref.load %arg4[%c6_92, %c3_93] : memref<8x4xf32, #tpu.memory_space<smem>>
    %133 = vector.broadcast %132 : f32 to vector<8x128xf32>
    %134 = arith.mulf %133, %12 : vector<8x128xf32>
    %135 = arith.addf %131, %134 : vector<8x128xf32>
    %c0_94 = arith.constant 0 : index
    %c6_95 = arith.constant 6 : index
    %c0_96 = arith.constant 0 : index
    %c0_97 = arith.constant 0 : index
    %136 = vector.load %arg5[%c0_94, %c6_95, %c0_96, %c0_97] : memref<1x8x8x128xf32, #tpu.memory_space<vmem>>, vector<1x1x8x128xf32>
    %137 = vector.shape_cast %136 : vector<1x1x8x128xf32> to vector<8x128xf32>
    %138 = vector.shape_cast %135 : vector<8x128xf32> to vector<1x1x8x128xf32>
    tpu.vector_store %arg5[%c0_94, %c6_95, %c0_96, %c0_97], %138 {strides = array<i32>} : memref<1x8x8x128xf32, #tpu.memory_space<vmem>>, vector<1x1x8x128xf32>,
    %c7 = arith.constant 7 : index
    %c0_98 = arith.constant 0 : index
    %139 = memref.load %arg4[%c7, %c0_98] : memref<8x4xf32, #tpu.memory_space<smem>>
    %140 = vector.broadcast %139 : f32 to vector<8x128xf32>
    %141 = arith.mulf %140, %3 : vector<8x128xf32>
    %c7_99 = arith.constant 7 : index
    %c1_100 = arith.constant 1 : index
    %142 = memref.load %arg4[%c7_99, %c1_100] : memref<8x4xf32, #tpu.memory_space<smem>>
    %143 = vector.broadcast %142 : f32 to vector<8x128xf32>
    %144 = arith.mulf %143, %6 : vector<8x128xf32>
    %145 = arith.addf %141, %144 : vector<8x128xf32>
    %c7_101 = arith.constant 7 : index
    %c2_102 = arith.constant 2 : index
    %146 = memref.load %arg4[%c7_101, %c2_102] : memref<8x4xf32, #tpu.memory_space<smem>>
    %147 = vector.broadcast %146 : f32 to vector<8x128xf32>
    %148 = arith.mulf %147, %9 : vector<8x128xf32>
    %149 = arith.addf %145, %148 : vector<8x128xf32>
    %c7_103 = arith.constant 7 : index
    %c3_104 = arith.constant 3 : index
    %150 = memref.load %arg4[%c7_103, %c3_104] : memref<8x4xf32, #tpu.memory_space<smem>>
    %151 = vector.broadcast %150 : f32 to vector<8x128xf32>
    %152 = arith.mulf %151, %12 : vector<8x128xf32>
    %153 = arith.addf %149, %152 : vector<8x128xf32>
    %c0_105 = arith.constant 0 : index
    %c7_106 = arith.constant 7 : index
    %c0_107 = arith.constant 0 : index
    %c0_108 = arith.constant 0 : index
    %154 = vector.load %arg5[%c0_105, %c7_106, %c0_107, %c0_108] : memref<1x8x8x128xf32, #tpu.memory_space<vmem>>, vector<1x1x8x128xf32>
    %155 = vector.shape_cast %154 : vector<1x1x8x128xf32> to vector<8x128xf32>
    %156 = vector.shape_cast %153 : vector<8x128xf32> to vector<1x1x8x128xf32>
    tpu.vector_store %arg5[%c0_105, %c7_106, %c0_107, %c0_108], %156 {strides = array<i32>} : memref<1x8x8x128xf32, #tpu.memory_space<vmem>>, vector<1x1x8x128xf32>,
    return
  }
  func.func @transform_0(%arg0: i32, %arg1: i32) -> (i32, i32, i32, i32) {
    %c0_i32 = arith.constant 0 : i32
    %c0_i32_0 = arith.constant 0 : i32
    %c0_i32_1 = arith.constant 0 : i32
    return %arg0, %c0_i32, %arg1, %c0_i32_0 : i32, i32, i32, i32
  }
  func.func @transform_1(%arg0: i32, %arg1: i32) -> (i32, i32) {
    %c0_i32 = arith.constant 0 : i32
    %c0_i32_0 = arith.constant 0 : i32
    %c0_i32_1 = arith.constant 0 : i32
    return %c0_i32, %c0_i32_0 : i32, i32
  }
  func.func @transform_2(%arg0: i32, %arg1: i32) -> (i32, i32) {
    %c0_i32 = arith.constant 0 : i32
    %c0_i32_0 = arith.constant 0 : i32
    %c0_i32_1 = arith.constant 0 : i32
    return %c0_i32, %c0_i32_0 : i32, i32
  }
  func.func @transform_3(%arg0: i32, %arg1: i32) -> (i32, i32, i32, i32) {
    %c0_i32 = arith.constant 0 : i32
    %c0_i32_0 = arith.constant 0 : i32
    %c0_i32_1 = arith.constant 0 : i32
    return %arg0, %c0_i32, %arg1, %c0_i32_0 : i32, i32, i32, i32
  }
}

</mosaic_0001>

<llo_original>
// kernel: tpu_custom_call.1
$region0: #{tpu_custom_call.1}
  #allocation0 [shape = 'u32[]', space=smem, size = 0x4, offset = 0x4, fixed_abs, tag = 'smem constant byte address 0x4 - core index']
  #allocation1 [shape = 'u32[144,128]{1,0:T(1,128)}', space=vmem, size = 0x12000, scoped, tag = 'internal scratch']
  %s0 = inlined_call_operand.hbm [shape: f32[2,4,8,256], index: 0, kind: input, shape index: {}]
  %s1 = inlined_call_operand.hbm [shape: f32[256,128], index: 1, kind: input, shape index: {}]
  %s2 = inlined_call_operand.vmem [shape: f32[8,4], index: 2, kind: input, shape index: {}]
  %s3 = inlined_call_operand.hbm [shape: f32[2,8,8,128], index: 3, kind: output, shape index: {}]
  %s4 = sld [smem:[#allocation0]]
  $region57: #{tpu_custom_call.1} parent=0
    _
  %s6 = ssub.s32 1, %s4
  %s7 = scalar_select 0, %s6, %s4
  $region1: #{tpu_custom_call.1} parent=0
    #allocation2 [shape = 'u8[65536]{0}', space=vmem, size = 0x10000, scoped, tag = 'input window, operand 0']
    #allocation3 [shape = 's32[2]{0}', space=sflag, size = 0x8, scoped, tag = 'scoped memory for tpu_custom_call.1']
    #allocation4 [shape = 's32[2]{0}', space=sflag, size = 0x8, scoped, tag = 'scoped memory for tpu_custom_call.1']
    #allocation5 [shape = 's32[2]{0}', space=sflag, size = 0x8, scoped, tag = 'scoped memory for tpu_custom_call.1']
    #allocation6 [shape = 'u8[131072]{0}', space=vmem, size = 0x20000, scoped, tag = 'input window, operand 1, single buffered']
    #allocation7 [shape = 's32[1]{0}', space=sflag, size = 0x4, scoped, tag = 'scoped memory for tpu_custom_call.1']
    #allocation8 [shape = 'u8[4096]{0}', space=smem, size = 0x1000, scoped, tag = 'input window, operand 2, single buffered']
    #allocation9 [shape = 'u8[65536]{0}', space=vmem, size = 0x10000, scoped, tag = 'output window, operand 0']
    %8 = vsyncpa [#allocation3], 0
    %s9 = scalar_lea.sflag [#allocation3], 1
    %10 = vsyncpa %s9, 0
    %11 = vsyncpa [#allocation7], 0
    %12 = vsyncpa [#allocation5], 0
    %13 = vsyncpa [#allocation4], 0
    %s14 = scalar_lea.sflag [#allocation4], 1
    %15 = vsyncpa %s14, 0
    loop: start=0, step=1, limit=4
    $region2: #{tpu_custom_call.1} parent=1 // loop_pre_header
      _
    $region3: #{tpu_custom_call.1} parent=1 // loop_header
      %s17 = sphi 0, %s21
      %p18 = scmp.ge.s32.totalorder %s17, 4
      %s24 = sphi 0, %s36
      %s25 = sphi 0, %s32
      %s26 = sphi 0, %s24
      %s27 = sphi 0, %s25
      %s28 = sphi 0, %s26
      %s29 = sphi 0, %s27
      %s41 = sphi 0, %s43
      %s44 = sphi 0, %s41
      %s45 = sphi 0, %s44
      %s61 = sphi 0, %s45
      %s65 = sphi 0, %s65
      %s67 = sphi 0, %s65
      %s68 = sphi 0, %s67
      %s82 = sphi 0, %s68
      %s86 = sphi 0, %s86
      %s88 = sphi 0, %s86
      %s89 = sphi 0, %s88
      %s103 = sphi 0, %s89
      %s111 = sphi 0, %s113
      %s114 = sphi 0, %s111
      %s115 = sphi 0, %s114
      %s131 = sphi 0, %s115
    $region4: #{tpu_custom_call.1} parent=1 // loop_header_branch
      %20 = sbr.rel (%p18) target = $region8
    $region5: #{tpu_custom_call.1} parent=1 // loop_body
      %s22 = ssub.s32 %s17, 1
      %s23 = ssub.s32 %s17, 2
      %s30 = sadd.s32 1, %s25
      %p31 = scmp.ge.s32.totalorder %s30, 1
      %s32 = scalar_select %p31, 0, %s30
      %s33 = sadd.s32 1, %s24
      %s34 = scalar_select %p31, %s33, %s24
      %p35 = scmp.ge.s32.totalorder %s34, 2
      %s36 = scalar_select %p35, 0, %s34
      %s37 = ssub.s32 %s24, %s36
      %s38 = ssub.s32 %s25, %s32
      %s39 = sor.u32 %s37, %s38
      %p40 = scmp.eq.s32.totalorder %s39, 0
      %s42 = sadd.s32 %s41, 1
      %s43 = scalar_select %p40, %s41, %s42
      %p46 = pneg %p40
      %p47 = scmp.eq.s32.totalorder %s17, 1
      %p48 = por %p46, %p47
      %p49 = scmp.ne.s32.totalorder %s41, %s44
      %p50 = scmp.eq.s32.totalorder %s17, 0
      %p51 = por %p49, %p50
      %p52 = scmp.ne.s32.totalorder %s41, %s44
      %p53 = scmp.eq.s32.totalorder %s22, 1
      %p54 = por %p52, %p53
      %p55 = scmp.ne.s32.totalorder %s44, %s45
      %p56 = scmp.eq.s32.totalorder %s22, 0
      %p57 = por %p55, %p56
      %p58 = scmp.ne.s32.totalorder %s44, %s45
      %p59 = scmp.eq.s32.totalorder %s23, 1
      %p60 = por %p58, %p59
      %p62 = scmp.ne.s32.totalorder %s45, %s61
      %p63 = scmp.eq.s32.totalorder %s23, 0
      %p64 = por %p62, %p63
      %s66 = sadd.s32 %s65, 1
      %p69 = scmp.eq.s32.totalorder %s17, 1
      %p70 = scmp.ne.s32.totalorder %s65, %s67
      %p71 = scmp.eq.s32.totalorder %s17, 0
      %p72 = por %p70, %p71
      %p73 = scmp.ne.s32.totalorder %s65, %s67
      %p74 = scmp.eq.s32.totalorder %s22, 1
      %p75 = por %p73, %p74
      %p76 = scmp.ne.s32.totalorder %s67, %s68
      %p77 = scmp.eq.s32.totalorder %s22, 0
      %p78 = por %p76, %p77
      %p79 = scmp.ne.s32.totalorder %s67, %s68
      %p80 = scmp.eq.s32.totalorder %s23, 1
      %p81 = por %p79, %p80
      %p83 = scmp.ne.s32.totalorder %s68, %s82
      %p84 = scmp.eq.s32.totalorder %s23, 0
      %p85 = por %p83, %p84
      %s87 = sadd.s32 %s86, 1
      %p90 = scmp.eq.s32.totalorder %s17, 1
      %p91 = scmp.ne.s32.totalorder %s86, %s88
      %p92 = scmp.eq.s32.totalorder %s17, 0
      %p93 = por %p91, %p92
      %p94 = scmp.ne.s32.totalorder %s86, %s88
      %p95 = scmp.eq.s32.totalorder %s22, 1
      %p96 = por %p94, %p95
      %p97 = scmp.ne.s32.totalorder %s88, %s89
      %p98 = scmp.eq.s32.totalorder %s22, 0
      %p99 = por %p97, %p98
      %p100 = scmp.ne.s32.totalorder %s88, %s89
      %p101 = scmp.eq.s32.totalorder %s23, 1
      %p102 = por %p100, %p101
      %p104 = scmp.ne.s32.totalorder %s89, %s103
      %p105 = scmp.eq.s32.totalorder %s23, 0
      %p106 = por %p104, %p105
      %s107 = ssub.s32 %s24, %s36
      %s108 = ssub.s32 %s25, %s32
      %s109 = sor.u32 %s107, %s108
      %p110 = scmp.eq.s32.totalorder %s109, 0
      %s112 = sadd.s32 %s111, 1
      %s113 = scalar_select %p110, %s111, %s112
      %p116 = pneg %p110
      %p117 = scmp.eq.s32.totalorder %s17, 1
      %p118 = por %p116, %p117
      %p119 = scmp.ne.s32.totalorder %s111, %s114
      %p120 = scmp.eq.s32.totalorder %s17, 0
      %p121 = por %p119, %p120
      %p122 = scmp.ne.s32.totalorder %s111, %s114
      %p123 = scmp.eq.s32.totalorder %s22, 1
      %p124 = por %p122, %p123
      %p125 = scmp.ne.s32.totalorder %s114, %s115
      %p126 = scmp.eq.s32.totalorder %s22, 0
      %p127 = por %p125, %p126
      %p128 = scmp.ne.s32.totalorder %s114, %s115
      %p129 = scmp.eq.s32.totalorder %s23, 1
      %p130 = por %p128, %p129
      %p132 = scmp.ne.s32.totalorder %s115, %s131
      %p133 = scmp.eq.s32.totalorder %s23, 0
      %p134 = por %p132, %p133
      %p135 = scmp.le.s32.totalorder 1, %s17
      %p136 = scmp.lt.s32.totalorder %s17, 3
      %p137 = pnand %p135, %p136
      %p138 = pneg %p137
      // Predicated region
      $region9: #{tpu_custom_call.1} parent=5 // pred_check
        _
      $region10: #{tpu_custom_call.1} parent=5 // pred_check_branch
        %140 = sbr.rel (%p137) target = $region12
      $region11: #{tpu_custom_call.1} parent=5 // pred_region
        %s141 = ssub.s32 %s17, 1
        // Predicated region
        $region13: #{tpu_custom_call.1} parent=11 // pred_check
          %p142 = pneg %p78
        $region14: #{tpu_custom_call.1} parent=11 // pred_check_branch
          %144 = sbr.rel (%p142) target = $region16
        $region15: #{tpu_custom_call.1} parent=11 // pred_region
          %s146 = ssub.s32 4096, 4096
          %147 = vsyncadd [#allocation7], %s146
          %s148 = sshll.u32 [#allocation6], 4
          %s149 = int_to_ptr.vmem [resolvable:$true] %s148
          %154 = dma.hbm_to_vmem [thread:$0]  %s1, 4096, %s149, [#allocation7], 128, 128, 8
        $region16: #{tpu_custom_call.1} parent=11 // pred_fallthru
          _
        // Predicated region
        $region17: #{tpu_custom_call.1} parent=11 // pred_check
          %p155 = pneg %p99
        $region18: #{tpu_custom_call.1} parent=11 // pred_check_branch
          %157 = sbr.rel (%p155) target = $region20
        $region19: #{tpu_custom_call.1} parent=11 // pred_region
          %s159 = ssub.s32 128, 128
          %160 = vsyncadd [#allocation5], %s159
          %s162 = sshll.u32 %s2, 4
          %s163 = int_to_ptr.vmem [resolvable:$true] %s162
          %165 = dma.vmem_to_smem %s163, 128, [#allocation8], [#allocation5]
        $region20: #{tpu_custom_call.1} parent=11 // pred_fallthru
          _
      $region12: #{tpu_custom_call.1} parent=5 // pred_fallthru
        _
      %p166 = scmp.lt.s32.totalorder %s17, 2
      // Predicated region
      $region21: #{tpu_custom_call.1} parent=5 // pred_check
        %p167 = pneg %p166
      $region22: #{tpu_custom_call.1} parent=5 // pred_check_branch
        %169 = sbr.rel (%p167) target = $region24
      $region23: #{tpu_custom_call.1} parent=5 // pred_region
        // Predicated region
        $region25: #{tpu_custom_call.1} parent=23 // pred_check
          %p170 = pneg %p51
        $region26: #{tpu_custom_call.1} parent=23 // pred_check_branch
          %172 = sbr.rel (%p170) target = $region28
        $region27: #{tpu_custom_call.1} parent=23 // pred_region
          %s173 = sand.u32 %s41, 1
          %s174 = scalar_lea.sflag [#allocation3], %s173
          %s175 = sand.u32 %s41, 1
          %s176 = smul.addr %s175, 64
          %s177 = scalar_lea.vmem [#allocation2], %s176
          %s179 = ssub.s32 1024, 1024
          %180 = vsyncadd %s174, %s179
          %s181 = smul.addr %s25, 2
          %s182 = smul.addr %s24, 8
          %s183 = sadd.s32 %s181, %s182
          %s184 = smul.addr %s183, 128
          %s185 = scalar_lea.hbm %s0, %s184
          %s186 = sshll.u32 %s177, 4
          %s187 = int_to_ptr.vmem [resolvable:$true] %s186
          %192 = dma.hbm_to_vmem [thread:$0]  %s185, 1024, %s187, %s174, 256, 256, 16
        $region28: #{tpu_custom_call.1} parent=23 // pred_fallthru
          _
      $region24: #{tpu_custom_call.1} parent=5 // pred_fallthru
        _
      %p193 = scmp.le.s32.totalorder 1, %s17
      %p194 = scmp.lt.s32.totalorder %s17, 3
      %p195 = pnand %p193, %p194
      %p196 = pneg %p195
      // Predicated region
      $region29: #{tpu_custom_call.1} parent=5 // pred_check
        _
      $region30: #{tpu_custom_call.1} parent=5 // pred_check_branch
        %198 = sbr.rel (%p195) target = $region32
      $region31: #{tpu_custom_call.1} parent=5 // pred_region
        %s199 = ssub.s32 %s17, 1
        %s200 = sand.u32 %s44, 1
        %s201 = scalar_lea.sflag [#allocation3], %s200
        %s202 = sand.u32 %s44, 1
        %s203 = smul.addr %s202, 64
        %s204 = scalar_lea.vmem [#allocation2], %s203
        // Predicated region
        $region33: #{tpu_custom_call.1} parent=31 // pred_check
          %p205 = pneg %p57
        $region34: #{tpu_custom_call.1} parent=31 // pred_check_branch
          %207 = sbr.rel (%p205) target = $region36
        $region35: #{tpu_custom_call.1} parent=31 // pred_region
          %208 = dma.done %s201, 1024
        $region36: #{tpu_custom_call.1} parent=31 // pred_fallthru
          _
        // Predicated region
        $region37: #{tpu_custom_call.1} parent=31 // pred_check
          %p209 = pneg %p78
        $region38: #{tpu_custom_call.1} parent=31 // pred_check_branch
          %211 = sbr.rel (%p209) target = $region40
        $region39: #{tpu_custom_call.1} parent=31 // pred_region
          %212 = dma.done [#allocation7], 4096
        $region40: #{tpu_custom_call.1} parent=31 // pred_fallthru
          _
        // Predicated region
        $region41: #{tpu_custom_call.1} parent=31 // pred_check
          %p213 = pneg %p99
        $region42: #{tpu_custom_call.1} parent=31 // pred_check_branch
          %215 = sbr.rel (%p213) target = $region44
        $region43: #{tpu_custom_call.1} parent=31 // pred_region
          %216 = dma.done [#allocation5], 128
        $region44: #{tpu_custom_call.1} parent=31 // pred_fallthru
          _
        %217 = sfence
        %s218 = sand.u32 %s44, 1
        %s219 = scalar_lea.sflag [#allocation3], %s218
        %s220 = sand.u32 %s44, 1
        %s221 = smul.addr %s220, 64
        %s222 = scalar_lea.vmem [#allocation2], %s221
        %p223 = pneg %p57
        %p224 = pneg %p54
        %p225 = pneg %p78
        %p226 = pneg %p75
        %p227 = pneg %p99
        %p228 = pneg %p96
        %p229 = pneg %p127
        %p230 = pneg %p124
        %s231 = sand.u32 %s114, 1
        %s232 = scalar_lea.sflag [#allocation4], %s231
        %s233 = sand.u32 %s114, 1
        %s234 = smul.addr %s233, 64
        %s235 = scalar_lea.vmem [#allocation9], %s234
        %v236 = vld [vmem:[#allocation6] sm:$0xff]
        %v237 = vld [vmem:[#allocation6 + $0x8] sm:$0xff]
        %v238 = vld [vmem:[#allocation6 + $0x10] sm:$0xff]
        %v239 = vld [vmem:[#allocation6 + $0x18] sm:$0xff]
        %v240 = vld [vmem:[#allocation6 + $0x20] sm:$0xff]
        %v241 = vld [vmem:[#allocation6 + $0x28] sm:$0xff]
        %v242 = vld [vmem:[#allocation6 + $0x30] sm:$0xff]
        %v243 = vld [vmem:[#allocation6 + $0x38] sm:$0xff]
        %v244 = vld [vmem:[#allocation6 + $0x40] sm:$0xff]
        %v245 = vld [vmem:[#allocation6 + $0x48] sm:$0xff]
        %v246 = vld [vmem:[#allocation6 + $0x50] sm:$0xff]
        %v247 = vld [vmem:[#allocation6 + $0x58] sm:$0xff]
        %v248 = vld [vmem:[#allocation6 + $0x60] sm:$0xff]
        %v249 = vld [vmem:[#allocation6 + $0x68] sm:$0xff]
        %v250 = vld [vmem:[#allocation6 + $0x70] sm:$0xff]
        %v251 = vld [vmem:[#allocation6 + $0x78] sm:$0xff]
        %v252 = vld [vmem:[#allocation6 + $0x80] sm:$0xff]
        %v253 = vld [vmem:[#allocation6 + $0x88] sm:$0xff]
        %v254 = vld [vmem:[#allocation6 + $0x90] sm:$0xff]
        %v255 = vld [vmem:[#allocation6 + $0x98] sm:$0xff]
        %v256 = vld [vmem:[#allocation6 + $0xa0] sm:$0xff]
        %v257 = vld [vmem:[#allocation6 + $0xa8] sm:$0xff]
        %v258 = vld [vmem:[#allocation6 + $0xb0] sm:$0xff]
        %v259 = vld [vmem:[#allocation6 + $0xb8] sm:$0xff]
        %v260 = vld [vmem:[#allocation6 + $0xc0] sm:$0xff]
        %v261 = vld [vmem:[#allocation6 + $0xc8] sm:$0xff]
        %v262 = vld [vmem:[#allocation6 + $0xd0] sm:$0xff]
        %v263 = vld [vmem:[#allocation6 + $0xd8] sm:$0xff]
        %v264 = vld [vmem:[#allocation6 + $0xe0] sm:$0xff]
        %v265 = vld [vmem:[#allocation6 + $0xe8] sm:$0xff]
        %v266 = vld [vmem:[#allocation6 + $0xf0] sm:$0xff]
        %v267 = vld [vmem:[#allocation6 + $0xf8] sm:$0xff]
        %v268 = vld [vmem:[%s204] sm:$0xff]
        %v269 = vld [vmem:[%s204 + $0x8] sm:$0xff]
        %270 = vmatprep.subr.mxu0 0.0
        %v271 = vand.u32 %v251, 4294901760
        %272 = vmatpush1.msra.mxu0 %v271
        %273 = vmatprep.subr.mxu0 0.0
        %v274 = vand.u32 %v250, 4294901760
        %275 = vmatpush1.msra.mxu0 %v274
        %276 = vmatprep.subr.mxu0 0.0
        %v277 = vand.u32 %v249, 4294901760
        %278 = vmatpush1.msra.mxu0 %v277
        %279 = vmatprep.subr.mxu0 0.0
        %v280 = vand.u32 %v248, 4294901760
        %281 = vmatpush1.msra.mxu0 %v280
        %282 = vmatprep.subr.mxu0 0.0
        %v283 = vand.u32 %v247, 4294901760
        %284 = vmatpush1.msra.mxu0 %v283
        %285 = vmatprep.subr.mxu0 0.0
        %v286 = vand.u32 %v246, 4294901760
        %287 = vmatpush1.msra.mxu0 %v286
        %288 = vmatprep.subr.mxu0 0.0
        %v289 = vand.u32 %v245, 4294901760
        %290 = vmatpush1.msra.mxu0 %v289
        %291 = vmatprep.subr.mxu0 0.0
        %v292 = vand.u32 %v244, 4294901760
        %293 = vmatpush1.msra.mxu0 %v292
        %294 = vmatprep.subr.mxu0 0.0
        %v295 = vand.u32 %v243, 4294901760
        %296 = vmatpush1.msra.mxu0 %v295
        %297 = vmatprep.subr.mxu0 0.0
        %v298 = vand.u32 %v242, 4294901760
        %299 = vmatpush1.msra.mxu0 %v298
        %300 = vmatprep.subr.mxu0 0.0
        %v301 = vand.u32 %v241, 4294901760
        %302 = vmatpush1.msra.mxu0 %v301
        %303 = vmatprep.subr.mxu0 0.0
        %v304 = vand.u32 %v240, 4294901760
        %305 = vmatpush1.msra.mxu0 %v304
        %306 = vmatprep.subr.mxu0 0.0
        %v307 = vand.u32 %v239, 4294901760
        %308 = vmatpush1.msra.mxu0 %v307
        %309 = vmatprep.subr.mxu0 0.0
        %v310 = vand.u32 %v238, 4294901760
        %311 = vmatpush1.msra.mxu0 %v310
        %312 = vmatprep.subr.mxu0 0.0
        %v313 = vand.u32 %v237, 4294901760
        %314 = vmatpush1.msra.mxu0 %v313
        %315 = vmatprep.subr.mxu0 0.0
        %v316 = vand.u32 %v236, 4294901760
        %317 = vmatpush1.msra.mxu0 %v316
        %318 = vmatprep.subr.mxu0 0.0
        %v319 = vand.u32 %v267, 4294901760
        %320 = vmatpush2.msra.mxu0 %v319
        %321 = vmatprep.subr.mxu0 0.0
        %v322 = vand.u32 %v266, 4294901760
        %323 = vmatpush2.msra.mxu0 %v322
        %324 = vmatprep.subr.mxu0 0.0
        %v325 = vand.u32 %v265, 4294901760
        %326 = vmatpush2.msra.mxu0 %v325
        %327 = vmatprep.subr.mxu0 0.0
        %v328 = vand.u32 %v264, 4294901760
        %329 = vmatpush2.msra.mxu0 %v328
        %330 = vmatprep.subr.mxu0 0.0
        %v331 = vand.u32 %v263, 4294901760
        %332 = vmatpush2.msra.mxu0 %v331
        %333 = vmatprep.subr.mxu0 0.0
        %v334 = vand.u32 %v262, 4294901760
        %335 = vmatpush2.msra.mxu0 %v334
        %336 = vmatprep.subr.mxu0 0.0
        %v337 = vand.u32 %v261, 4294901760
        %338 = vmatpush2.msra.mxu0 %v337
        %339 = vmatprep.subr.mxu0 0.0
        %v340 = vand.u32 %v260, 4294901760
        %341 = vmatpush2.msra.mxu0 %v340
        %342 = vmatprep.subr.mxu0 0.0
        %v343 = vand.u32 %v259, 4294901760
        %344 = vmatpush2.msra.mxu0 %v343
        %345 = vmatprep.subr.mxu0 0.0
        %v346 = vand.u32 %v258, 4294901760
        %347 = vmatpush2.msra.mxu0 %v346
        %348 = vmatprep.subr.mxu0 0.0
        %v349 = vand.u32 %v257, 4294901760
        %350 = vmatpush2.msra.mxu0 %v349
        %351 = vmatprep.subr.mxu0 0.0
        %v352 = vand.u32 %v256, 4294901760
        %353 = vmatpush2.msra.mxu0 %v352
        %354 = vmatprep.subr.mxu0 0.0
        %v355 = vand.u32 %v255, 4294901760
        %356 = vmatpush2.msra.mxu0 %v355
        %357 = vmatprep.subr.mxu0 0.0
        %v358 = vand.u32 %v254, 4294901760
        %359 = vmatpush2.msra.mxu0 %v358
        %360 = vmatprep.subr.mxu0 0.0
        %v361 = vand.u32 %v253, 4294901760
        %362 = vmatpush2.msra.mxu0 %v361
        %363 = vmatprep.subr.mxu0 0.0
        %v364 = vand.u32 %v252, 4294901760
        %365 = vmatpush2.msra.mxu0 %v364
        %v366 = vand.u32 %v269, 4294901760
        %v367 = vsub.f32 %v269, %v366
        %v368 = vand.u32 %v367, 4294901760
        %v369 = vsub.f32 %v367, %v368
        %v370 = vand.u32 %v369, 4294901760
        %371 = vmatprep.mubr.f32.mxu0 %v370
        %v372 = vand.u32 %v268, 4294901760
        %v373 = vsub.f32 %v268, %v372
        %v374 = vand.u32 %v373, 4294901760
        %v375 = vsub.f32 %v373, %v374
        %v376 = vand.u32 %v375, 4294901760
        %377 = vmatmul.mubr.f32.gmra.mxu0 %v376
        %v378 = vpop.f32.mrf.mxu0
        %v379 = vadd.f32 0.0, %v378
        %v380 = vpop.f32.mrf.mxu0
        %381 = vdwg.mxu0
        %382 = vmatprep.subr.mxu0 0.0
        %v383 = vand.u32 %v251, 4294901760
        %v384 = vsub.f32 %v251, %v383
        %v385 = vand.u32 %v384, 4294901760
        %v386 = vsub.f32 %v384, %v385
        %v387 = vand.u32 %v386, 4294901760
        %388 = vmatpush1.msra.mxu0 %v387
        %389 = vmatprep.subr.mxu0 0.0
        %v390 = vand.u32 %v250, 4294901760
        %v391 = vsub.f32 %v250, %v390
        %v392 = vand.u32 %v391, 4294901760
        %v393 = vsub.f32 %v391, %v392
        %v394 = vand.u32 %v393, 4294901760
        %395 = vmatpush1.msra.mxu0 %v394
        %396 = vmatprep.subr.mxu0 0.0
        %v397 = vand.u32 %v249, 4294901760
        %v398 = vsub.f32 %v249, %v397
        %v399 = vand.u32 %v398, 4294901760
        %v400 = vsub.f32 %v398, %v399
        %v401 = vand.u32 %v400, 4294901760
        %402 = vmatpush1.msra.mxu0 %v401
        %403 = vmatprep.subr.mxu0 0.0
        %v404 = vand.u32 %v248, 4294901760
        %v405 = vsub.f32 %v248, %v404
        %v406 = vand.u32 %v405, 4294901760
        %v407 = vsub.f32 %v405, %v406
        %v408 = vand.u32 %v407, 4294901760
        %409 = vmatpush1.msra.mxu0 %v408
        %410 = vmatprep.subr.mxu0 0.0
        %v411 = vand.u32 %v247, 4294901760
        %v412 = vsub.f32 %v247, %v411
        %v413 = vand.u32 %v412, 4294901760
        %v414 = vsub.f32 %v412, %v413
        %v415 = vand.u32 %v414, 4294901760
        %416 = vmatpush1.msra.mxu0 %v415
        %417 = vmatprep.subr.mxu0 0.0
        %v418 = vand.u32 %v246, 4294901760
        %v419 = vsub.f32 %v246, %v418
        %v420 = vand.u32 %v419, 4294901760
        %v421 = vsub.f32 %v419, %v420
        %v422 = vand.u32 %v421, 4294901760
        %423 = vmatpush1.msra.mxu0 %v422
        %424 = vmatprep.subr.mxu0 0.0
        %v425 = vand.u32 %v245, 4294901760
        %v426 = vsub.f32 %v245, %v425
        %v427 = vand.u32 %v426, 4294901760
        %v428 = vsub.f32 %v426, %v427
        %v429 = vand.u32 %v428, 4294901760
        %430 = vmatpush1.msra.mxu0 %v429
        %431 = vmatprep.subr.mxu0 0.0
        %v432 = vand.u32 %v244, 4294901760
        %v433 = vsub.f32 %v244, %v432
        %v434 = vand.u32 %v433, 4294901760
        %v435 = vsub.f32 %v433, %v434
        %v436 = vand.u32 %v435, 4294901760
        %437 = vmatpush1.msra.mxu0 %v436
        %438 = vmatprep.subr.mxu0 0.0
        %v439 = vand.u32 %v243, 4294901760
        %v440 = vsub.f32 %v243, %v439
        %v441 = vand.u32 %v440, 4294901760
        %v442 = vsub.f32 %v440, %v441
        %v443 = vand.u32 %v442, 4294901760
        %444 = vmatpush1.msra.mxu0 %v443
        %445 = vmatprep.subr.mxu0 0.0
        %v446 = vand.u32 %v242, 4294901760
        %v447 = vsub.f32 %v242, %v446
        %v448 = vand.u32 %v447, 4294901760
        %v449 = vsub.f32 %v447, %v448
        %v450 = vand.u32 %v449, 4294901760
        %451 = vmatpush1.msra.mxu0 %v450
        %452 = vmatprep.subr.mxu0 0.0
        %v453 = vand.u32 %v241, 4294901760
        %v454 = vsub.f32 %v241, %v453
        %v455 = vand.u32 %v454, 4294901760
        %v456 = vsub.f32 %v454, %v455
        %v457 = vand.u32 %v456, 4294901760
        %458 = vmatpush1.msra.mxu0 %v457
        %459 = vmatprep.subr.mxu0 0.0
        %v460 = vand.u32 %v240, 4294901760
        %v461 = vsub.f32 %v240, %v460
        %v462 = vand.u32 %v461, 4294901760
        %v463 = vsub.f32 %v461, %v462
        %v464 = vand.u32 %v463, 4294901760
        %465 = vmatpush1.msra.mxu0 %v464
        %466 = vmatprep.subr.mxu0 0.0
        %v467 = vand.u32 %v239, 4294901760
        %v468 = vsub.f32 %v239, %v467
        %v469 = vand.u32 %v468, 4294901760
        %v470 = vsub.f32 %v468, %v469
        %v471 = vand.u32 %v470, 4294901760
        %472 = vmatpush1.msra.mxu0 %v471
        %473 = vmatprep.subr.mxu0 0.0
        %v474 = vand.u32 %v238, 4294901760
        %v475 = vsub.f32 %v238, %v474
        %v476 = vand.u32 %v475, 4294901760
        %v477 = vsub.f32 %v475, %v476
        %v478 = vand.u32 %v477, 4294901760
        %479 = vmatpush1.msra.mxu0 %v478
        %480 = vmatprep.subr.mxu0 0.0
        %v481 = vand.u32 %v237, 4294901760
        %v482 = vsub.f32 %v237, %v481
        %v483 = vand.u32 %v482, 4294901760
        %v484 = vsub.f32 %v482, %v483
        %v485 = vand.u32 %v484, 4294901760
        %486 = vmatpush1.msra.mxu0 %v485
        %487 = vmatprep.subr.mxu0 0.0
        %v488 = vand.u32 %v236, 4294901760
        %v489 = vsub.f32 %v236, %v488
        %v490 = vand.u32 %v489, 4294901760
        %v491 = vsub.f32 %v489, %v490
        %v492 = vand.u32 %v491, 4294901760
        %493 = vmatpush1.msra.mxu0 %v492
        %494 = vmatprep.subr.mxu0 0.0
        %v495 = vand.u32 %v267, 4294901760
        %v496 = vsub.f32 %v267, %v495
        %v497 = vand.u32 %v496, 4294901760
        %v498 = vsub.f32 %v496, %v497
        %v499 = vand.u32 %v498, 4294901760
        %500 = vmatpush2.msra.mxu0 %v499
        %501 = vmatprep.subr.mxu0 0.0
        %v502 = vand.u32 %v266, 4294901760
        %v503 = vsub.f32 %v266, %v502
        %v504 = vand.u32 %v503, 4294901760
        %v505 = vsub.f32 %v503, %v504
        %v506 = vand.u32 %v505, 4294901760
        %507 = vmatpush2.msra.mxu0 %v506
        %508 = vmatprep.subr.mxu0 0.0
        %v509 = vand.u32 %v265, 4294901760
        %v510 = vsub.f32 %v265, %v509
        %v511 = vand.u32 %v510, 4294901760
        %v512 = vsub.f32 %v510, %v511
        %v513 = vand.u32 %v512, 4294901760
        %514 = vmatpush2.msra.mxu0 %v513
        %515 = vmatprep.subr.mxu0 0.0
        %v516 = vand.u32 %v264, 4294901760
        %v517 = vsub.f32 %v264, %v516
        %v518 = vand.u32 %v517, 4294901760
        %v519 = vsub.f32 %v517, %v518
        %v520 = vand.u32 %v519, 4294901760
        %521 = vmatpush2.msra.mxu0 %v520
        %522 = vmatprep.subr.mxu0 0.0
        %v523 = vand.u32 %v263, 4294901760
        %v524 = vsub.f32 %v263, %v523
        %v525 = vand.u32 %v524, 4294901760
        %v526 = vsub.f32 %v524, %v525
        %v527 = vand.u32 %v526, 4294901760
        %528 = vmatpush2.msra.mxu0 %v527
        %529 = vmatprep.subr.mxu0 0.0
        %v530 = vand.u32 %v262, 4294901760
        %v531 = vsub.f32 %v262, %v530
        %v532 = vand.u32 %v531, 4294901760
        %v533 = vsub.f32 %v531, %v532
        %v534 = vand.u32 %v533, 4294901760
        %535 = vmatpush2.msra.mxu0 %v534
        %536 = vmatprep.subr.mxu0 0.0
        %v537 = vand.u32 %v261, 4294901760
        %v538 = vsub.f32 %v261, %v537
        %v539 = vand.u32 %v538, 4294901760
        %v540 = vsub.f32 %v538, %v539
        %v541 = vand.u32 %v540, 4294901760
        %542 = vmatpush2.msra.mxu0 %v541
        %543 = vmatprep.subr.mxu0 0.0
        %v544 = vand.u32 %v260, 4294901760
        %v545 = vsub.f32 %v260, %v544
        %v546 = vand.u32 %v545, 4294901760
        %v547 = vsub.f32 %v545, %v546
        %v548 = vand.u32 %v547, 4294901760
        %549 = vmatpush2.msra.mxu0 %v548
        %550 = vmatprep.subr.mxu0 0.0
        %v551 = vand.u32 %v259, 4294901760
        %v552 = vsub.f32 %v259, %v551
        %v553 = vand.u32 %v552, 4294901760
        %v554 = vsub.f32 %v552, %v553
        %v555 = vand.u32 %v554, 4294901760
        %556 = vmatpush2.msra.mxu0 %v555
        %557 = vmatprep.subr.mxu0 0.0
        %v558 = vand.u32 %v258, 4294901760
        %v559 = vsub.f32 %v258, %v558
        %v560 = vand.u32 %v559, 4294901760
        %v561 = vsub.f32 %v559, %v560
        %v562 = vand.u32 %v561, 4294901760
        %563 = vmatpush2.msra.mxu0 %v562
        %564 = vmatprep.subr.mxu0 0.0
        %v565 = vand.u32 %v257, 4294901760
        %v566 = vsub.f32 %v257, %v565
        %v567 = vand.u32 %v566, 4294901760
        %v568 = vsub.f32 %v566, %v567
        %v569 = vand.u32 %v568, 4294901760
        %570 = vmatpush2.msra.mxu0 %v569
        %571 = vmatprep.subr.mxu0 0.0
        %v572 = vand.u32 %v256, 4294901760
        %v573 = vsub.f32 %v256, %v572
        %v574 = vand.u32 %v573, 4294901760
        %v575 = vsub.f32 %v573, %v574
        %v576 = vand.u32 %v575, 4294901760
        %577 = vmatpush2.msra.mxu0 %v576
        %578 = vmatprep.subr.mxu0 0.0
        %v579 = vand.u32 %v255, 4294901760
        %v580 = vsub.f32 %v255, %v579
        %v581 = vand.u32 %v580, 4294901760
        %v582 = vsub.f32 %v580, %v581
        %v583 = vand.u32 %v582, 4294901760
        %584 = vmatpush2.msra.mxu0 %v583
        %585 = vmatprep.subr.mxu0 0.0
        %v586 = vand.u32 %v254, 4294901760
        %v587 = vsub.f32 %v254, %v586
        %v588 = vand.u32 %v587, 4294901760
        %v589 = vsub.f32 %v587, %v588
        %v590 = vand.u32 %v589, 4294901760
        %591 = vmatpush2.msra.mxu0 %v590
        %592 = vmatprep.subr.mxu0 0.0
        %v593 = vand.u32 %v253, 4294901760
        %v594 = vsub.f32 %v253, %v593
        %v595 = vand.u32 %v594, 4294901760
        %v596 = vsub.f32 %v594, %v595
        %v597 = vand.u32 %v596, 4294901760
        %598 = vmatpush2.msra.mxu0 %v597
        %599 = vmatprep.subr.mxu0 0.0
        %v600 = vand.u32 %v252, 4294901760
        %v601 = vsub.f32 %v252, %v600
        %v602 = vand.u32 %v601, 4294901760
        %v603 = vsub.f32 %v601, %v602
        %v604 = vand.u32 %v603, 4294901760
        %605 = vmatpush2.msra.mxu0 %v604
        %v606 = vand.u32 %v269, 4294901760
        %607 = vmatprep.mubr.f32.mxu0 %v606
        %v608 = vand.u32 %v268, 4294901760
        %609 = vmatmul.mubr.f32.gmra.mxu0 %v608
        %v610 = vpop.f32.mrf.mxu0
        %v611 = vadd.f32 %v379, %v610
        %v612 = vpop.f32.mrf.mxu0
        %613 = vdwg.mxu0
        %614 = vmatprep.subr.mxu0 0.0
        %v615 = vand.u32 %v251, 4294901760
        %v616 = vsub.f32 %v251, %v615
        %617 = vmatpush1.msra.mxu0 %v616
        %618 = vmatprep.subr.mxu0 0.0
        %v619 = vand.u32 %v250, 4294901760
        %v620 = vsub.f32 %v250, %v619
        %621 = vmatpush1.msra.mxu0 %v620
        %622 = vmatprep.subr.mxu0 0.0
        %v623 = vand.u32 %v249, 4294901760
        %v624 = vsub.f32 %v249, %v623
        %625 = vmatpush1.msra.mxu0 %v624
        %626 = vmatprep.subr.mxu0 0.0
        %v627 = vand.u32 %v248, 4294901760
        %v628 = vsub.f32 %v248, %v627
        %629 = vmatpush1.msra.mxu0 %v628
        %630 = vmatprep.subr.mxu0 0.0
        %v631 = vand.u32 %v247, 4294901760
        %v632 = vsub.f32 %v247, %v631
        %633 = vmatpush1.msra.mxu0 %v632
        %634 = vmatprep.subr.mxu0 0.0
        %v635 = vand.u32 %v246, 4294901760
        %v636 = vsub.f32 %v246, %v635
        %637 = vmatpush1.msra.mxu0 %v636
        %638 = vmatprep.subr.mxu0 0.0
        %v639 = vand.u32 %v245, 4294901760
        %v640 = vsub.f32 %v245, %v639
        %641 = vmatpush1.msra.mxu0 %v640
        %642 = vmatprep.subr.mxu0 0.0
        %v643 = vand.u32 %v244, 4294901760
        %v644 = vsub.f32 %v244, %v643
        %645 = vmatpush1.msra.mxu0 %v644
        %646 = vmatprep.subr.mxu0 0.0
        %v647 = vand.u32 %v243, 4294901760
        %v648 = vsub.f32 %v243, %v647
        %649 = vmatpush1.msra.mxu0 %v648
        %650 = vmatprep.subr.mxu0 0.0
        %v651 = vand.u32 %v242, 4294901760
        %v652 = vsub.f32 %v242, %v651
        %653 = vmatpush1.msra.mxu0 %v652
        %654 = vmatprep.subr.mxu0 0.0
        %v655 = vand.u32 %v241, 4294901760
        %v656 = vsub.f32 %v241, %v655
        %657 = vmatpush1.msra.mxu0 %v656
        %658 = vmatprep.subr.mxu0 0.0
        %v659 = vand.u32 %v240, 4294901760
        %v660 = vsub.f32 %v240, %v659
        %661 = vmatpush1.msra.mxu0 %v660
        %662 = vmatprep.subr.mxu0 0.0
        %v663 = vand.u32 %v239, 4294901760
        %v664 = vsub.f32 %v239, %v663
        %665 = vmatpush1.msra.mxu0 %v664
        %666 = vmatprep.subr.mxu0 0.0
        %v667 = vand.u32 %v238, 4294901760
        %v668 = vsub.f32 %v238, %v667
        %669 = vmatpush1.msra.mxu0 %v668
        %670 = vmatprep.subr.mxu0 0.0
        %v671 = vand.u32 %v237, 4294901760
        %v672 = vsub.f32 %v237, %v671
        %673 = vmatpush1.msra.mxu0 %v672
        %674 = vmatprep.subr.mxu0 0.0
        %v675 = vand.u32 %v236, 4294901760
        %v676 = vsub.f32 %v236, %v675
        %677 = vmatpush1.msra.mxu0 %v676
        %678 = vmatprep.subr.mxu0 0.0
        %v679 = vand.u32 %v267, 4294901760
        %v680 = vsub.f32 %v267, %v679
        %681 = vmatpush2.msra.mxu0 %v680
        %682 = vmatprep.subr.mxu0 0.0
        %v683 = vand.u32 %v266, 4294901760
        %v684 = vsub.f32 %v266, %v683
        %685 = vmatpush2.msra.mxu0 %v684
        %686 = vmatprep.subr.mxu0 0.0
        %v687 = vand.u32 %v265, 4294901760
        %v688 = vsub.f32 %v265, %v687
        %689 = vmatpush2.msra.mxu0 %v688
        %690 = vmatprep.subr.mxu0 0.0
        %v691 = vand.u32 %v264, 4294901760
        %v692 = vsub.f32 %v264, %v691
        %693 = vmatpush2.msra.mxu0 %v692
        %694 = vmatprep.subr.mxu0 0.0
        %v695 = vand.u32 %v263, 4294901760
        %v696 = vsub.f32 %v263, %v695
        %697 = vmatpush2.msra.mxu0 %v696
        %698 = vmatprep.subr.mxu0 0.0
        %v699 = vand.u32 %v262, 4294901760
        %v700 = vsub.f32 %v262, %v699
        %701 = vmatpush2.msra.mxu0 %v700
        %702 = vmatprep.subr.mxu0 0.0
        %v703 = vand.u32 %v261, 4294901760
        %v704 = vsub.f32 %v261, %v703
        %705 = vmatpush2.msra.mxu0 %v704
        %706 = vmatprep.subr.mxu0 0.0
        %v707 = vand.u32 %v260, 4294901760
        %v708 = vsub.f32 %v260, %v707
        %709 = vmatpush2.msra.mxu0 %v708
        %710 = vmatprep.subr.mxu0 0.0
        %v711 = vand.u32 %v259, 4294901760
        %v712 = vsub.f32 %v259, %v711
        %713 = vmatpush2.msra.mxu0 %v712
        %714 = vmatprep.subr.mxu0 0.0
        %v715 = vand.u32 %v258, 4294901760
        %v716 = vsub.f32 %v258, %v715
        %717 = vmatpush2.msra.mxu0 %v716
        %718 = vmatprep.subr.mxu0 0.0
        %v719 = vand.u32 %v257, 4294901760
        %v720 = vsub.f32 %v257, %v719
        %721 = vmatpush2.msra.mxu0 %v720
        %722 = vmatprep.subr.mxu0 0.0
        %v723 = vand.u32 %v256, 4294901760
        %v724 = vsub.f32 %v256, %v723
        %725 = vmatpush2.msra.mxu0 %v724
        %726 = vmatprep.subr.mxu0 0.0
        %v727 = vand.u32 %v255, 4294901760
        %v728 = vsub.f32 %v255, %v727
        %729 = vmatpush2.msra.mxu0 %v728
        %730 = vmatprep.subr.mxu0 0.0
        %v731 = vand.u32 %v254, 4294901760
        %v732 = vsub.f32 %v254, %v731
        %733 = vmatpush2.msra.mxu0 %v732
        %734 = vmatprep.subr.mxu0 0.0
        %v735 = vand.u32 %v253, 4294901760
        %v736 = vsub.f32 %v253, %v735
        %737 = vmatpush2.msra.mxu0 %v736
        %738 = vmatprep.subr.mxu0 0.0
        %v739 = vand.u32 %v252, 4294901760
        %v740 = vsub.f32 %v252, %v739
        %741 = vmatpush2.msra.mxu0 %v740
        %v742 = vand.u32 %v269, 4294901760
        %v743 = vsub.f32 %v269, %v742
        %744 = vmatprep.mubr.f32.mxu0 %v743
        %v745 = vand.u32 %v268, 4294901760
        %v746 = vsub.f32 %v268, %v745
        %747 = vmatmul.mubr.f32.gmra.mxu0 %v746
        %v748 = vpop.f32.mrf.mxu0
        %v749 = vadd.f32 %v611, %v748
        %v750 = vpop.f32.mrf.mxu0
        %751 = vdwg.mxu0
        %752 = vmatprep.subr.mxu0 0.0
        %v753 = vand.u32 %v251, 4294901760
        %754 = vmatpush1.msra.mxu0 %v753
        %755 = vmatprep.subr.mxu0 0.0
        %v756 = vand.u32 %v250, 4294901760
        %757 = vmatpush1.msra.mxu0 %v756
        %758 = vmatprep.subr.mxu0 0.0
        %v759 = vand.u32 %v249, 4294901760
        %760 = vmatpush1.msra.mxu0 %v759
        %761 = vmatprep.subr.mxu0 0.0
        %v762 = vand.u32 %v248, 4294901760
        %763 = vmatpush1.msra.mxu0 %v762
        %764 = vmatprep.subr.mxu0 0.0
        %v765 = vand.u32 %v247, 4294901760
        %766 = vmatpush1.msra.mxu0 %v765
        %767 = vmatprep.subr.mxu0 0.0
        %v768 = vand.u32 %v246, 4294901760
        %769 = vmatpush1.msra.mxu0 %v768
        %770 = vmatprep.subr.mxu0 0.0
        %v771 = vand.u32 %v245, 4294901760
        %772 = vmatpush1.msra.mxu0 %v771
        %773 = vmatprep.subr.mxu0 0.0
        %v774 = vand.u32 %v244, 4294901760
        %775 = vmatpush1.msra.mxu0 %v774
        %776 = vmatprep.subr.mxu0 0.0
        %v777 = vand.u32 %v243, 4294901760
        %778 = vmatpush1.msra.mxu0 %v777
        %779 = vmatprep.subr.mxu0 0.0
        %v780 = vand.u32 %v242, 4294901760
        %781 = vmatpush1.msra.mxu0 %v780
        %782 = vmatprep.subr.mxu0 0.0
        %v783 = vand.u32 %v241, 4294901760
        %784 = vmatpush1.msra.mxu0 %v783
        %785 = vmatprep.subr.mxu0 0.0
        %v786 = vand.u32 %v240, 4294901760
        %787 = vmatpush1.msra.mxu0 %v786
        %788 = vmatprep.subr.mxu0 0.0
        %v789 = vand.u32 %v239, 4294901760
        %790 = vmatpush1.msra.mxu0 %v789
        %791 = vmatprep.subr.mxu0 0.0
        %v792 = vand.u32 %v238, 4294901760
        %793 = vmatpush1.msra.mxu0 %v792
        %794 = vmatprep.subr.mxu0 0.0
        %v795 = vand.u32 %v237, 4294901760
        %796 = vmatpush1.msra.mxu0 %v795
        %797 = vmatprep.subr.mxu0 0.0
        %v798 = vand.u32 %v236, 4294901760
        %799 = vmatpush1.msra.mxu0 %v798
        %800 = vmatprep.subr.mxu0 0.0
        %v801 = vand.u32 %v267, 4294901760
        %802 = vmatpush2.msra.mxu0 %v801
        %803 = vmatprep.subr.mxu0 0.0
        %v804 = vand.u32 %v266, 4294901760
        %805 = vmatpush2.msra.mxu0 %v804
        %806 = vmatprep.subr.mxu0 0.0
        %v807 = vand.u32 %v265, 4294901760
        %808 = vmatpush2.msra.mxu0 %v807
        %809 = vmatprep.subr.mxu0 0.0
        %v810 = vand.u32 %v264, 4294901760
        %811 = vmatpush2.msra.mxu0 %v810
        %812 = vmatprep.subr.mxu0 0.0
        %v813 = vand.u32 %v263, 4294901760
        %814 = vmatpush2.msra.mxu0 %v813
        %815 = vmatprep.subr.mxu0 0.0
        %v816 = vand.u32 %v262, 4294901760
        %817 = vmatpush2.msra.mxu0 %v816
        %818 = vmatprep.subr.mxu0 0.0
        %v819 = vand.u32 %v261, 4294901760
        %820 = vmatpush2.msra.mxu0 %v819
        %821 = vmatprep.subr.mxu0 0.0
        %v822 = vand.u32 %v260, 4294901760
        %823 = vmatpush2.msra.mxu0 %v822
        %824 = vmatprep.subr.mxu0 0.0
        %v825 = vand.u32 %v259, 4294901760
        %826 = vmatpush2.msra.mxu0 %v825
        %827 = vmatprep.subr.mxu0 0.0
        %v828 = vand.u32 %v258, 4294901760
        %829 = vmatpush2.msra.mxu0 %v828
        %830 = vmatprep.subr.mxu0 0.0
        %v831 = vand.u32 %v257, 4294901760
        %832 = vmatpush2.msra.mxu0 %v831
        %833 = vmatprep.subr.mxu0 0.0
        %v834 = vand.u32 %v256, 4294901760
        %835 = vmatpush2.msra.mxu0 %v834
        %836 = vmatprep.subr.mxu0 0.0
        %v837 = vand.u32 %v255, 4294901760
        %838 = vmatpush2.msra.mxu0 %v837
        %839 = vmatprep.subr.mxu0 0.0
        %v840 = vand.u32 %v254, 4294901760
        %841 = vmatpush2.msra.mxu0 %v840
        %842 = vmatprep.subr.mxu0 0.0
        %v843 = vand.u32 %v253, 4294901760
        %844 = vmatpush2.msra.mxu0 %v843
        %845 = vmatprep.subr.mxu0 0.0
        %v846 = vand.u32 %v252, 4294901760
        %847 = vmatpush2.msra.mxu0 %v846
        %v848 = vand.u32 %v269, 4294901760
        %v849 = vsub.f32 %v269, %v848
        %v850 = vand.u32 %v849, 4294901760
        %851 = vmatprep.mubr.f32.mxu0 %v850
        %v852 = vand.u32 %v268, 4294901760
        %v853 = vsub.f32 %v268, %v852
        %v854 = vand.u32 %v853, 4294901760
        %855 = vmatmul.mubr.f32.gmra.mxu0 %v854
        %v856 = vpop.f32.mrf.mxu0
        %v857 = vadd.f32 %v749, %v856
        %v858 = vpop.f32.mrf.mxu0
        %859 = vdwg.mxu0
        %860 = vmatprep.subr.mxu0 0.0
        %v861 = vand.u32 %v251, 4294901760
        %v862 = vsub.f32 %v251, %v861
        %v863 = vand.u32 %v862, 4294901760
        %864 = vmatpush1.msra.mxu0 %v863
        %865 = vmatprep.subr.mxu0 0.0
        %v866 = vand.u32 %v250, 4294901760
        %v867 = vsub.f32 %v250, %v866
        %v868 = vand.u32 %v867, 4294901760
        %869 = vmatpush1.msra.mxu0 %v868
        %870 = vmatprep.subr.mxu0 0.0
        %v871 = vand.u32 %v249, 4294901760
        %v872 = vsub.f32 %v249, %v871
        %v873 = vand.u32 %v872, 4294901760
        %874 = vmatpush1.msra.mxu0 %v873
        %875 = vmatprep.subr.mxu0 0.0
        %v876 = vand.u32 %v248, 4294901760
        %v877 = vsub.f32 %v248, %v876
        %v878 = vand.u32 %v877, 4294901760
        %879 = vmatpush1.msra.mxu0 %v878
        %880 = vmatprep.subr.mxu0 0.0
        %v881 = vand.u32 %v247, 4294901760
        %v882 = vsub.f32 %v247, %v881
        %v883 = vand.u32 %v882, 4294901760
        %884 = vmatpush1.msra.mxu0 %v883
        %885 = vmatprep.subr.mxu0 0.0
        %v886 = vand.u32 %v246, 4294901760
        %v887 = vsub.f32 %v246, %v886
        %v888 = vand.u32 %v887, 4294901760
        %889 = vmatpush1.msra.mxu0 %v888
        %890 = vmatprep.subr.mxu0 0.0
        %v891 = vand.u32 %v245, 4294901760
        %v892 = vsub.f32 %v245, %v891
        %v893 = vand.u32 %v892, 4294901760
        %894 = vmatpush1.msra.mxu0 %v893
        %895 = vmatprep.subr.mxu0 0.0
        %v896 = vand.u32 %v244, 4294901760
        %v897 = vsub.f32 %v244, %v896
        %v898 = vand.u32 %v897, 4294901760
        %899 = vmatpush1.msra.mxu0 %v898
        %900 = vmatprep.subr.mxu0 0.0
        %v901 = vand.u32 %v243, 4294901760
        %v902 = vsub.f32 %v243, %v901
        %v903 = vand.u32 %v902, 4294901760
        %904 = vmatpush1.msra.mxu0 %v903
        %905 = vmatprep.subr.mxu0 0.0
        %v906 = vand.u32 %v242, 4294901760
        %v907 = vsub.f32 %v242, %v906
        %v908 = vand.u32 %v907, 4294901760
        %909 = vmatpush1.msra.mxu0 %v908
        %910 = vmatprep.subr.mxu0 0.0
        %v911 = vand.u32 %v241, 4294901760
        %v912 = vsub.f32 %v241, %v911
        %v913 = vand.u32 %v912, 4294901760
        %914 = vmatpush1.msra.mxu0 %v913
        %915 = vmatprep.subr.mxu0 0.0
        %v916 = vand.u32 %v240, 4294901760
        %v917 = vsub.f32 %v240, %v916
        %v918 = vand.u32 %v917, 4294901760
        %919 = vmatpush1.msra.mxu0 %v918
        %920 = vmatprep.subr.mxu0 0.0
        %v921 = vand.u32 %v239, 4294901760
        %v922 = vsub.f32 %v239, %v921
        %v923 = vand.u32 %v922, 4294901760
        %924 = vmatpush1.msra.mxu0 %v923
        %925 = vmatprep.subr.mxu0 0.0
        %v926 = vand.u32 %v238, 4294901760
        %v927 = vsub.f32 %v238, %v926
        %v928 = vand.u32 %v927, 4294901760
        %929 = vmatpush1.msra.mxu0 %v928
        %930 = vmatprep.subr.mxu0 0.0
        %v931 = vand.u32 %v237, 4294901760
        %v932 = vsub.f32 %v237, %v931
        %v933 = vand.u32 %v932, 4294901760
        %934 = vmatpush1.msra.mxu0 %v933
        %935 = vmatprep.subr.mxu0 0.0
        %v936 = vand.u32 %v236, 4294901760
        %v937 = vsub.f32 %v236, %v936
        %v938 = vand.u32 %v937, 4294901760
        %939 = vmatpush1.msra.mxu0 %v938
        %940 = vmatprep.subr.mxu0 0.0
        %v941 = vand.u32 %v267, 4294901760
        %v942 = vsub.f32 %v267, %v941
        %v943 = vand.u32 %v942, 4294901760
        %944 = vmatpush2.msra.mxu0 %v943
        %945 = vmatprep.subr.mxu0 0.0
        %v946 = vand.u32 %v266, 4294901760
        %v947 = vsub.f32 %v266, %v946
        %v948 = vand.u32 %v947, 4294901760
        %949 = vmatpush2.msra.mxu0 %v948
        %950 = vmatprep.subr.mxu0 0.0
        %v951 = vand.u32 %v265, 4294901760
        %v952 = vsub.f32 %v265, %v951
        %v953 = vand.u32 %v952, 4294901760
        %954 = vmatpush2.msra.mxu0 %v953
        %955 = vmatprep.subr.mxu0 0.0
        %v956 = vand.u32 %v264, 4294901760
        %v957 = vsub.f32 %v264, %v956
        %v958 = vand.u32 %v957, 4294901760
        %959 = vmatpush2.msra.mxu0 %v958
        %960 = vmatprep.subr.mxu0 0.0
        %v961 = vand.u32 %v263, 4294901760
        %v962 = vsub.f32 %v263, %v961
        %v963 = vand.u32 %v962, 4294901760
        %964 = vmatpush2.msra.mxu0 %v963
        %965 = vmatprep.subr.mxu0 0.0
        %v966 = vand.u32 %v262, 4294901760
        %v967 = vsub.f32 %v262, %v966
        %v968 = vand.u32 %v967, 4294901760
        %969 = vmatpush2.msra.mxu0 %v968
        %970 = vmatprep.subr.mxu0 0.0
        %v971 = vand.u32 %v261, 4294901760
        %v972 = vsub.f32 %v261, %v971
        %v973 = vand.u32 %v972, 4294901760
        %974 = vmatpush2.msra.mxu0 %v973
        %975 = vmatprep.subr.mxu0 0.0
        %v976 = vand.u32 %v260, 4294901760
        %v977 = vsub.f32 %v260, %v976
        %v978 = vand.u32 %v977, 4294901760
        %979 = vmatpush2.msra.mxu0 %v978
        %980 = vmatprep.subr.mxu0 0.0
        %v981 = vand.u32 %v259, 4294901760
        %v982 = vsub.f32 %v259, %v981
        %v983 = vand.u32 %v982, 4294901760
        %984 = vmatpush2.msra.mxu0 %v983
        %985 = vmatprep.subr.mxu0 0.0
        %v986 = vand.u32 %v258, 4294901760
        %v987 = vsub.f32 %v258, %v986
        %v988 = vand.u32 %v987, 4294901760
        %989 = vmatpush2.msra.mxu0 %v988
        %990 = vmatprep.subr.mxu0 0.0
        %v991 = vand.u32 %v257, 4294901760
        %v992 = vsub.f32 %v257, %v991
        %v993 = vand.u32 %v992, 4294901760
        %994 = vmatpush2.msra.mxu0 %v993
        %995 = vmatprep.subr.mxu0 0.0
        %v996 = vand.u32 %v256, 4294901760
        %v997 = vsub.f32 %v256, %v996
        %v998 = vand.u32 %v997, 4294901760
        %999 = vmatpush2.msra.mxu0 %v998
        %1000 = vmatprep.subr.mxu0 0.0
        %v1001 = vand.u32 %v255, 4294901760
        %v1002 = vsub.f32 %v255, %v1001
        %v1003 = vand.u32 %v1002, 4294901760
        %1004 = vmatpush2.msra.mxu0 %v1003
        %1005 = vmatprep.subr.mxu0 0.0
        %v1006 = vand.u32 %v254, 4294901760
        %v1007 = vsub.f32 %v254, %v1006
        %v1008 = vand.u32 %v1007, 4294901760
        %1009 = vmatpush2.msra.mxu0 %v1008
        %1010 = vmatprep.subr.mxu0 0.0
        %v1011 = vand.u32 %v253, 4294901760
        %v1012 = vsub.f32 %v253, %v1011
        %v1013 = vand.u32 %v1012, 4294901760
        %1014 = vmatpush2.msra.mxu0 %v1013
        %1015 = vmatprep.subr.mxu0 0.0
        %v1016 = vand.u32 %v252, 4294901760
        %v1017 = vsub.f32 %v252, %v1016
        %v1018 = vand.u32 %v1017, 4294901760
        %1019 = vmatpush2.msra.mxu0 %v1018
        %v1020 = vand.u32 %v269, 4294901760
        %1021 = vmatprep.mubr.f32.mxu0 %v1020
        %v1022 = vand.u32 %v268, 4294901760
        %1023 = vmatmul.mubr.f32.gmra.mxu0 %v1022
        %v1024 = vpop.f32.mrf.mxu0
        %v1025 = vadd.f32 %v857, %v1024
        %v1026 = vpop.f32.mrf.mxu0
        %1027 = vdwg.mxu0
        %1028 = vmatprep.subr.mxu0 0.0
        %v1029 = vand.u32 %v251, 4294901760
        %1030 = vmatpush1.msra.mxu0 %v1029
        %1031 = vmatprep.subr.mxu0 0.0
        %v1032 = vand.u32 %v250, 4294901760
        %1033 = vmatpush1.msra.mxu0 %v1032
        %1034 = vmatprep.subr.mxu0 0.0
        %v1035 = vand.u32 %v249, 4294901760
        %1036 = vmatpush1.msra.mxu0 %v1035
        %1037 = vmatprep.subr.mxu0 0.0
        %v1038 = vand.u32 %v248, 4294901760
        %1039 = vmatpush1.msra.mxu0 %v1038
        %1040 = vmatprep.subr.mxu0 0.0
        %v1041 = vand.u32 %v247, 4294901760
        %1042 = vmatpush1.msra.mxu0 %v1041
        %1043 = vmatprep.subr.mxu0 0.0
        %v1044 = vand.u32 %v246, 4294901760
        %1045 = vmatpush1.msra.mxu0 %v1044
        %1046 = vmatprep.subr.mxu0 0.0
        %v1047 = vand.u32 %v245, 4294901760
        %1048 = vmatpush1.msra.mxu0 %v1047
        %1049 = vmatprep.subr.mxu0 0.0
        %v1050 = vand.u32 %v244, 4294901760
        %1051 = vmatpush1.msra.mxu0 %v1050
        %1052 = vmatprep.subr.mxu0 0.0
        %v1053 = vand.u32 %v243, 4294901760
        %1054 = vmatpush1.msra.mxu0 %v1053
        %1055 = vmatprep.subr.mxu0 0.0
        %v1056 = vand.u32 %v242, 4294901760
        %1057 = vmatpush1.msra.mxu0 %v1056
        %1058 = vmatprep.subr.mxu0 0.0
        %v1059 = vand.u32 %v241, 4294901760
        %1060 = vmatpush1.msra.mxu0 %v1059
        %1061 = vmatprep.subr.mxu0 0.0
        %v1062 = vand.u32 %v240, 4294901760
        %1063 = vmatpush1.msra.mxu0 %v1062
        %1064 = vmatprep.subr.mxu0 0.0
        %v1065 = vand.u32 %v239, 4294901760
        %1066 = vmatpush1.msra.mxu0 %v1065
        %1067 = vmatprep.subr.mxu0 0.0
        %v1068 = vand.u32 %v238, 4294901760
        %1069 = vmatpush1.msra.mxu0 %v1068
        %1070 = vmatprep.subr.mxu0 0.0
        %v1071 = vand.u32 %v237, 4294901760
        %1072 = vmatpush1.msra.mxu0 %v1071
        %1073 = vmatprep.subr.mxu0 0.0
        %v1074 = vand.u32 %v236, 4294901760
        %1075 = vmatpush1.msra.mxu0 %v1074
        %1076 = vmatprep.subr.mxu0 0.0
        %v1077 = vand.u32 %v267, 4294901760
        %1078 = vmatpush2.msra.mxu0 %v1077
        %1079 = vmatprep.subr.mxu0 0.0
        %v1080 = vand.u32 %v266, 4294901760
        %1081 = vmatpush2.msra.mxu0 %v1080
        %1082 = vmatprep.subr.mxu0 0.0
        %v1083 = vand.u32 %v265, 4294901760
        %1084 = vmatpush2.msra.mxu0 %v1083
        %1085 = vmatprep.subr.mxu0 0.0
        %v1086 = vand.u32 %v264, 4294901760
        %1087 = vmatpush2.msra.mxu0 %v1086
        %1088 = vmatprep.subr.mxu0 0.0
        %v1089 = vand.u32 %v263, 4294901760
        %1090 = vmatpush2.msra.mxu0 %v1089
        %1091 = vmatprep.subr.mxu0 0.0
        %v1092 = vand.u32 %v262, 4294901760
        %1093 = vmatpush2.msra.mxu0 %v1092
        %1094 = vmatprep.subr.mxu0 0.0
        %v1095 = vand.u32 %v261, 4294901760
        %1096 = vmatpush2.msra.mxu0 %v1095
        %1097 = vmatprep.subr.mxu0 0.0
        %v1098 = vand.u32 %v260, 4294901760
        %1099 = vmatpush2.msra.mxu0 %v1098
        %1100 = vmatprep.subr.mxu0 0.0
        %v1101 = vand.u32 %v259, 4294901760
        %1102 = vmatpush2.msra.mxu0 %v1101
        %1103 = vmatprep.subr.mxu0 0.0
        %v1104 = vand.u32 %v258, 4294901760
        %1105 = vmatpush2.msra.mxu0 %v1104
        %1106 = vmatprep.subr.mxu0 0.0
        %v1107 = vand.u32 %v257, 4294901760
        %1108 = vmatpush2.msra.mxu0 %v1107
        %1109 = vmatprep.subr.mxu0 0.0
        %v1110 = vand.u32 %v256, 4294901760
        %1111 = vmatpush2.msra.mxu0 %v1110
        %1112 = vmatprep.subr.mxu0 0.0
        %v1113 = vand.u32 %v255, 4294901760
        %1114 = vmatpush2.msra.mxu0 %v1113
        %1115 = vmatprep.subr.mxu0 0.0
        %v1116 = vand.u32 %v254, 4294901760
        %1117 = vmatpush2.msra.mxu0 %v1116
        %1118 = vmatprep.subr.mxu0 0.0
        %v1119 = vand.u32 %v253, 4294901760
        %1120 = vmatpush2.msra.mxu0 %v1119
        %1121 = vmatprep.subr.mxu0 0.0
        %v1122 = vand.u32 %v252, 4294901760
        %1123 = vmatpush2.msra.mxu0 %v1122
        %v1124 = vand.u32 %v269, 4294901760
        %1125 = vmatprep.mubr.f32.mxu0 %v1124
        %v1126 = vand.u32 %v268, 4294901760
        %1127 = vmatmul.mubr.f32.gmra.mxu0 %v1126
        %v1128 = vpop.f32.mrf.mxu0
        %v1129 = vadd.f32 %v1025, %v1128
        %v1130 = vpop.f32.mrf.mxu0
        %1131 = vdwg.mxu0
        %s1132 = scalar_lea.vmem %s204, 16 [#allocation2]
        %v1133 = vld [vmem:[%s1132] sm:$0xff]
        %v1134 = vld [vmem:[%s1132 + $0x8] sm:$0xff]
        %1135 = vmatprep.subr.mxu0 0.0
        %v1136 = vand.u32 %v251, 4294901760
        %1137 = vmatpush1.msra.mxu0 %v1136
        %1138 = vmatprep.subr.mxu0 0.0
        %v1139 = vand.u32 %v250, 4294901760
        %1140 = vmatpush1.msra.mxu0 %v1139
        %1141 = vmatprep.subr.mxu0 0.0
        %v1142 = vand.u32 %v249, 4294901760
        %1143 = vmatpush1.msra.mxu0 %v1142
        %1144 = vmatprep.subr.mxu0 0.0
        %v1145 = vand.u32 %v248, 4294901760
        %1146 = vmatpush1.msra.mxu0 %v1145
        %1147 = vmatprep.subr.mxu0 0.0
        %v1148 = vand.u32 %v247, 4294901760
        %1149 = vmatpush1.msra.mxu0 %v1148
        %1150 = vmatprep.subr.mxu0 0.0
        %v1151 = vand.u32 %v246, 4294901760
        %1152 = vmatpush1.msra.mxu0 %v1151
        %1153 = vmatprep.subr.mxu0 0.0
        %v1154 = vand.u32 %v245, 4294901760
        %1155 = vmatpush1.msra.mxu0 %v1154
        %1156 = vmatprep.subr.mxu0 0.0
        %v1157 = vand.u32 %v244, 4294901760
        %1158 = vmatpush1.msra.mxu0 %v1157
        %1159 = vmatprep.subr.mxu0 0.0
        %v1160 = vand.u32 %v243, 4294901760
        %1161 = vmatpush1.msra.mxu0 %v1160
        %1162 = vmatprep.subr.mxu0 0.0
        %v1163 = vand.u32 %v242, 4294901760
        %1164 = vmatpush1.msra.mxu0 %v1163
        %1165 = vmatprep.subr.mxu0 0.0
        %v1166 = vand.u32 %v241, 4294901760
        %1167 = vmatpush1.msra.mxu0 %v1166
        %1168 = vmatprep.subr.mxu0 0.0
        %v1169 = vand.u32 %v240, 4294901760
        %1170 = vmatpush1.msra.mxu0 %v1169
        %1171 = vmatprep.subr.mxu0 0.0
        %v1172 = vand.u32 %v239, 4294901760
        %1173 = vmatpush1.msra.mxu0 %v1172
        %1174 = vmatprep.subr.mxu0 0.0
        %v1175 = vand.u32 %v238, 4294901760
        %1176 = vmatpush1.msra.mxu0 %v1175
        %1177 = vmatprep.subr.mxu0 0.0
        %v1178 = vand.u32 %v237, 4294901760
        %1179 = vmatpush1.msra.mxu0 %v1178
        %1180 = vmatprep.subr.mxu0 0.0
        %v1181 = vand.u32 %v236, 4294901760
        %1182 = vmatpush1.msra.mxu0 %v1181
        %1183 = vmatprep.subr.mxu0 0.0
        %v1184 = vand.u32 %v267, 4294901760
        %1185 = vmatpush2.msra.mxu0 %v1184
        %1186 = vmatprep.subr.mxu0 0.0
        %v1187 = vand.u32 %v266, 4294901760
        %1188 = vmatpush2.msra.mxu0 %v1187
        %1189 = vmatprep.subr.mxu0 0.0
        %v1190 = vand.u32 %v265, 4294901760
        %1191 = vmatpush2.msra.mxu0 %v1190
        %1192 = vmatprep.subr.mxu0 0.0
        %v1193 = vand.u32 %v264, 4294901760
        %1194 = vmatpush2.msra.mxu0 %v1193
        %1195 = vmatprep.subr.mxu0 0.0
        %v1196 = vand.u32 %v263, 4294901760
        %1197 = vmatpush2.msra.mxu0 %v1196
        %1198 = vmatprep.subr.mxu0 0.0
        %v1199 = vand.u32 %v262, 4294901760
        %1200 = vmatpush2.msra.mxu0 %v1199
        %1201 = vmatprep.subr.mxu0 0.0
        %v1202 = vand.u32 %v261, 4294901760
        %1203 = vmatpush2.msra.mxu0 %v1202
        %1204 = vmatprep.subr.mxu0 0.0
        %v1205 = vand.u32 %v260, 4294901760
        %1206 = vmatpush2.msra.mxu0 %v1205
        %1207 = vmatprep.subr.mxu0 0.0
        %v1208 = vand.u32 %v259, 4294901760
        %1209 = vmatpush2.msra.mxu0 %v1208
        %1210 = vmatprep.subr.mxu0 0.0
        %v1211 = vand.u32 %v258, 4294901760
        %1212 = vmatpush2.msra.mxu0 %v1211
        %1213 = vmatprep.subr.mxu0 0.0
        %v1214 = vand.u32 %v257, 4294901760
        %1215 = vmatpush2.msra.mxu0 %v1214
        %1216 = vmatprep.subr.mxu0 0.0
        %v1217 = vand.u32 %v256, 4294901760
        %1218 = vmatpush2.msra.mxu0 %v1217
        %1219 = vmatprep.subr.mxu0 0.0
        %v1220 = vand.u32 %v255, 4294901760
        %1221 = vmatpush2.msra.mxu0 %v1220
        %1222 = vmatprep.subr.mxu0 0.0
        %v1223 = vand.u32 %v254, 4294901760
        %1224 = vmatpush2.msra.mxu0 %v1223
        %1225 = vmatprep.subr.mxu0 0.0
        %v1226 = vand.u32 %v253, 4294901760
        %1227 = vmatpush2.msra.mxu0 %v1226
        %1228 = vmatprep.subr.mxu0 0.0
        %v1229 = vand.u32 %v252, 4294901760
        %1230 = vmatpush2.msra.mxu0 %v1229
        %v1231 = vand.u32 %v1134, 4294901760
        %v1232 = vsub.f32 %v1134, %v1231
        %v1233 = vand.u32 %v1232, 4294901760
        %v1234 = vsub.f32 %v1232, %v1233
        %v1235 = vand.u32 %v1234, 4294901760
        %1236 = vmatprep.mubr.f32.mxu0 %v1235
        %v1237 = vand.u32 %v1133, 4294901760
        %v1238 = vsub.f32 %v1133, %v1237
        %v1239 = vand.u32 %v1238, 4294901760
        %v1240 = vsub.f32 %v1238, %v1239
        %v1241 = vand.u32 %v1240, 4294901760
        %1242 = vmatmul.mubr.f32.gmra.mxu0 %v1241
        %v1243 = vpop.f32.mrf.mxu0
        %v1244 = vadd.f32 0.0, %v1243
        %v1245 = vpop.f32.mrf.mxu0
        %1246 = vdwg.mxu0
        %1247 = vmatprep.subr.mxu0 0.0
        %v1248 = vand.u32 %v251, 4294901760
        %v1249 = vsub.f32 %v251, %v1248
        %v1250 = vand.u32 %v1249, 4294901760
        %v1251 = vsub.f32 %v1249, %v1250
        %v1252 = vand.u32 %v1251, 4294901760
        %1253 = vmatpush1.msra.mxu0 %v1252
        %1254 = vmatprep.subr.mxu0 0.0
        %v1255 = vand.u32 %v250, 4294901760
        %v1256 = vsub.f32 %v250, %v1255
        %v1257 = vand.u32 %v1256, 4294901760
        %v1258 = vsub.f32 %v1256, %v1257
        %v1259 = vand.u32 %v1258, 4294901760
        %1260 = vmatpush1.msra.mxu0 %v1259
        %1261 = vmatprep.subr.mxu0 0.0
        %v1262 = vand.u32 %v249, 4294901760
        %v1263 = vsub.f32 %v249, %v1262
        %v1264 = vand.u32 %v1263, 4294901760
        %v1265 = vsub.f32 %v1263, %v1264
        %v1266 = vand.u32 %v1265, 4294901760
        %1267 = vmatpush1.msra.mxu0 %v1266
        %1268 = vmatprep.subr.mxu0 0.0
        %v1269 = vand.u32 %v248, 4294901760
        %v1270 = vsub.f32 %v248, %v1269
        %v1271 = vand.u32 %v1270, 4294901760
        %v1272 = vsub.f32 %v1270, %v1271
        %v1273 = vand.u32 %v1272, 4294901760
        %1274 = vmatpush1.msra.mxu0 %v1273
        %1275 = vmatprep.subr.mxu0 0.0
        %v1276 = vand.u32 %v247, 4294901760
        %v1277 = vsub.f32 %v247, %v1276
        %v1278 = vand.u32 %v1277, 4294901760
        %v1279 = vsub.f32 %v1277, %v1278
        %v1280 = vand.u32 %v1279, 4294901760
        %1281 = vmatpush1.msra.mxu0 %v1280
        %1282 = vmatprep.subr.mxu0 0.0
        %v1283 = vand.u32 %v246, 4294901760
        %v1284 = vsub.f32 %v246, %v1283
        %v1285 = vand.u32 %v1284, 4294901760
        %v1286 = vsub.f32 %v1284, %v1285
        %v1287 = vand.u32 %v1286, 4294901760
        %1288 = vmatpush1.msra.mxu0 %v1287
        %1289 = vmatprep.subr.mxu0 0.0
        %v1290 = vand.u32 %v245, 4294901760
        %v1291 = vsub.f32 %v245, %v1290
        %v1292 = vand.u32 %v1291, 4294901760
        %v1293 = vsub.f32 %v1291, %v1292
        %v1294 = vand.u32 %v1293, 4294901760
        %1295 = vmatpush1.msra.mxu0 %v1294
        %1296 = vmatprep.subr.mxu0 0.0
        %v1297 = vand.u32 %v244, 4294901760
        %v1298 = vsub.f32 %v244, %v1297
        %v1299 = vand.u32 %v1298, 4294901760
        %v1300 = vsub.f32 %v1298, %v1299
        %v1301 = vand.u32 %v1300, 4294901760
        %1302 = vmatpush1.msra.mxu0 %v1301
        %1303 = vmatprep.subr.mxu0 0.0
        %v1304 = vand.u32 %v243, 4294901760
        %v1305 = vsub.f32 %v243, %v1304
        %v1306 = vand.u32 %v1305, 4294901760
        %v1307 = vsub.f32 %v1305, %v1306
        %v1308 = vand.u32 %v1307, 4294901760
        %1309 = vmatpush1.msra.mxu0 %v1308
        %1310 = vmatprep.subr.mxu0 0.0
        %v1311 = vand.u32 %v242, 4294901760
        %v1312 = vsub.f32 %v242, %v1311
        %v1313 = vand.u32 %v1312, 4294901760
        %v1314 = vsub.f32 %v1312, %v1313
        %v1315 = vand.u32 %v1314, 4294901760
        %1316 = vmatpush1.msra.mxu0 %v1315
        %1317 = vmatprep.subr.mxu0 0.0
        %v1318 = vand.u32 %v241, 4294901760
        %v1319 = vsub.f32 %v241, %v1318
        %v1320 = vand.u32 %v1319, 4294901760
        %v1321 = vsub.f32 %v1319, %v1320
        %v1322 = vand.u32 %v1321, 4294901760
        %1323 = vmatpush1.msra.mxu0 %v1322
        %1324 = vmatprep.subr.mxu0 0.0
        %v1325 = vand.u32 %v240, 4294901760
        %v1326 = vsub.f32 %v240, %v1325
        %v1327 = vand.u32 %v1326, 4294901760
        %v1328 = vsub.f32 %v1326, %v1327
        %v1329 = vand.u32 %v1328, 4294901760
        %1330 = vmatpush1.msra.mxu0 %v1329
        %1331 = vmatprep.subr.mxu0 0.0
        %v1332 = vand.u32 %v239, 4294901760
        %v1333 = vsub.f32 %v239, %v1332
        %v1334 = vand.u32 %v1333, 4294901760
        %v1335 = vsub.f32 %v1333, %v1334
        %v1336 = vand.u32 %v1335, 4294901760
        %1337 = vmatpush1.msra.mxu0 %v1336
        %1338 = vmatprep.subr.mxu0 0.0
        %v1339 = vand.u32 %v238, 4294901760
        %v1340 = vsub.f32 %v238, %v1339
        %v1341 = vand.u32 %v1340, 4294901760
        %v1342 = vsub.f32 %v1340, %v1341
        %v1343 = vand.u32 %v1342, 4294901760
        %1344 = vmatpush1.msra.mxu0 %v1343
        %1345 = vmatprep.subr.mxu0 0.0
        %v1346 = vand.u32 %v237, 4294901760
        %v1347 = vsub.f32 %v237, %v1346
        %v1348 = vand.u32 %v1347, 4294901760
        %v1349 = vsub.f32 %v1347, %v1348
        %v1350 = vand.u32 %v1349, 4294901760
        %1351 = vmatpush1.msra.mxu0 %v1350
        %1352 = vmatprep.subr.mxu0 0.0
        %v1353 = vand.u32 %v236, 4294901760
        %v1354 = vsub.f32 %v236, %v1353
        %v1355 = vand.u32 %v1354, 4294901760
        %v1356 = vsub.f32 %v1354, %v1355
        %v1357 = vand.u32 %v1356, 4294901760
        %1358 = vmatpush1.msra.mxu0 %v1357
        %1359 = vmatprep.subr.mxu0 0.0
        %v1360 = vand.u32 %v267, 4294901760
        %v1361 = vsub.f32 %v267, %v1360
        %v1362 = vand.u32 %v1361, 4294901760
        %v1363 = vsub.f32 %v1361, %v1362
        %v1364 = vand.u32 %v1363, 4294901760
        %1365 = vmatpush2.msra.mxu0 %v1364
        %1366 = vmatprep.subr.mxu0 0.0
        %v1367 = vand.u32 %v266, 4294901760
        %v1368 = vsub.f32 %v266, %v1367
        %v1369 = vand.u32 %v1368, 4294901760
        %v1370 = vsub.f32 %v1368, %v1369
        %v1371 = vand.u32 %v1370, 4294901760
        %1372 = vmatpush2.msra.mxu0 %v1371
        %1373 = vmatprep.subr.mxu0 0.0
        %v1374 = vand.u32 %v265, 4294901760
        %v1375 = vsub.f32 %v265, %v1374
        %v1376 = vand.u32 %v1375, 4294901760
        %v1377 = vsub.f32 %v1375, %v1376
        %v1378 = vand.u32 %v1377, 4294901760
        %1379 = vmatpush2.msra.mxu0 %v1378
        %1380 = vmatprep.subr.mxu0 0.0
        %v1381 = vand.u32 %v264, 4294901760
        %v1382 = vsub.f32 %v264, %v1381
        %v1383 = vand.u32 %v1382, 4294901760
        %v1384 = vsub.f32 %v1382, %v1383
        %v1385 = vand.u32 %v1384, 4294901760
        %1386 = vmatpush2.msra.mxu0 %v1385
        %1387 = vmatprep.subr.mxu0 0.0
        %v1388 = vand.u32 %v263, 4294901760
        %v1389 = vsub.f32 %v263, %v1388
        %v1390 = vand.u32 %v1389, 4294901760
        %v1391 = vsub.f32 %v1389, %v1390
        %v1392 = vand.u32 %v1391, 4294901760
        %1393 = vmatpush2.msra.mxu0 %v1392
        %1394 = vmatprep.subr.mxu0 0.0
        %v1395 = vand.u32 %v262, 4294901760
        %v1396 = vsub.f32 %v262, %v1395
        %v1397 = vand.u32 %v1396, 4294901760
        %v1398 = vsub.f32 %v1396, %v1397
        %v1399 = vand.u32 %v1398, 4294901760
        %1400 = vmatpush2.msra.mxu0 %v1399
        %1401 = vmatprep.subr.mxu0 0.0
        %v1402 = vand.u32 %v261, 4294901760
        %v1403 = vsub.f32 %v261, %v1402
        %v1404 = vand.u32 %v1403, 4294901760
        %v1405 = vsub.f32 %v1403, %v1404
        %v1406 = vand.u32 %v1405, 4294901760
        %1407 = vmatpush2.msra.mxu0 %v1406
        %1408 = vmatprep.subr.mxu0 0.0
        %v1409 = vand.u32 %v260, 4294901760
        %v1410 = vsub.f32 %v260, %v1409
        %v1411 = vand.u32 %v1410, 4294901760
        %v1412 = vsub.f32 %v1410, %v1411
        %v1413 = vand.u32 %v1412, 4294901760
        %1414 = vmatpush2.msra.mxu0 %v1413
        %1415 = vmatprep.subr.mxu0 0.0
        %v1416 = vand.u32 %v259, 4294901760
        %v1417 = vsub.f32 %v259, %v1416
        %v1418 = vand.u32 %v1417, 4294901760
        %v1419 = vsub.f32 %v1417, %v1418
        %v1420 = vand.u32 %v1419, 4294901760
        %1421 = vmatpush2.msra.mxu0 %v1420
        %1422 = vmatprep.subr.mxu0 0.0
        %v1423 = vand.u32 %v258, 4294901760
        %v1424 = vsub.f32 %v258, %v1423
        %v1425 = vand.u32 %v1424, 4294901760
        %v1426 = vsub.f32 %v1424, %v1425
        %v1427 = vand.u32 %v1426, 4294901760
        %1428 = vmatpush2.msra.mxu0 %v1427
        %1429 = vmatprep.subr.mxu0 0.0
        %v1430 = vand.u32 %v257, 4294901760
        %v1431 = vsub.f32 %v257, %v1430
        %v1432 = vand.u32 %v1431, 4294901760
        %v1433 = vsub.f32 %v1431, %v1432
        %v1434 = vand.u32 %v1433, 4294901760
        %1435 = vmatpush2.msra.mxu0 %v1434
        %1436 = vmatprep.subr.mxu0 0.0
        %v1437 = vand.u32 %v256, 4294901760
        %v1438 = vsub.f32 %v256, %v1437
        %v1439 = vand.u32 %v1438, 4294901760
        %v1440 = vsub.f32 %v1438, %v1439
        %v1441 = vand.u32 %v1440, 4294901760
        %1442 = vmatpush2.msra.mxu0 %v1441
        %1443 = vmatprep.subr.mxu0 0.0
        %v1444 = vand.u32 %v255, 4294901760
        %v1445 = vsub.f32 %v255, %v1444
        %v1446 = vand.u32 %v1445, 4294901760
        %v1447 = vsub.f32 %v1445, %v1446
        %v1448 = vand.u32 %v1447, 4294901760
        %1449 = vmatpush2.msra.mxu0 %v1448
        %1450 = vmatprep.subr.mxu0 0.0
        %v1451 = vand.u32 %v254, 4294901760
        %v1452 = vsub.f32 %v254, %v1451
        %v1453 = vand.u32 %v1452, 4294901760
        %v1454 = vsub.f32 %v1452, %v1453
        %v1455 = vand.u32 %v1454, 4294901760
        %1456 = vmatpush2.msra.mxu0 %v1455
        %1457 = vmatprep.subr.mxu0 0.0
        %v1458 = vand.u32 %v253, 4294901760
        %v1459 = vsub.f32 %v253, %v1458
        %v1460 = vand.u32 %v1459, 4294901760
        %v1461 = vsub.f32 %v1459, %v1460
        %v1462 = vand.u32 %v1461, 4294901760
        %1463 = vmatpush2.msra.mxu0 %v1462
        %1464 = vmatprep.subr.mxu0 0.0
        %v1465 = vand.u32 %v252, 4294901760
        %v1466 = vsub.f32 %v252, %v1465
        %v1467 = vand.u32 %v1466, 4294901760
        %v1468 = vsub.f32 %v1466, %v1467
        %v1469 = vand.u32 %v1468, 4294901760
        %1470 = vmatpush2.msra.mxu0 %v1469
        %v1471 = vand.u32 %v1134, 4294901760
        %1472 = vmatprep.mubr.f32.mxu0 %v1471
        %v1473 = vand.u32 %v1133, 4294901760
        %1474 = vmatmul.mubr.f32.gmra.mxu0 %v1473
        %v1475 = vpop.f32.mrf.mxu0
        %v1476 = vadd.f32 %v1244, %v1475
        %v1477 = vpop.f32.mrf.mxu0
        %1478 = vdwg.mxu0
        %1479 = vmatprep.subr.mxu0 0.0
        %v1480 = vand.u32 %v251, 4294901760
        %v1481 = vsub.f32 %v251, %v1480
        %1482 = vmatpush1.msra.mxu0 %v1481
        %1483 = vmatprep.subr.mxu0 0.0
        %v1484 = vand.u32 %v250, 4294901760
        %v1485 = vsub.f32 %v250, %v1484
        %1486 = vmatpush1.msra.mxu0 %v1485
        %1487 = vmatprep.subr.mxu0 0.0
        %v1488 = vand.u32 %v249, 4294901760
        %v1489 = vsub.f32 %v249, %v1488
        %1490 = vmatpush1.msra.mxu0 %v1489
        %1491 = vmatprep.subr.mxu0 0.0
        %v1492 = vand.u32 %v248, 4294901760
        %v1493 = vsub.f32 %v248, %v1492
        %1494 = vmatpush1.msra.mxu0 %v1493
        %1495 = vmatprep.subr.mxu0 0.0
        %v1496 = vand.u32 %v247, 4294901760
        %v1497 = vsub.f32 %v247, %v1496
        %1498 = vmatpush1.msra.mxu0 %v1497
        %1499 = vmatprep.subr.mxu0 0.0
        %v1500 = vand.u32 %v246, 4294901760
        %v1501 = vsub.f32 %v246, %v1500
        %1502 = vmatpush1.msra.mxu0 %v1501
        %1503 = vmatprep.subr.mxu0 0.0
        %v1504 = vand.u32 %v245, 4294901760
        %v1505 = vsub.f32 %v245, %v1504
        %1506 = vmatpush1.msra.mxu0 %v1505
        %1507 = vmatprep.subr.mxu0 0.0
        %v1508 = vand.u32 %v244, 4294901760
        %v1509 = vsub.f32 %v244, %v1508
        %1510 = vmatpush1.msra.mxu0 %v1509
        %1511 = vmatprep.subr.mxu0 0.0
        %v1512 = vand.u32 %v243, 4294901760
        %v1513 = vsub.f32 %v243, %v1512
        %1514 = vmatpush1.msra.mxu0 %v1513
        %1515 = vmatprep.subr.mxu0 0.0
        %v1516 = vand.u32 %v242, 4294901760
        %v1517 = vsub.f32 %v242, %v1516
        %1518 = vmatpush1.msra.mxu0 %v1517
        %1519 = vmatprep.subr.mxu0 0.0
        %v1520 = vand.u32 %v241, 4294901760
        %v1521 = vsub.f32 %v241, %v1520
        %1522 = vmatpush1.msra.mxu0 %v1521
        %1523 = vmatprep.subr.mxu0 0.0
        %v1524 = vand.u32 %v240, 4294901760
        %v1525 = vsub.f32 %v240, %v1524
        %1526 = vmatpush1.msra.mxu0 %v1525
        %1527 = vmatprep.subr.mxu0 0.0
        %v1528 = vand.u32 %v239, 4294901760
        %v1529 = vsub.f32 %v239, %v1528
        %1530 = vmatpush1.msra.mxu0 %v1529
        %1531 = vmatprep.subr.mxu0 0.0
        %v1532 = vand.u32 %v238, 4294901760
        %v1533 = vsub.f32 %v238, %v1532
        %1534 = vmatpush1.msra.mxu0 %v1533
        %1535 = vmatprep.subr.mxu0 0.0
        %v1536 = vand.u32 %v237, 4294901760
        %v1537 = vsub.f32 %v237, %v1536
        %1538 = vmatpush1.msra.mxu0 %v1537
        %1539 = vmatprep.subr.mxu0 0.0
        %v1540 = vand.u32 %v236, 4294901760
        %v1541 = vsub.f32 %v236, %v1540
        %1542 = vmatpush1.msra.mxu0 %v1541
        %1543 = vmatprep.subr.mxu0 0.0
        %v1544 = vand.u32 %v267, 4294901760
        %v1545 = vsub.f32 %v267, %v1544
        %1546 = vmatpush2.msra.mxu0 %v1545
        %1547 = vmatprep.subr.mxu0 0.0
        %v1548 = vand.u32 %v266, 4294901760
        %v1549 = vsub.f32 %v266, %v1548
        %1550 = vmatpush2.msra.mxu0 %v1549
        %1551 = vmatprep.subr.mxu0 0.0
        %v1552 = vand.u32 %v265, 4294901760
        %v1553 = vsub.f32 %v265, %v1552
        %1554 = vmatpush2.msra.mxu0 %v1553
        %1555 = vmatprep.subr.mxu0 0.0
        %v1556 = vand.u32 %v264, 4294901760
        %v1557 = vsub.f32 %v264, %v1556
        %1558 = vmatpush2.msra.mxu0 %v1557
        %1559 = vmatprep.subr.mxu0 0.0
        %v1560 = vand.u32 %v263, 4294901760
        %v1561 = vsub.f32 %v263, %v1560
        %1562 = vmatpush2.msra.mxu0 %v1561
        %1563 = vmatprep.subr.mxu0 0.0
        %v1564 = vand.u32 %v262, 4294901760
        %v1565 = vsub.f32 %v262, %v1564
        %1566 = vmatpush2.msra.mxu0 %v1565
        %1567 = vmatprep.subr.mxu0 0.0
        %v1568 = vand.u32 %v261, 4294901760
        %v1569 = vsub.f32 %v261, %v1568
        %1570 = vmatpush2.msra.mxu0 %v1569
        %1571 = vmatprep.subr.mxu0 0.0
        %v1572 = vand.u32 %v260, 4294901760
        %v1573 = vsub.f32 %v260, %v1572
        %1574 = vmatpush2.msra.mxu0 %v1573
        %1575 = vmatprep.subr.mxu0 0.0
        %v1576 = vand.u32 %v259, 4294901760
        %v1577 = vsub.f32 %v259, %v1576
        %1578 = vmatpush2.msra.mxu0 %v1577
        %1579 = vmatprep.subr.mxu0 0.0
        %v1580 = vand.u32 %v258, 4294901760
        %v1581 = vsub.f32 %v258, %v1580
        %1582 = vmatpush2.msra.mxu0 %v1581
        %1583 = vmatprep.subr.mxu0 0.0
        %v1584 = vand.u32 %v257, 4294901760
        %v1585 = vsub.f32 %v257, %v1584
        %1586 = vmatpush2.msra.mxu0 %v1585
        %1587 = vmatprep.subr.mxu0 0.0
        %v1588 = vand.u32 %v256, 4294901760
        %v1589 = vsub.f32 %v256, %v1588
        %1590 = vmatpush2.msra.mxu0 %v1589
        %1591 = vmatprep.subr.mxu0 0.0
        %v1592 = vand.u32 %v255, 4294901760
        %v1593 = vsub.f32 %v255, %v1592
        %1594 = vmatpush2.msra.mxu0 %v1593
        %1595 = vmatprep.subr.mxu0 0.0
        %v1596 = vand.u32 %v254, 4294901760
        %v1597 = vsub.f32 %v254, %v1596
        %1598 = vmatpush2.msra.mxu0 %v1597
        %1599 = vmatprep.subr.mxu0 0.0
        %v1600 = vand.u32 %v253, 4294901760
        %v1601 = vsub.f32 %v253, %v1600
        %1602 = vmatpush2.msra.mxu0 %v1601
        %1603 = vmatprep.subr.mxu0 0.0
        %v1604 = vand.u32 %v252, 4294901760
        %v1605 = vsub.f32 %v252, %v1604
        %1606 = vmatpush2.msra.mxu0 %v1605
        %v1607 = vand.u32 %v1134, 4294901760
        %v1608 = vsub.f32 %v1134, %v1607
        %1609 = vmatprep.mubr.f32.mxu0 %v1608
        %v1610 = vand.u32 %v1133, 4294901760
        %v1611 = vsub.f32 %v1133, %v1610
        %1612 = vmatmul.mubr.f32.gmra.mxu0 %v1611
        %v1613 = vpop.f32.mrf.mxu0
        %v1614 = vadd.f32 %v1476, %v1613
        %v1615 = vpop.f32.mrf.mxu0
        %1616 = vdwg.mxu0
        %1617 = vmatprep.subr.mxu0 0.0
        %v1618 = vand.u32 %v251, 4294901760
        %1619 = vmatpush1.msra.mxu0 %v1618
        %1620 = vmatprep.subr.mxu0 0.0
        %v1621 = vand.u32 %v250, 4294901760
        %1622 = vmatpush1.msra.mxu0 %v1621
        %1623 = vmatprep.subr.mxu0 0.0
        %v1624 = vand.u32 %v249, 4294901760
        %1625 = vmatpush1.msra.mxu0 %v1624
        %1626 = vmatprep.subr.mxu0 0.0
        %v1627 = vand.u32 %v248, 4294901760
        %1628 = vmatpush1.msra.mxu0 %v1627
        %1629 = vmatprep.subr.mxu0 0.0
        %v1630 = vand.u32 %v247, 4294901760
        %1631 = vmatpush1.msra.mxu0 %v1630
        %1632 = vmatprep.subr.mxu0 0.0
        %v1633 = vand.u32 %v246, 4294901760
        %1634 = vmatpush1.msra.mxu0 %v1633
        %1635 = vmatprep.subr.mxu0 0.0
        %v1636 = vand.u32 %v245, 4294901760
        %1637 = vmatpush1.msra.mxu0 %v1636
        %1638 = vmatprep.subr.mxu0 0.0
        %v1639 = vand.u32 %v244, 4294901760
        %1640 = vmatpush1.msra.mxu0 %v1639
        %1641 = vmatprep.subr.mxu0 0.0
        %v1642 = vand.u32 %v243, 4294901760
        %1643 = vmatpush1.msra.mxu0 %v1642
        %1644 = vmatprep.subr.mxu0 0.0
        %v1645 = vand.u32 %v242, 4294901760
        %1646 = vmatpush1.msra.mxu0 %v1645
        %1647 = vmatprep.subr.mxu0 0.0
        %v1648 = vand.u32 %v241, 4294901760
        %1649 = vmatpush1.msra.mxu0 %v1648
        %1650 = vmatprep.subr.mxu0 0.0
        %v1651 = vand.u32 %v240, 4294901760
        %1652 = vmatpush1.msra.mxu0 %v1651
        %1653 = vmatprep.subr.mxu0 0.0
        %v1654 = vand.u32 %v239, 4294901760
        %1655 = vmatpush1.msra.mxu0 %v1654
        %1656 = vmatprep.subr.mxu0 0.0
        %v1657 = vand.u32 %v238, 4294901760
        %1658 = vmatpush1.msra.mxu0 %v1657
        %1659 = vmatprep.subr.mxu0 0.0
        %v1660 = vand.u32 %v237, 4294901760
        %1661 = vmatpush1.msra.mxu0 %v1660
        %1662 = vmatprep.subr.mxu0 0.0
        %v1663 = vand.u32 %v236, 4294901760
        %1664 = vmatpush1.msra.mxu0 %v1663
        %1665 = vmatprep.subr.mxu0 0.0
        %v1666 = vand.u32 %v267, 4294901760
        %1667 = vmatpush2.msra.mxu0 %v1666
        %1668 = vmatprep.subr.mxu0 0.0
        %v1669 = vand.u32 %v266, 4294901760
        %1670 = vmatpush2.msra.mxu0 %v1669
        %1671 = vmatprep.subr.mxu0 0.0
        %v1672 = vand.u32 %v265, 4294901760
        %1673 = vmatpush2.msra.mxu0 %v1672
        %1674 = vmatprep.subr.mxu0 0.0
        %v1675 = vand.u32 %v264, 4294901760
        %1676 = vmatpush2.msra.mxu0 %v1675
        %1677 = vmatprep.subr.mxu0 0.0
        %v1678 = vand.u32 %v263, 4294901760
        %1679 = vmatpush2.msra.mxu0 %v1678
        %1680 = vmatprep.subr.mxu0 0.0
        %v1681 = vand.u32 %v262, 4294901760
        %1682 = vmatpush2.msra.mxu0 %v1681
        %1683 = vmatprep.subr.mxu0 0.0
        %v1684 = vand.u32 %v261, 4294901760
        %1685 = vmatpush2.msra.mxu0 %v1684
        %1686 = vmatprep.subr.mxu0 0.0
        %v1687 = vand.u32 %v260, 4294901760
        %1688 = vmatpush2.msra.mxu0 %v1687
        %1689 = vmatprep.subr.mxu0 0.0
        %v1690 = vand.u32 %v259, 4294901760
        %1691 = vmatpush2.msra.mxu0 %v1690
        %1692 = vmatprep.subr.mxu0 0.0
        %v1693 = vand.u32 %v258, 4294901760
        %1694 = vmatpush2.msra.mxu0 %v1693
        %1695 = vmatprep.subr.mxu0 0.0
        %v1696 = vand.u32 %v257, 4294901760
        %1697 = vmatpush2.msra.mxu0 %v1696
        %1698 = vmatprep.subr.mxu0 0.0
        %v1699 = vand.u32 %v256, 4294901760
        %1700 = vmatpush2.msra.mxu0 %v1699
        %1701 = vmatprep.subr.mxu0 0.0
        %v1702 = vand.u32 %v255, 4294901760
        %1703 = vmatpush2.msra.mxu0 %v1702
        %1704 = vmatprep.subr.mxu0 0.0
        %v1705 = vand.u32 %v254, 4294901760
        %1706 = vmatpush2.msra.mxu0 %v1705
        %1707 = vmatprep.subr.mxu0 0.0
        %v1708 = vand.u32 %v253, 4294901760
        %1709 = vmatpush2.msra.mxu0 %v1708
        %1710 = vmatprep.subr.mxu0 0.0
        %v1711 = vand.u32 %v252, 4294901760
        %1712 = vmatpush2.msra.mxu0 %v1711
        %v1713 = vand.u32 %v1134, 4294901760
        %v1714 = vsub.f32 %v1134, %v1713
        %v1715 = vand.u32 %v1714, 4294901760
        %1716 = vmatprep.mubr.f32.mxu0 %v1715
        %v1717 = vand.u32 %v1133, 4294901760
        %v1718 = vsub.f32 %v1133, %v1717
        %v1719 = vand.u32 %v1718, 4294901760
        %1720 = vmatmul.mubr.f32.gmra.mxu0 %v1719
        %v1721 = vpop.f32.mrf.mxu0
        %v1722 = vadd.f32 %v1614, %v1721
        %v1723 = vpop.f32.mrf.mxu0
        %1724 = vdwg.mxu0
        %1725 = vmatprep.subr.mxu0 0.0
        %v1726 = vand.u32 %v251, 4294901760
        %v1727 = vsub.f32 %v251, %v1726
        %v1728 = vand.u32 %v1727, 4294901760
        %1729 = vmatpush1.msra.mxu0 %v1728
        %1730 = vmatprep.subr.mxu0 0.0
        %v1731 = vand.u32 %v250, 4294901760
        %v1732 = vsub.f32 %v250, %v1731
        %v1733 = vand.u32 %v1732, 4294901760
        %1734 = vmatpush1.msra.mxu0 %v1733
        %1735 = vmatprep.subr.mxu0 0.0
        %v1736 = vand.u32 %v249, 4294901760
        %v1737 = vsub.f32 %v249, %v1736
        %v1738 = vand.u32 %v1737, 4294901760
        %1739 = vmatpush1.msra.mxu0 %v1738
        %1740 = vmatprep.subr.mxu0 0.0
        %v1741 = vand.u32 %v248, 4294901760
        %v1742 = vsub.f32 %v248, %v1741
        %v1743 = vand.u32 %v1742, 4294901760
        %1744 = vmatpush1.msra.mxu0 %v1743
        %1745 = vmatprep.subr.mxu0 0.0
        %v1746 = vand.u32 %v247, 4294901760
        %v1747 = vsub.f32 %v247, %v1746
        %v1748 = vand.u32 %v1747, 4294901760
        %1749 = vmatpush1.msra.mxu0 %v1748
        %1750 = vmatprep.subr.mxu0 0.0
        %v1751 = vand.u32 %v246, 4294901760
        %v1752 = vsub.f32 %v246, %v1751
        %v1753 = vand.u32 %v1752, 4294901760
        %1754 = vmatpush1.msra.mxu0 %v1753
        %1755 = vmatprep.subr.mxu0 0.0
        %v1756 = vand.u32 %v245, 4294901760
        %v1757 = vsub.f32 %v245, %v1756
        %v1758 = vand.u32 %v1757, 4294901760
        %1759 = vmatpush1.msra.mxu0 %v1758
        %1760 = vmatprep.subr.mxu0 0.0
        %v1761 = vand.u32 %v244, 4294901760
        %v1762 = vsub.f32 %v244, %v1761
        %v1763 = vand.u32 %v1762, 4294901760
        %1764 = vmatpush1.msra.mxu0 %v1763
        %1765 = vmatprep.subr.mxu0 0.0
        %v1766 = vand.u32 %v243, 4294901760
        %v1767 = vsub.f32 %v243, %v1766
        %v1768 = vand.u32 %v1767, 4294901760
        %1769 = vmatpush1.msra.mxu0 %v1768
        %1770 = vmatprep.subr.mxu0 0.0
        %v1771 = vand.u32 %v242, 4294901760
        %v1772 = vsub.f32 %v242, %v1771
        %v1773 = vand.u32 %v1772, 4294901760
        %1774 = vmatpush1.msra.mxu0 %v1773
        %1775 = vmatprep.subr.mxu0 0.0
        %v1776 = vand.u32 %v241, 4294901760
        %v1777 = vsub.f32 %v241, %v1776
        %v1778 = vand.u32 %v1777, 4294901760
        %1779 = vmatpush1.msra.mxu0 %v1778
        %1780 = vmatprep.subr.mxu0 0.0
        %v1781 = vand.u32 %v240, 4294901760
        %v1782 = vsub.f32 %v240, %v1781
        %v1783 = vand.u32 %v1782, 4294901760
        %1784 = vmatpush1.msra.mxu0 %v1783
        %1785 = vmatprep.subr.mxu0 0.0
        %v1786 = vand.u32 %v239, 4294901760
        %v1787 = vsub.f32 %v239, %v1786
        %v1788 = vand.u32 %v1787, 4294901760
        %1789 = vmatpush1.msra.mxu0 %v1788
        %1790 = vmatprep.subr.mxu0 0.0
        %v1791 = vand.u32 %v238, 4294901760
        %v1792 = vsub.f32 %v238, %v1791
        %v1793 = vand.u32 %v1792, 4294901760
        %1794 = vmatpush1.msra.mxu0 %v1793
        %1795 = vmatprep.subr.mxu0 0.0
        %v1796 = vand.u32 %v237, 4294901760
        %v1797 = vsub.f32 %v237, %v1796
        %v1798 = vand.u32 %v1797, 4294901760
        %1799 = vmatpush1.msra.mxu0 %v1798
        %1800 = vmatprep.subr.mxu0 0.0
        %v1801 = vand.u32 %v236, 4294901760
        %v1802 = vsub.f32 %v236, %v1801
        %v1803 = vand.u32 %v1802, 4294901760
        %1804 = vmatpush1.msra.mxu0 %v1803
        %1805 = vmatprep.subr.mxu0 0.0
        %v1806 = vand.u32 %v267, 4294901760
        %v1807 = vsub.f32 %v267, %v1806
        %v1808 = vand.u32 %v1807, 4294901760
        %1809 = vmatpush2.msra.mxu0 %v1808
        %1810 = vmatprep.subr.mxu0 0.0
        %v1811 = vand.u32 %v266, 4294901760
        %v1812 = vsub.f32 %v266, %v1811
        %v1813 = vand.u32 %v1812, 4294901760
        %1814 = vmatpush2.msra.mxu0 %v1813
        %1815 = vmatprep.subr.mxu0 0.0
        %v1816 = vand.u32 %v265, 4294901760
        %v1817 = vsub.f32 %v265, %v1816
        %v1818 = vand.u32 %v1817, 4294901760
        %1819 = vmatpush2.msra.mxu0 %v1818
        %1820 = vmatprep.subr.mxu0 0.0
        %v1821 = vand.u32 %v264, 4294901760
        %v1822 = vsub.f32 %v264, %v1821
        %v1823 = vand.u32 %v1822, 4294901760
        %1824 = vmatpush2.msra.mxu0 %v1823
        %1825 = vmatprep.subr.mxu0 0.0
        %v1826 = vand.u32 %v263, 4294901760
        %v1827 = vsub.f32 %v263, %v1826
        %v1828 = vand.u32 %v1827, 4294901760
        %1829 = vmatpush2.msra.mxu0 %v1828
        %1830 = vmatprep.subr.mxu0 0.0
        %v1831 = vand.u32 %v262, 4294901760
        %v1832 = vsub.f32 %v262, %v1831
        %v1833 = vand.u32 %v1832, 4294901760
        %1834 = vmatpush2.msra.mxu0 %v1833
        %1835 = vmatprep.subr.mxu0 0.0
        %v1836 = vand.u32 %v261, 4294901760
        %v1837 = vsub.f32 %v261, %v1836
        %v1838 = vand.u32 %v1837, 4294901760
        %1839 = vmatpush2.msra.mxu0 %v1838
        %1840 = vmatprep.subr.mxu0 0.0
        %v1841 = vand.u32 %v260, 4294901760
        %v1842 = vsub.f32 %v260, %v1841
        %v1843 = vand.u32 %v1842, 4294901760
        %1844 = vmatpush2.msra.mxu0 %v1843
        %1845 = vmatprep.subr.mxu0 0.0
        %v1846 = vand.u32 %v259, 4294901760
        %v1847 = vsub.f32 %v259, %v1846
        %v1848 = vand.u32 %v1847, 4294901760
        %1849 = vmatpush2.msra.mxu0 %v1848
        %1850 = vmatprep.subr.mxu0 0.0
        %v1851 = vand.u32 %v258, 4294901760
        %v1852 = vsub.f32 %v258, %v1851
        %v1853 = vand.u32 %v1852, 4294901760
        %1854 = vmatpush2.msra.mxu0 %v1853
        %1855 = vmatprep.subr.mxu0 0.0
        %v1856 = vand.u32 %v257, 4294901760
        %v1857 = vsub.f32 %v257, %v1856
        %v1858 = vand.u32 %v1857, 4294901760
        %1859 = vmatpush2.msra.mxu0 %v1858
        %1860 = vmatprep.subr.mxu0 0.0
        %v1861 = vand.u32 %v256, 4294901760
        %v1862 = vsub.f32 %v256, %v1861
        %v1863 = vand.u32 %v1862, 4294901760
        %1864 = vmatpush2.msra.mxu0 %v1863
        %1865 = vmatprep.subr.mxu0 0.0
        %v1866 = vand.u32 %v255, 4294901760
        %v1867 = vsub.f32 %v255, %v1866
        %v1868 = vand.u32 %v1867, 4294901760
        %1869 = vmatpush2.msra.mxu0 %v1868
        %1870 = vmatprep.subr.mxu0 0.0
        %v1871 = vand.u32 %v254, 4294901760
        %v1872 = vsub.f32 %v254, %v1871
        %v1873 = vand.u32 %v1872, 4294901760
        %1874 = vmatpush2.msra.mxu0 %v1873
        %1875 = vmatprep.subr.mxu0 0.0
        %v1876 = vand.u32 %v253, 4294901760
        %v1877 = vsub.f32 %v253, %v1876
        %v1878 = vand.u32 %v1877, 4294901760
        %1879 = vmatpush2.msra.mxu0 %v1878
        %1880 = vmatprep.subr.mxu0 0.0
        %v1881 = vand.u32 %v252, 4294901760
        %v1882 = vsub.f32 %v252, %v1881
        %v1883 = vand.u32 %v1882, 4294901760
        %1884 = vmatpush2.msra.mxu0 %v1883
        %v1885 = vand.u32 %v1134, 4294901760
        %1886 = vmatprep.mubr.f32.mxu0 %v1885
        %v1887 = vand.u32 %v1133, 4294901760
        %1888 = vmatmul.mubr.f32.gmra.mxu0 %v1887
        %v1889 = vpop.f32.mrf.mxu0
        %v1890 = vadd.f32 %v1722, %v1889
        %v1891 = vpop.f32.mrf.mxu0
        %1892 = vdwg.mxu0
        %1893 = vmatprep.subr.mxu0 0.0
        %v1894 = vand.u32 %v251, 4294901760
        %1895 = vmatpush1.msra.mxu0 %v1894
        %1896 = vmatprep.subr.mxu0 0.0
        %v1897 = vand.u32 %v250, 4294901760
        %1898 = vmatpush1.msra.mxu0 %v1897
        %1899 = vmatprep.subr.mxu0 0.0
        %v1900 = vand.u32 %v249, 4294901760
        %1901 = vmatpush1.msra.mxu0 %v1900
        %1902 = vmatprep.subr.mxu0 0.0
        %v1903 = vand.u32 %v248, 4294901760
        %1904 = vmatpush1.msra.mxu0 %v1903
        %1905 = vmatprep.subr.mxu0 0.0
        %v1906 = vand.u32 %v247, 4294901760
        %1907 = vmatpush1.msra.mxu0 %v1906
        %1908 = vmatprep.subr.mxu0 0.0
        %v1909 = vand.u32 %v246, 4294901760
        %1910 = vmatpush1.msra.mxu0 %v1909
        %1911 = vmatprep.subr.mxu0 0.0
        %v1912 = vand.u32 %v245, 4294901760
        %1913 = vmatpush1.msra.mxu0 %v1912
        %1914 = vmatprep.subr.mxu0 0.0
        %v1915 = vand.u32 %v244, 4294901760
        %1916 = vmatpush1.msra.mxu0 %v1915
        %1917 = vmatprep.subr.mxu0 0.0
        %v1918 = vand.u32 %v243, 4294901760
        %1919 = vmatpush1.msra.mxu0 %v1918
        %1920 = vmatprep.subr.mxu0 0.0
        %v1921 = vand.u32 %v242, 4294901760
        %1922 = vmatpush1.msra.mxu0 %v1921
        %1923 = vmatprep.subr.mxu0 0.0
        %v1924 = vand.u32 %v241, 4294901760
        %1925 = vmatpush1.msra.mxu0 %v1924
        %1926 = vmatprep.subr.mxu0 0.0
        %v1927 = vand.u32 %v240, 4294901760
        %1928 = vmatpush1.msra.mxu0 %v1927
        %1929 = vmatprep.subr.mxu0 0.0
        %v1930 = vand.u32 %v239, 4294901760
        %1931 = vmatpush1.msra.mxu0 %v1930
        %1932 = vmatprep.subr.mxu0 0.0
        %v1933 = vand.u32 %v238, 4294901760
        %1934 = vmatpush1.msra.mxu0 %v1933
        %1935 = vmatprep.subr.mxu0 0.0
        %v1936 = vand.u32 %v237, 4294901760
        %1937 = vmatpush1.msra.mxu0 %v1936
        %1938 = vmatprep.subr.mxu0 0.0
        %v1939 = vand.u32 %v236, 4294901760
        %1940 = vmatpush1.msra.mxu0 %v1939
        %1941 = vmatprep.subr.mxu0 0.0
        %v1942 = vand.u32 %v267, 4294901760
        %1943 = vmatpush2.msra.mxu0 %v1942
        %1944 = vmatprep.subr.mxu0 0.0
        %v1945 = vand.u32 %v266, 4294901760
        %1946 = vmatpush2.msra.mxu0 %v1945
        %1947 = vmatprep.subr.mxu0 0.0
        %v1948 = vand.u32 %v265, 4294901760
        %1949 = vmatpush2.msra.mxu0 %v1948
        %1950 = vmatprep.subr.mxu0 0.0
        %v1951 = vand.u32 %v264, 4294901760
        %1952 = vmatpush2.msra.mxu0 %v1951
        %1953 = vmatprep.subr.mxu0 0.0
        %v1954 = vand.u32 %v263, 4294901760
        %1955 = vmatpush2.msra.mxu0 %v1954
        %1956 = vmatprep.subr.mxu0 0.0
        %v1957 = vand.u32 %v262, 4294901760
        %1958 = vmatpush2.msra.mxu0 %v1957
        %1959 = vmatprep.subr.mxu0 0.0
        %v1960 = vand.u32 %v261, 4294901760
        %1961 = vmatpush2.msra.mxu0 %v1960
        %1962 = vmatprep.subr.mxu0 0.0
        %v1963 = vand.u32 %v260, 4294901760
        %1964 = vmatpush2.msra.mxu0 %v1963
        %1965 = vmatprep.subr.mxu0 0.0
        %v1966 = vand.u32 %v259, 4294901760
        %1967 = vmatpush2.msra.mxu0 %v1966
        %1968 = vmatprep.subr.mxu0 0.0
        %v1969 = vand.u32 %v258, 4294901760
        %1970 = vmatpush2.msra.mxu0 %v1969
        %1971 = vmatprep.subr.mxu0 0.0
        %v1972 = vand.u32 %v257, 4294901760
        %1973 = vmatpush2.msra.mxu0 %v1972
        %1974 = vmatprep.subr.mxu0 0.0
        %v1975 = vand.u32 %v256, 4294901760
        %1976 = vmatpush2.msra.mxu0 %v1975
        %1977 = vmatprep.subr.mxu0 0.0
        %v1978 = vand.u32 %v255, 4294901760
        %1979 = vmatpush2.msra.mxu0 %v1978
        %1980 = vmatprep.subr.mxu0 0.0
        %v1981 = vand.u32 %v254, 4294901760
        %1982 = vmatpush2.msra.mxu0 %v1981
        %1983 = vmatprep.subr.mxu0 0.0
        %v1984 = vand.u32 %v253, 4294901760
        %1985 = vmatpush2.msra.mxu0 %v1984
        %1986 = vmatprep.subr.mxu0 0.0
        %v1987 = vand.u32 %v252, 4294901760
        %1988 = vmatpush2.msra.mxu0 %v1987
        %v1989 = vand.u32 %v1134, 4294901760
        %1990 = vmatprep.mubr.f32.mxu0 %v1989
        %v1991 = vand.u32 %v1133, 4294901760
        %1992 = vmatmul.mubr.f32.gmra.mxu0 %v1991
        %v1993 = vpop.f32.mrf.mxu0
        %v1994 = vadd.f32 %v1890, %v1993
        %v1995 = vpop.f32.mrf.mxu0
        %1996 = vdwg.mxu0
        %s1997 = scalar_lea.vmem %s204, 32 [#allocation2]
        %v1998 = vld [vmem:[%s1997] sm:$0xff]
        %v1999 = vld [vmem:[%s1997 + $0x8] sm:$0xff]
        %2000 = vmatprep.subr.mxu0 0.0
        %v2001 = vand.u32 %v251, 4294901760
        %2002 = vmatpush1.msra.mxu0 %v2001
        %2003 = vmatprep.subr.mxu0 0.0
        %v2004 = vand.u32 %v250, 4294901760
        %2005 = vmatpush1.msra.mxu0 %v2004
        %2006 = vmatprep.subr.mxu0 0.0
        %v2007 = vand.u32 %v249, 4294901760
        %2008 = vmatpush1.msra.mxu0 %v2007
        %2009 = vmatprep.subr.mxu0 0.0
        %v2010 = vand.u32 %v248, 4294901760
        %2011 = vmatpush1.msra.mxu0 %v2010
        %2012 = vmatprep.subr.mxu0 0.0
        %v2013 = vand.u32 %v247, 4294901760
        %2014 = vmatpush1.msra.mxu0 %v2013
        %2015 = vmatprep.subr.mxu0 0.0
        %v2016 = vand.u32 %v246, 4294901760
        %2017 = vmatpush1.msra.mxu0 %v2016
        %2018 = vmatprep.subr.mxu0 0.0
        %v2019 = vand.u32 %v245, 4294901760
        %2020 = vmatpush1.msra.mxu0 %v2019
        %2021 = vmatprep.subr.mxu0 0.0
        %v2022 = vand.u32 %v244, 4294901760
        %2023 = vmatpush1.msra.mxu0 %v2022
        %2024 = vmatprep.subr.mxu0 0.0
        %v2025 = vand.u32 %v243, 4294901760
        %2026 = vmatpush1.msra.mxu0 %v2025
        %2027 = vmatprep.subr.mxu0 0.0
        %v2028 = vand.u32 %v242, 4294901760
        %2029 = vmatpush1.msra.mxu0 %v2028
        %2030 = vmatprep.subr.mxu0 0.0
        %v2031 = vand.u32 %v241, 4294901760
        %2032 = vmatpush1.msra.mxu0 %v2031
        %2033 = vmatprep.subr.mxu0 0.0
        %v2034 = vand.u32 %v240, 4294901760
        %2035 = vmatpush1.msra.mxu0 %v2034
        %2036 = vmatprep.subr.mxu0 0.0
        %v2037 = vand.u32 %v239, 4294901760
        %2038 = vmatpush1.msra.mxu0 %v2037
        %2039 = vmatprep.subr.mxu0 0.0
        %v2040 = vand.u32 %v238, 4294901760
        %2041 = vmatpush1.msra.mxu0 %v2040
        %2042 = vmatprep.subr.mxu0 0.0
        %v2043 = vand.u32 %v237, 4294901760
        %2044 = vmatpush1.msra.mxu0 %v2043
        %2045 = vmatprep.subr.mxu0 0.0
        %v2046 = vand.u32 %v236, 4294901760
        %2047 = vmatpush1.msra.mxu0 %v2046
        %2048 = vmatprep.subr.mxu0 0.0
        %v2049 = vand.u32 %v267, 4294901760
        %2050 = vmatpush2.msra.mxu0 %v2049
        %2051 = vmatprep.subr.mxu0 0.0
        %v2052 = vand.u32 %v266, 4294901760
        %2053 = vmatpush2.msra.mxu0 %v2052
        %2054 = vmatprep.subr.mxu0 0.0
        %v2055 = vand.u32 %v265, 4294901760
        %2056 = vmatpush2.msra.mxu0 %v2055
        %2057 = vmatprep.subr.mxu0 0.0
        %v2058 = vand.u32 %v264, 4294901760
        %2059 = vmatpush2.msra.mxu0 %v2058
        %2060 = vmatprep.subr.mxu0 0.0
        %v2061 = vand.u32 %v263, 4294901760
        %2062 = vmatpush2.msra.mxu0 %v2061
        %2063 = vmatprep.subr.mxu0 0.0
        %v2064 = vand.u32 %v262, 4294901760
        %2065 = vmatpush2.msra.mxu0 %v2064
        %2066 = vmatprep.subr.mxu0 0.0
        %v2067 = vand.u32 %v261, 4294901760
        %2068 = vmatpush2.msra.mxu0 %v2067
        %2069 = vmatprep.subr.mxu0 0.0
        %v2070 = vand.u32 %v260, 4294901760
        %2071 = vmatpush2.msra.mxu0 %v2070
        %2072 = vmatprep.subr.mxu0 0.0
        %v2073 = vand.u32 %v259, 4294901760
        %2074 = vmatpush2.msra.mxu0 %v2073
        %2075 = vmatprep.subr.mxu0 0.0
        %v2076 = vand.u32 %v258, 4294901760
        %2077 = vmatpush2.msra.mxu0 %v2076
        %2078 = vmatprep.subr.mxu0 0.0
        %v2079 = vand.u32 %v257, 4294901760
        %2080 = vmatpush2.msra.mxu0 %v2079
        %2081 = vmatprep.subr.mxu0 0.0
        %v2082 = vand.u32 %v256, 4294901760
        %2083 = vmatpush2.msra.mxu0 %v2082
        %2084 = vmatprep.subr.mxu0 0.0
        %v2085 = vand.u32 %v255, 4294901760
        %2086 = vmatpush2.msra.mxu0 %v2085
        %2087 = vmatprep.subr.mxu0 0.0
        %v2088 = vand.u32 %v254, 4294901760
        %2089 = vmatpush2.msra.mxu0 %v2088
        %2090 = vmatprep.subr.mxu0 0.0
        %v2091 = vand.u32 %v253, 4294901760
        %2092 = vmatpush2.msra.mxu0 %v2091
        %2093 = vmatprep.subr.mxu0 0.0
        %v2094 = vand.u32 %v252, 4294901760
        %2095 = vmatpush2.msra.mxu0 %v2094
        %v2096 = vand.u32 %v1999, 4294901760
        %v2097 = vsub.f32 %v1999, %v2096
        %v2098 = vand.u32 %v2097, 4294901760
        %v2099 = vsub.f32 %v2097, %v2098
        %v2100 = vand.u32 %v2099, 4294901760
        %2101 = vmatprep.mubr.f32.mxu0 %v2100
        %v2102 = vand.u32 %v1998, 4294901760
        %v2103 = vsub.f32 %v1998, %v2102
        %v2104 = vand.u32 %v2103, 4294901760
        %v2105 = vsub.f32 %v2103, %v2104
        %v2106 = vand.u32 %v2105, 4294901760
        %2107 = vmatmul.mubr.f32.gmra.mxu0 %v2106
        %v2108 = vpop.f32.mrf.mxu0
        %v2109 = vadd.f32 0.0, %v2108
        %v2110 = vpop.f32.mrf.mxu0
        %2111 = vdwg.mxu0
        %2112 = vmatprep.subr.mxu0 0.0
        %v2113 = vand.u32 %v251, 4294901760
        %v2114 = vsub.f32 %v251, %v2113
        %v2115 = vand.u32 %v2114, 4294901760
        %v2116 = vsub.f32 %v2114, %v2115
        %v2117 = vand.u32 %v2116, 4294901760
        %2118 = vmatpush1.msra.mxu0 %v2117
        %2119 = vmatprep.subr.mxu0 0.0
        %v2120 = vand.u32 %v250, 4294901760
        %v2121 = vsub.f32 %v250, %v2120
        %v2122 = vand.u32 %v2121, 4294901760
        %v2123 = vsub.f32 %v2121, %v2122
        %v2124 = vand.u32 %v2123, 4294901760
        %2125 = vmatpush1.msra.mxu0 %v2124
        %2126 = vmatprep.subr.mxu0 0.0
        %v2127 = vand.u32 %v249, 4294901760
        %v2128 = vsub.f32 %v249, %v2127
        %v2129 = vand.u32 %v2128, 4294901760
        %v2130 = vsub.f32 %v2128, %v2129
        %v2131 = vand.u32 %v2130, 4294901760
        %2132 = vmatpush1.msra.mxu0 %v2131
        %2133 = vmatprep.subr.mxu0 0.0
        %v2134 = vand.u32 %v248, 4294901760
        %v2135 = vsub.f32 %v248, %v2134
        %v2136 = vand.u32 %v2135, 4294901760
        %v2137 = vsub.f32 %v2135, %v2136
        %v2138 = vand.u32 %v2137, 4294901760
        %2139 = vmatpush1.msra.mxu0 %v2138
        %2140 = vmatprep.subr.mxu0 0.0
        %v2141 = vand.u32 %v247, 4294901760
        %v2142 = vsub.f32 %v247, %v2141
        %v2143 = vand.u32 %v2142, 4294901760
        %v2144 = vsub.f32 %v2142, %v2143
        %v2145 = vand.u32 %v2144, 4294901760
        %2146 = vmatpush1.msra.mxu0 %v2145
        %2147 = vmatprep.subr.mxu0 0.0
        %v2148 = vand.u32 %v246, 4294901760
        %v2149 = vsub.f32 %v246, %v2148
        %v2150 = vand.u32 %v2149, 4294901760
        %v2151 = vsub.f32 %v2149, %v2150
        %v2152 = vand.u32 %v2151, 4294901760
        %2153 = vmatpush1.msra.mxu0 %v2152
        %2154 = vmatprep.subr.mxu0 0.0
        %v2155 = vand.u32 %v245, 4294901760
        %v2156 = vsub.f32 %v245, %v2155
        %v2157 = vand.u32 %v2156, 4294901760
        %v2158 = vsub.f32 %v2156, %v2157
        %v2159 = vand.u32 %v2158, 4294901760
        %2160 = vmatpush1.msra.mxu0 %v2159
        %2161 = vmatprep.subr.mxu0 0.0
        %v2162 = vand.u32 %v244, 4294901760
        %v2163 = vsub.f32 %v244, %v2162
        %v2164 = vand.u32 %v2163, 4294901760
        %v2165 = vsub.f32 %v2163, %v2164
        %v2166 = vand.u32 %v2165, 4294901760
        %2167 = vmatpush1.msra.mxu0 %v2166
        %2168 = vmatprep.subr.mxu0 0.0
        %v2169 = vand.u32 %v243, 4294901760
        %v2170 = vsub.f32 %v243, %v2169
        %v2171 = vand.u32 %v2170, 4294901760
        %v2172 = vsub.f32 %v2170, %v2171
        %v2173 = vand.u32 %v2172, 4294901760
        %2174 = vmatpush1.msra.mxu0 %v2173
        %2175 = vmatprep.subr.mxu0 0.0
        %v2176 = vand.u32 %v242, 4294901760
        %v2177 = vsub.f32 %v242, %v2176
        %v2178 = vand.u32 %v2177, 4294901760
        %v2179 = vsub.f32 %v2177, %v2178
        %v2180 = vand.u32 %v2179, 4294901760
        %2181 = vmatpush1.msra.mxu0 %v2180
        %2182 = vmatprep.subr.mxu0 0.0
        %v2183 = vand.u32 %v241, 4294901760
        %v2184 = vsub.f32 %v241, %v2183
        %v2185 = vand.u32 %v2184, 4294901760
        %v2186 = vsub.f32 %v2184, %v2185
        %v2187 = vand.u32 %v2186, 4294901760
        %2188 = vmatpush1.msra.mxu0 %v2187
        %2189 = vmatprep.subr.mxu0 0.0
        %v2190 = vand.u32 %v240, 4294901760
        %v2191 = vsub.f32 %v240, %v2190
        %v2192 = vand.u32 %v2191, 4294901760
        %v2193 = vsub.f32 %v2191, %v2192
        %v2194 = vand.u32 %v2193, 4294901760
        %2195 = vmatpush1.msra.mxu0 %v2194
        %2196 = vmatprep.subr.mxu0 0.0
        %v2197 = vand.u32 %v239, 4294901760
        %v2198 = vsub.f32 %v239, %v2197
        %v2199 = vand.u32 %v2198, 4294901760
        %v2200 = vsub.f32 %v2198, %v2199
        %v2201 = vand.u32 %v2200, 4294901760
        %2202 = vmatpush1.msra.mxu0 %v2201
        %2203 = vmatprep.subr.mxu0 0.0
        %v2204 = vand.u32 %v238, 4294901760
        %v2205 = vsub.f32 %v238, %v2204
        %v2206 = vand.u32 %v2205, 4294901760
        %v2207 = vsub.f32 %v2205, %v2206
        %v2208 = vand.u32 %v2207, 4294901760
        %2209 = vmatpush1.msra.mxu0 %v2208
        %2210 = vmatprep.subr.mxu0 0.0
        %v2211 = vand.u32 %v237, 4294901760
        %v2212 = vsub.f32 %v237, %v2211
        %v2213 = vand.u32 %v2212, 4294901760
        %v2214 = vsub.f32 %v2212, %v2213
        %v2215 = vand.u32 %v2214, 4294901760
        %2216 = vmatpush1.msra.mxu0 %v2215
        %2217 = vmatprep.subr.mxu0 0.0
        %v2218 = vand.u32 %v236, 4294901760
        %v2219 = vsub.f32 %v236, %v2218
        %v2220 = vand.u32 %v2219, 4294901760
        %v2221 = vsub.f32 %v2219, %v2220
        %v2222 = vand.u32 %v2221, 4294901760
        %2223 = vmatpush1.msra.mxu0 %v2222
        %2224 = vmatprep.subr.mxu0 0.0
        %v2225 = vand.u32 %v267, 4294901760
        %v2226 = vsub.f32 %v267, %v2225
        %v2227 = vand.u32 %v2226, 4294901760
        %v2228 = vsub.f32 %v2226, %v2227
        %v2229 = vand.u32 %v2228, 4294901760
        %2230 = vmatpush2.msra.mxu0 %v2229
        %2231 = vmatprep.subr.mxu0 0.0
        %v2232 = vand.u32 %v266, 4294901760
        %v2233 = vsub.f32 %v266, %v2232
        %v2234 = vand.u32 %v2233, 4294901760
        %v2235 = vsub.f32 %v2233, %v2234
        %v2236 = vand.u32 %v2235, 4294901760
        %2237 = vmatpush2.msra.mxu0 %v2236
        %2238 = vmatprep.subr.mxu0 0.0
        %v2239 = vand.u32 %v265, 4294901760
        %v2240 = vsub.f32 %v265, %v2239
        %v2241 = vand.u32 %v2240, 4294901760
        %v2242 = vsub.f32 %v2240, %v2241
        %v2243 = vand.u32 %v2242, 4294901760
        %2244 = vmatpush2.msra.mxu0 %v2243
        %2245 = vmatprep.subr.mxu0 0.0
        %v2246 = vand.u32 %v264, 4294901760
        %v2247 = vsub.f32 %v264, %v2246
        %v2248 = vand.u32 %v2247, 4294901760
        %v2249 = vsub.f32 %v2247, %v2248
        %v2250 = vand.u32 %v2249, 4294901760
        %2251 = vmatpush2.msra.mxu0 %v2250
        %2252 = vmatprep.subr.mxu0 0.0
        %v2253 = vand.u32 %v263, 4294901760
        %v2254 = vsub.f32 %v263, %v2253
        %v2255 = vand.u32 %v2254, 4294901760
        %v2256 = vsub.f32 %v2254, %v2255
        %v2257 = vand.u32 %v2256, 4294901760
        %2258 = vmatpush2.msra.mxu0 %v2257
        %2259 = vmatprep.subr.mxu0 0.0
        %v2260 = vand.u32 %v262, 4294901760
        %v2261 = vsub.f32 %v262, %v2260
        %v2262 = vand.u32 %v2261, 4294901760
        %v2263 = vsub.f32 %v2261, %v2262
        %v2264 = vand.u32 %v2263, 4294901760
        %2265 = vmatpush2.msra.mxu0 %v2264
        %2266 = vmatprep.subr.mxu0 0.0
        %v2267 = vand.u32 %v261, 4294901760
        %v2268 = vsub.f32 %v261, %v2267
        %v2269 = vand.u32 %v2268, 4294901760
        %v2270 = vsub.f32 %v2268, %v2269
        %v2271 = vand.u32 %v2270, 4294901760
        %2272 = vmatpush2.msra.mxu0 %v2271
        %2273 = vmatprep.subr.mxu0 0.0
        %v2274 = vand.u32 %v260, 4294901760
        %v2275 = vsub.f32 %v260, %v2274
        %v2276 = vand.u32 %v2275, 4294901760
        %v2277 = vsub.f32 %v2275, %v2276
        %v2278 = vand.u32 %v2277, 4294901760
        %2279 = vmatpush2.msra.mxu0 %v2278
        %2280 = vmatprep.subr.mxu0 0.0
        %v2281 = vand.u32 %v259, 4294901760
        %v2282 = vsub.f32 %v259, %v2281
        %v2283 = vand.u32 %v2282, 4294901760
        %v2284 = vsub.f32 %v2282, %v2283
        %v2285 = vand.u32 %v2284, 4294901760
        %2286 = vmatpush2.msra.mxu0 %v2285
        %2287 = vmatprep.subr.mxu0 0.0
        %v2288 = vand.u32 %v258, 4294901760
        %v2289 = vsub.f32 %v258, %v2288
        %v2290 = vand.u32 %v2289, 4294901760
        %v2291 = vsub.f32 %v2289, %v2290
        %v2292 = vand.u32 %v2291, 4294901760
        %2293 = vmatpush2.msra.mxu0 %v2292
        %2294 = vmatprep.subr.mxu0 0.0
        %v2295 = vand.u32 %v257, 4294901760
        %v2296 = vsub.f32 %v257, %v2295
        %v2297 = vand.u32 %v2296, 4294901760
        %v2298 = vsub.f32 %v2296, %v2297
        %v2299 = vand.u32 %v2298, 4294901760
        %2300 = vmatpush2.msra.mxu0 %v2299
        %2301 = vmatprep.subr.mxu0 0.0
        %v2302 = vand.u32 %v256, 4294901760
        %v2303 = vsub.f32 %v256, %v2302
        %v2304 = vand.u32 %v2303, 4294901760
        %v2305 = vsub.f32 %v2303, %v2304
        %v2306 = vand.u32 %v2305, 4294901760
        %2307 = vmatpush2.msra.mxu0 %v2306
        %2308 = vmatprep.subr.mxu0 0.0
        %v2309 = vand.u32 %v255, 4294901760
        %v2310 = vsub.f32 %v255, %v2309
        %v2311 = vand.u32 %v2310, 4294901760
        %v2312 = vsub.f32 %v2310, %v2311
        %v2313 = vand.u32 %v2312, 4294901760
        %2314 = vmatpush2.msra.mxu0 %v2313
        %2315 = vmatprep.subr.mxu0 0.0
        %v2316 = vand.u32 %v254, 4294901760
        %v2317 = vsub.f32 %v254, %v2316
        %v2318 = vand.u32 %v2317, 4294901760
        %v2319 = vsub.f32 %v2317, %v2318
        %v2320 = vand.u32 %v2319, 4294901760
        %2321 = vmatpush2.msra.mxu0 %v2320
        %2322 = vmatprep.subr.mxu0 0.0
        %v2323 = vand.u32 %v253, 4294901760
        %v2324 = vsub.f32 %v253, %v2323
        %v2325 = vand.u32 %v2324, 4294901760
        %v2326 = vsub.f32 %v2324, %v2325
        %v2327 = vand.u32 %v2326, 4294901760
        %2328 = vmatpush2.msra.mxu0 %v2327
        %2329 = vmatprep.subr.mxu0 0.0
        %v2330 = vand.u32 %v252, 4294901760
        %v2331 = vsub.f32 %v252, %v2330
        %v2332 = vand.u32 %v2331, 4294901760
        %v2333 = vsub.f32 %v2331, %v2332
        %v2334 = vand.u32 %v2333, 4294901760
        %2335 = vmatpush2.msra.mxu0 %v2334
        %v2336 = vand.u32 %v1999, 4294901760
        %2337 = vmatprep.mubr.f32.mxu0 %v2336
        %v2338 = vand.u32 %v1998, 4294901760
        %2339 = vmatmul.mubr.f32.gmra.mxu0 %v2338
        %v2340 = vpop.f32.mrf.mxu0
        %v2341 = vadd.f32 %v2109, %v2340
        %v2342 = vpop.f32.mrf.mxu0
        %2343 = vdwg.mxu0
        %2344 = vmatprep.subr.mxu0 0.0
        %v2345 = vand.u32 %v251, 4294901760
        %v2346 = vsub.f32 %v251, %v2345
        %2347 = vmatpush1.msra.mxu0 %v2346
        %2348 = vmatprep.subr.mxu0 0.0
        %v2349 = vand.u32 %v250, 4294901760
        %v2350 = vsub.f32 %v250, %v2349
        %2351 = vmatpush1.msra.mxu0 %v2350
        %2352 = vmatprep.subr.mxu0 0.0
        %v2353 = vand.u32 %v249, 4294901760
        %v2354 = vsub.f32 %v249, %v2353
        %2355 = vmatpush1.msra.mxu0 %v2354
        %2356 = vmatprep.subr.mxu0 0.0
        %v2357 = vand.u32 %v248, 4294901760
        %v2358 = vsub.f32 %v248, %v2357
        %2359 = vmatpush1.msra.mxu0 %v2358
        %2360 = vmatprep.subr.mxu0 0.0
        %v2361 = vand.u32 %v247, 4294901760
        %v2362 = vsub.f32 %v247, %v2361
        %2363 = vmatpush1.msra.mxu0 %v2362
        %2364 = vmatprep.subr.mxu0 0.0
        %v2365 = vand.u32 %v246, 4294901760
        %v2366 = vsub.f32 %v246, %v2365
        %2367 = vmatpush1.msra.mxu0 %v2366
        %2368 = vmatprep.subr.mxu0 0.0
        %v2369 = vand.u32 %v245, 4294901760
        %v2370 = vsub.f32 %v245, %v2369
        %2371 = vmatpush1.msra.mxu0 %v2370
        %2372 = vmatprep.subr.mxu0 0.0
        %v2373 = vand.u32 %v244, 4294901760
        %v2374 = vsub.f32 %v244, %v2373
        %2375 = vmatpush1.msra.mxu0 %v2374
        %2376 = vmatprep.subr.mxu0 0.0
        %v2377 = vand.u32 %v243, 4294901760
        %v2378 = vsub.f32 %v243, %v2377
        %2379 = vmatpush1.msra.mxu0 %v2378
        %2380 = vmatprep.subr.mxu0 0.0
        %v2381 = vand.u32 %v242, 4294901760
        %v2382 = vsub.f32 %v242, %v2381
        %2383 = vmatpush1.msra.mxu0 %v2382
        %2384 = vmatprep.subr.mxu0 0.0
        %v2385 = vand.u32 %v241, 4294901760
        %v2386 = vsub.f32 %v241, %v2385
        %2387 = vmatpush1.msra.mxu0 %v2386
        %2388 = vmatprep.subr.mxu0 0.0
        %v2389 = vand.u32 %v240, 4294901760
        %v2390 = vsub.f32 %v240, %v2389
        %2391 = vmatpush1.msra.mxu0 %v2390
        %2392 = vmatprep.subr.mxu0 0.0
        %v2393 = vand.u32 %v239, 4294901760
        %v2394 = vsub.f32 %v239, %v2393
        %2395 = vmatpush1.msra.mxu0 %v2394
        %2396 = vmatprep.subr.mxu0 0.0
        %v2397 = vand.u32 %v238, 4294901760
        %v2398 = vsub.f32 %v238, %v2397
        %2399 = vmatpush1.msra.mxu0 %v2398
        %2400 = vmatprep.subr.mxu0 0.0
        %v2401 = vand.u32 %v237, 4294901760
        %v2402 = vsub.f32 %v237, %v2401
        %2403 = vmatpush1.msra.mxu0 %v2402
        %2404 = vmatprep.subr.mxu0 0.0
        %v2405 = vand.u32 %v236, 4294901760
        %v2406 = vsub.f32 %v236, %v2405
        %2407 = vmatpush1.msra.mxu0 %v2406
        %2408 = vmatprep.subr.mxu0 0.0
        %v2409 = vand.u32 %v267, 4294901760
        %v2410 = vsub.f32 %v267, %v2409
        %2411 = vmatpush2.msra.mxu0 %v2410
        %2412 = vmatprep.subr.mxu0 0.0
        %v2413 = vand.u32 %v266, 4294901760
        %v2414 = vsub.f32 %v266, %v2413
        %2415 = vmatpush2.msra.mxu0 %v2414
        %2416 = vmatprep.subr.mxu0 0.0
        %v2417 = vand.u32 %v265, 4294901760
        %v2418 = vsub.f32 %v265, %v2417
        %2419 = vmatpush2.msra.mxu0 %v2418
        %2420 = vmatprep.subr.mxu0 0.0
        %v2421 = vand.u32 %v264, 4294901760
        %v2422 = vsub.f32 %v264, %v2421
        %2423 = vmatpush2.msra.mxu0 %v2422
        %2424 = vmatprep.subr.mxu0 0.0
        %v2425 = vand.u32 %v263, 4294901760
        %v2426 = vsub.f32 %v263, %v2425
        %2427 = vmatpush2.msra.mxu0 %v2426
        %2428 = vmatprep.subr.mxu0 0.0
        %v2429 = vand.u32 %v262, 4294901760
        %v2430 = vsub.f32 %v262, %v2429
        %2431 = vmatpush2.msra.mxu0 %v2430
        %2432 = vmatprep.subr.mxu0 0.0
        %v2433 = vand.u32 %v261, 4294901760
        %v2434 = vsub.f32 %v261, %v2433
        %2435 = vmatpush2.msra.mxu0 %v2434
        %2436 = vmatprep.subr.mxu0 0.0
        %v2437 = vand.u32 %v260, 4294901760
        %v2438 = vsub.f32 %v260, %v2437
        %2439 = vmatpush2.msra.mxu0 %v2438
        %2440 = vmatprep.subr.mxu0 0.0
        %v2441 = vand.u32 %v259, 4294901760
        %v2442 = vsub.f32 %v259, %v2441
        %2443 = vmatpush2.msra.mxu0 %v2442
        %2444 = vmatprep.subr.mxu0 0.0
        %v2445 = vand.u32 %v258, 4294901760
        %v2446 = vsub.f32 %v258, %v2445
        %2447 = vmatpush2.msra.mxu0 %v2446
        %2448 = vmatprep.subr.mxu0 0.0
        %v2449 = vand.u32 %v257, 4294901760
        %v2450 = vsub.f32 %v257, %v2449
        %2451 = vmatpush2.msra.mxu0 %v2450
        %2452 = vmatprep.subr.mxu0 0.0
        %v2453 = vand.u32 %v256, 4294901760
        %v2454 = vsub.f32 %v256, %v2453
        %2455 = vmatpush2.msra.mxu0 %v2454
        %2456 = vmatprep.subr.mxu0 0.0
        %v2457 = vand.u32 %v255, 4294901760
        %v2458 = vsub.f32 %v255, %v2457
        %2459 = vmatpush2.msra.mxu0 %v2458
        %2460 = vmatprep.subr.mxu0 0.0
        %v2461 = vand.u32 %v254, 4294901760
        %v2462 = vsub.f32 %v254, %v2461
        %2463 = vmatpush2.msra.mxu0 %v2462
        %2464 = vmatprep.subr.mxu0 0.0
        %v2465 = vand.u32 %v253, 4294901760
        %v2466 = vsub.f32 %v253, %v2465
        %2467 = vmatpush2.msra.mxu0 %v2466
        %2468 = vmatprep.subr.mxu0 0.0
        %v2469 = vand.u32 %v252, 4294901760
        %v2470 = vsub.f32 %v252, %v2469
        %2471 = vmatpush2.msra.mxu0 %v2470
        %v2472 = vand.u32 %v1999, 4294901760
        %v2473 = vsub.f32 %v1999, %v2472
        %2474 = vmatprep.mubr.f32.mxu0 %v2473
        %v2475 = vand.u32 %v1998, 4294901760
        %v2476 = vsub.f32 %v1998, %v2475
        %2477 = vmatmul.mubr.f32.gmra.mxu0 %v2476
        %v2478 = vpop.f32.mrf.mxu0
        %v2479 = vadd.f32 %v2341, %v2478
        %v2480 = vpop.f32.mrf.mxu0
        %2481 = vdwg.mxu0
        %2482 = vmatprep.subr.mxu0 0.0
        %v2483 = vand.u32 %v251, 4294901760
        %2484 = vmatpush1.msra.mxu0 %v2483
        %2485 = vmatprep.subr.mxu0 0.0
        %v2486 = vand.u32 %v250, 4294901760
        %2487 = vmatpush1.msra.mxu0 %v2486
        %2488 = vmatprep.subr.mxu0 0.0
        %v2489 = vand.u32 %v249, 4294901760
        %2490 = vmatpush1.msra.mxu0 %v2489
        %2491 = vmatprep.subr.mxu0 0.0
        %v2492 = vand.u32 %v248, 4294901760
        %2493 = vmatpush1.msra.mxu0 %v2492
        %2494 = vmatprep.subr.mxu0 0.0
        %v2495 = vand.u32 %v247, 4294901760
        %2496 = vmatpush1.msra.mxu0 %v2495
        %2497 = vmatprep.subr.mxu0 0.0
        %v2498 = vand.u32 %v246, 4294901760
        %2499 = vmatpush1.msra.mxu0 %v2498
        %2500 = vmatprep.subr.mxu0 0.0
        %v2501 = vand.u32 %v245, 4294901760
        %2502 = vmatpush1.msra.mxu0 %v2501
        %2503 = vmatprep.subr.mxu0 0.0
        %v2504 = vand.u32 %v244, 4294901760
        %2505 = vmatpush1.msra.mxu0 %v2504
        %2506 = vmatprep.subr.mxu0 0.0
        %v2507 = vand.u32 %v243, 4294901760
        %2508 = vmatpush1.msra.mxu0 %v2507
        %2509 = vmatprep.subr.mxu0 0.0
        %v2510 = vand.u32 %v242, 4294901760
        %2511 = vmatpush1.msra.mxu0 %v2510
        %2512 = vmatprep.subr.mxu0 0.0
        %v2513 = vand.u32 %v241, 4294901760
        %2514 = vmatpush1.msra.mxu0 %v2513
        %2515 = vmatprep.subr.mxu0 0.0
        %v2516 = vand.u32 %v240, 4294901760
        %2517 = vmatpush1.msra.mxu0 %v2516
        %2518 = vmatprep.subr.mxu0 0.0
        %v2519 = vand.u32 %v239, 4294901760
        %2520 = vmatpush1.msra.mxu0 %v2519
        %2521 = vmatprep.subr.mxu0 0.0
        %v2522 = vand.u32 %v238, 4294901760
        %2523 = vmatpush1.msra.mxu0 %v2522
        %2524 = vmatprep.subr.mxu0 0.0
        %v2525 = vand.u32 %v237, 4294901760
        %2526 = vmatpush1.msra.mxu0 %v2525
        %2527 = vmatprep.subr.mxu0 0.0
        %v2528 = vand.u32 %v236, 4294901760
        %2529 = vmatpush1.msra.mxu0 %v2528
        %2530 = vmatprep.subr.mxu0 0.0
        %v2531 = vand.u32 %v267, 4294901760
        %2532 = vmatpush2.msra.mxu0 %v2531
        %2533 = vmatprep.subr.mxu0 0.0
        %v2534 = vand.u32 %v266, 4294901760
        %2535 = vmatpush2.msra.mxu0 %v2534
        %2536 = vmatprep.subr.mxu0 0.0
        %v2537 = vand.u32 %v265, 4294901760
        %2538 = vmatpush2.msra.mxu0 %v2537
        %2539 = vmatprep.subr.mxu0 0.0
        %v2540 = vand.u32 %v264, 4294901760
        %2541 = vmatpush2.msra.mxu0 %v2540
        %2542 = vmatprep.subr.mxu0 0.0
        %v2543 = vand.u32 %v263, 4294901760
        %2544 = vmatpush2.msra.mxu0 %v2543
        %2545 = vmatprep.subr.mxu0 0.0
        %v2546 = vand.u32 %v262, 4294901760
        %2547 = vmatpush2.msra.mxu0 %v2546
        %2548 = vmatprep.subr.mxu0 0.0
        %v2549 = vand.u32 %v261, 4294901760
        %2550 = vmatpush2.msra.mxu0 %v2549
        %2551 = vmatprep.subr.mxu0 0.0
        %v2552 = vand.u32 %v260, 4294901760
        %2553 = vmatpush2.msra.mxu0 %v2552
        %2554 = vmatprep.subr.mxu0 0.0
        %v2555 = vand.u32 %v259, 4294901760
        %2556 = vmatpush2.msra.mxu0 %v2555
        %2557 = vmatprep.subr.mxu0 0.0
        %v2558 = vand.u32 %v258, 4294901760
        %2559 = vmatpush2.msra.mxu0 %v2558
        %2560 = vmatprep.subr.mxu0 0.0
        %v2561 = vand.u32 %v257, 4294901760
        %2562 = vmatpush2.msra.mxu0 %v2561
        %2563 = vmatprep.subr.mxu0 0.0
        %v2564 = vand.u32 %v256, 4294901760
        %2565 = vmatpush2.msra.mxu0 %v2564
        %2566 = vmatprep.subr.mxu0 0.0
        %v2567 = vand.u32 %v255, 4294901760
        %2568 = vmatpush2.msra.mxu0 %v2567
        %2569 = vmatprep.subr.mxu0 0.0
        %v2570 = vand.u32 %v254, 4294901760
        %2571 = vmatpush2.msra.mxu0 %v2570
        %2572 = vmatprep.subr.mxu0 0.0
        %v2573 = vand.u32 %v253, 4294901760
        %2574 = vmatpush2.msra.mxu0 %v2573
        %2575 = vmatprep.subr.mxu0 0.0
        %v2576 = vand.u32 %v252, 4294901760
        %2577 = vmatpush2.msra.mxu0 %v2576
        %v2578 = vand.u32 %v1999, 4294901760
        %v2579 = vsub.f32 %v1999, %v2578
        %v2580 = vand.u32 %v2579, 4294901760
        %2581 = vmatprep.mubr.f32.mxu0 %v2580
        %v2582 = vand.u32 %v1998, 4294901760
        %v2583 = vsub.f32 %v1998, %v2582
        %v2584 = vand.u32 %v2583, 4294901760
        %2585 = vmatmul.mubr.f32.gmra.mxu0 %v2584
        %v2586 = vpop.f32.mrf.mxu0
        %v2587 = vadd.f32 %v2479, %v2586
        %v2588 = vpop.f32.mrf.mxu0
        %2589 = vdwg.mxu0
        %2590 = vmatprep.subr.mxu0 0.0
        %v2591 = vand.u32 %v251, 4294901760
        %v2592 = vsub.f32 %v251, %v2591
        %v2593 = vand.u32 %v2592, 4294901760
        %2594 = vmatpush1.msra.mxu0 %v2593
        %2595 = vmatprep.subr.mxu0 0.0
        %v2596 = vand.u32 %v250, 4294901760
        %v2597 = vsub.f32 %v250, %v2596
        %v2598 = vand.u32 %v2597, 4294901760
        %2599 = vmatpush1.msra.mxu0 %v2598
        %2600 = vmatprep.subr.mxu0 0.0
        %v2601 = vand.u32 %v249, 4294901760
        %v2602 = vsub.f32 %v249, %v2601
        %v2603 = vand.u32 %v2602, 4294901760
        %2604 = vmatpush1.msra.mxu0 %v2603
        %2605 = vmatprep.subr.mxu0 0.0
        %v2606 = vand.u32 %v248, 4294901760
        %v2607 = vsub.f32 %v248, %v2606
        %v2608 = vand.u32 %v2607, 4294901760
        %2609 = vmatpush1.msra.mxu0 %v2608
        %2610 = vmatprep.subr.mxu0 0.0
        %v2611 = vand.u32 %v247, 4294901760
        %v2612 = vsub.f32 %v247, %v2611
        %v2613 = vand.u32 %v2612, 4294901760
        %2614 = vmatpush1.msra.mxu0 %v2613
        %2615 = vmatprep.subr.mxu0 0.0
        %v2616 = vand.u32 %v246, 4294901760
        %v2617 = vsub.f32 %v246, %v2616
        %v2618 = vand.u32 %v2617, 4294901760
        %2619 = vmatpush1.msra.mxu0 %v2618
        %2620 = vmatprep.subr.mxu0 0.0
        %v2621 = vand.u32 %v245, 4294901760
        %v2622 = vsub.f32 %v245, %v2621
        %v2623 = vand.u32 %v2622, 4294901760
        %2624 = vmatpush1.msra.mxu0 %v2623
        %2625 = vmatprep.subr.mxu0 0.0
        %v2626 = vand.u32 %v244, 4294901760
        %v2627 = vsub.f32 %v244, %v2626
        %v2628 = vand.u32 %v2627, 4294901760
        %2629 = vmatpush1.msra.mxu0 %v2628
        %2630 = vmatprep.subr.mxu0 0.0
        %v2631 = vand.u32 %v243, 4294901760
        %v2632 = vsub.f32 %v243, %v2631
        %v2633 = vand.u32 %v2632, 4294901760
        %2634 = vmatpush1.msra.mxu0 %v2633
        %2635 = vmatprep.subr.mxu0 0.0
        %v2636 = vand.u32 %v242, 4294901760
        %v2637 = vsub.f32 %v242, %v2636
        %v2638 = vand.u32 %v2637, 4294901760
        %2639 = vmatpush1.msra.mxu0 %v2638
        %2640 = vmatprep.subr.mxu0 0.0
        %v2641 = vand.u32 %v241, 4294901760
        %v2642 = vsub.f32 %v241, %v2641
        %v2643 = vand.u32 %v2642, 4294901760
        %2644 = vmatpush1.msra.mxu0 %v2643
        %2645 = vmatprep.subr.mxu0 0.0
        %v2646 = vand.u32 %v240, 4294901760
        %v2647 = vsub.f32 %v240, %v2646
        %v2648 = vand.u32 %v2647, 4294901760
        %2649 = vmatpush1.msra.mxu0 %v2648
        %2650 = vmatprep.subr.mxu0 0.0
        %v2651 = vand.u32 %v239, 4294901760
        %v2652 = vsub.f32 %v239, %v2651
        %v2653 = vand.u32 %v2652, 4294901760
        %2654 = vmatpush1.msra.mxu0 %v2653
        %2655 = vmatprep.subr.mxu0 0.0
        %v2656 = vand.u32 %v238, 4294901760
        %v2657 = vsub.f32 %v238, %v2656
        %v2658 = vand.u32 %v2657, 4294901760
        %2659 = vmatpush1.msra.mxu0 %v2658
        %2660 = vmatprep.subr.mxu0 0.0
        %v2661 = vand.u32 %v237, 4294901760
        %v2662 = vsub.f32 %v237, %v2661
        %v2663 = vand.u32 %v2662, 4294901760
        %2664 = vmatpush1.msra.mxu0 %v2663
        %2665 = vmatprep.subr.mxu0 0.0
        %v2666 = vand.u32 %v236, 4294901760
        %v2667 = vsub.f32 %v236, %v2666
        %v2668 = vand.u32 %v2667, 4294901760
        %2669 = vmatpush1.msra.mxu0 %v2668
        %2670 = vmatprep.subr.mxu0 0.0
        %v2671 = vand.u32 %v267, 4294901760
        %v2672 = vsub.f32 %v267, %v2671
        %v2673 = vand.u32 %v2672, 4294901760
        %2674 = vmatpush2.msra.mxu0 %v2673
        %2675 = vmatprep.subr.mxu0 0.0
        %v2676 = vand.u32 %v266, 4294901760
        %v2677 = vsub.f32 %v266, %v2676
        %v2678 = vand.u32 %v2677, 4294901760
        %2679 = vmatpush2.msra.mxu0 %v2678
        %2680 = vmatprep.subr.mxu0 0.0
        %v2681 = vand.u32 %v265, 4294901760
        %v2682 = vsub.f32 %v265, %v2681
        %v2683 = vand.u32 %v2682, 4294901760
        %2684 = vmatpush2.msra.mxu0 %v2683
        %2685 = vmatprep.subr.mxu0 0.0
        %v2686 = vand.u32 %v264, 4294901760
        %v2687 = vsub.f32 %v264, %v2686
        %v2688 = vand.u32 %v2687, 4294901760
        %2689 = vmatpush2.msra.mxu0 %v2688
        %2690 = vmatprep.subr.mxu0 0.0
        %v2691 = vand.u32 %v263, 4294901760
        %v2692 = vsub.f32 %v263, %v2691
        %v2693 = vand.u32 %v2692, 4294901760
        %2694 = vmatpush2.msra.mxu0 %v2693
        %2695 = vmatprep.subr.mxu0 0.0
        %v2696 = vand.u32 %v262, 4294901760
        %v2697 = vsub.f32 %v262, %v2696
        %v2698 = vand.u32 %v2697, 4294901760
        %2699 = vmatpush2.msra.mxu0 %v2698
        %2700 = vmatprep.subr.mxu0 0.0
        %v2701 = vand.u32 %v261, 4294901760
        %v2702 = vsub.f32 %v261, %v2701
        %v2703 = vand.u32 %v2702, 4294901760
        %2704 = vmatpush2.msra.mxu0 %v2703
        %2705 = vmatprep.subr.mxu0 0.0
        %v2706 = vand.u32 %v260, 4294901760
        %v2707 = vsub.f32 %v260, %v2706
        %v2708 = vand.u32 %v2707, 4294901760
        %2709 = vmatpush2.msra.mxu0 %v2708
        %2710 = vmatprep.subr.mxu0 0.0
        %v2711 = vand.u32 %v259, 4294901760
        %v2712 = vsub.f32 %v259, %v2711
        %v2713 = vand.u32 %v2712, 4294901760
        %2714 = vmatpush2.msra.mxu0 %v2713
        %2715 = vmatprep.subr.mxu0 0.0
        %v2716 = vand.u32 %v258, 4294901760
        %v2717 = vsub.f32 %v258, %v2716
        %v2718 = vand.u32 %v2717, 4294901760
        %2719 = vmatpush2.msra.mxu0 %v2718
        %2720 = vmatprep.subr.mxu0 0.0
        %v2721 = vand.u32 %v257, 4294901760
        %v2722 = vsub.f32 %v257, %v2721
        %v2723 = vand.u32 %v2722, 4294901760
        %2724 = vmatpush2.msra.mxu0 %v2723
        %2725 = vmatprep.subr.mxu0 0.0
        %v2726 = vand.u32 %v256, 4294901760
        %v2727 = vsub.f32 %v256, %v2726
        %v2728 = vand.u32 %v2727, 4294901760
        %2729 = vmatpush2.msra.mxu0 %v2728
        %2730 = vmatprep.subr.mxu0 0.0
        %v2731 = vand.u32 %v255, 4294901760
        %v2732 = vsub.f32 %v255, %v2731
        %v2733 = vand.u32 %v2732, 4294901760
        %2734 = vmatpush2.msra.mxu0 %v2733
        %2735 = vmatprep.subr.mxu0 0.0
        %v2736 = vand.u32 %v254, 4294901760
        %v2737 = vsub.f32 %v254, %v2736
        %v2738 = vand.u32 %v2737, 4294901760
        %2739 = vmatpush2.msra.mxu0 %v2738
        %2740 = vmatprep.subr.mxu0 0.0
        %v2741 = vand.u32 %v253, 4294901760
        %v2742 = vsub.f32 %v253, %v2741
        %v2743 = vand.u32 %v2742, 4294901760
        %2744 = vmatpush2.msra.mxu0 %v2743
        %2745 = vmatprep.subr.mxu0 0.0
        %v2746 = vand.u32 %v252, 4294901760
        %v2747 = vsub.f32 %v252, %v2746
        %v2748 = vand.u32 %v2747, 4294901760
        %2749 = vmatpush2.msra.mxu0 %v2748
        %v2750 = vand.u32 %v1999, 4294901760
        %2751 = vmatprep.mubr.f32.mxu0 %v2750
        %v2752 = vand.u32 %v1998, 4294901760
        %2753 = vmatmul.mubr.f32.gmra.mxu0 %v2752
        %v2754 = vpop.f32.mrf.mxu0
        %v2755 = vadd.f32 %v2587, %v2754
        %v2756 = vpop.f32.mrf.mxu0
        %2757 = vdwg.mxu0
        %2758 = vmatprep.subr.mxu0 0.0
        %v2759 = vand.u32 %v251, 4294901760
        %2760 = vmatpush1.msra.mxu0 %v2759
        %2761 = vmatprep.subr.mxu0 0.0
        %v2762 = vand.u32 %v250, 4294901760
        %2763 = vmatpush1.msra.mxu0 %v2762
        %2764 = vmatprep.subr.mxu0 0.0
        %v2765 = vand.u32 %v249, 4294901760
        %2766 = vmatpush1.msra.mxu0 %v2765
        %2767 = vmatprep.subr.mxu0 0.0
        %v2768 = vand.u32 %v248, 4294901760
        %2769 = vmatpush1.msra.mxu0 %v2768
        %2770 = vmatprep.subr.mxu0 0.0
        %v2771 = vand.u32 %v247, 4294901760
        %2772 = vmatpush1.msra.mxu0 %v2771
        %2773 = vmatprep.subr.mxu0 0.0
        %v2774 = vand.u32 %v246, 4294901760
        %2775 = vmatpush1.msra.mxu0 %v2774
        %2776 = vmatprep.subr.mxu0 0.0
        %v2777 = vand.u32 %v245, 4294901760
        %2778 = vmatpush1.msra.mxu0 %v2777
        %2779 = vmatprep.subr.mxu0 0.0
        %v2780 = vand.u32 %v244, 4294901760
        %2781 = vmatpush1.msra.mxu0 %v2780
        %2782 = vmatprep.subr.mxu0 0.0
        %v2783 = vand.u32 %v243, 4294901760
        %2784 = vmatpush1.msra.mxu0 %v2783
        %2785 = vmatprep.subr.mxu0 0.0
        %v2786 = vand.u32 %v242, 4294901760
        %2787 = vmatpush1.msra.mxu0 %v2786
        %2788 = vmatprep.subr.mxu0 0.0
        %v2789 = vand.u32 %v241, 4294901760
        %2790 = vmatpush1.msra.mxu0 %v2789
        %2791 = vmatprep.subr.mxu0 0.0
        %v2792 = vand.u32 %v240, 4294901760
        %2793 = vmatpush1.msra.mxu0 %v2792
        %2794 = vmatprep.subr.mxu0 0.0
        %v2795 = vand.u32 %v239, 4294901760
        %2796 = vmatpush1.msra.mxu0 %v2795
        %2797 = vmatprep.subr.mxu0 0.0
        %v2798 = vand.u32 %v238, 4294901760
        %2799 = vmatpush1.msra.mxu0 %v2798
        %2800 = vmatprep.subr.mxu0 0.0
        %v2801 = vand.u32 %v237, 4294901760
        %2802 = vmatpush1.msra.mxu0 %v2801
        %2803 = vmatprep.subr.mxu0 0.0
        %v2804 = vand.u32 %v236, 4294901760
        %2805 = vmatpush1.msra.mxu0 %v2804
        %2806 = vmatprep.subr.mxu0 0.0
        %v2807 = vand.u32 %v267, 4294901760
        %2808 = vmatpush2.msra.mxu0 %v2807
        %2809 = vmatprep.subr.mxu0 0.0
        %v2810 = vand.u32 %v266, 4294901760
        %2811 = vmatpush2.msra.mxu0 %v2810
        %2812 = vmatprep.subr.mxu0 0.0
        %v2813 = vand.u32 %v265, 4294901760
        %2814 = vmatpush2.msra.mxu0 %v2813
        %2815 = vmatprep.subr.mxu0 0.0
        %v2816 = vand.u32 %v264, 4294901760
        %2817 = vmatpush2.msra.mxu0 %v2816
        %2818 = vmatprep.subr.mxu0 0.0
        %v2819 = vand.u32 %v263, 4294901760
        %2820 = vmatpush2.msra.mxu0 %v2819
        %2821 = vmatprep.subr.mxu0 0.0
        %v2822 = vand.u32 %v262, 4294901760
        %2823 = vmatpush2.msra.mxu0 %v2822
        %2824 = vmatprep.subr.mxu0 0.0
        %v2825 = vand.u32 %v261, 4294901760
        %2826 = vmatpush2.msra.mxu0 %v2825
        %2827 = vmatprep.subr.mxu0 0.0
        %v2828 = vand.u32 %v260, 4294901760
        %2829 = vmatpush2.msra.mxu0 %v2828
        %2830 = vmatprep.subr.mxu0 0.0
        %v2831 = vand.u32 %v259, 4294901760
        %2832 = vmatpush2.msra.mxu0 %v2831
        %2833 = vmatprep.subr.mxu0 0.0
        %v2834 = vand.u32 %v258, 4294901760
        %2835 = vmatpush2.msra.mxu0 %v2834
        %2836 = vmatprep.subr.mxu0 0.0
        %v2837 = vand.u32 %v257, 4294901760
        %2838 = vmatpush2.msra.mxu0 %v2837
        %2839 = vmatprep.subr.mxu0 0.0
        %v2840 = vand.u32 %v256, 4294901760
        %2841 = vmatpush2.msra.mxu0 %v2840
        %2842 = vmatprep.subr.mxu0 0.0
        %v2843 = vand.u32 %v255, 4294901760
        %2844 = vmatpush2.msra.mxu0 %v2843
        %2845 = vmatprep.subr.mxu0 0.0
        %v2846 = vand.u32 %v254, 4294901760
        %2847 = vmatpush2.msra.mxu0 %v2846
        %2848 = vmatprep.subr.mxu0 0.0
        %v2849 = vand.u32 %v253, 4294901760
        %2850 = vmatpush2.msra.mxu0 %v2849
        %2851 = vmatprep.subr.mxu0 0.0
        %v2852 = vand.u32 %v252, 4294901760
        %2853 = vmatpush2.msra.mxu0 %v2852
        %v2854 = vand.u32 %v1999, 4294901760
        %2855 = vmatprep.mubr.f32.mxu0 %v2854
        %v2856 = vand.u32 %v1998, 4294901760
        %2857 = vmatmul.mubr.f32.gmra.mxu0 %v2856
        %v2858 = vpop.f32.mrf.mxu0
        %v2859 = vadd.f32 %v2755, %v2858
        %v2860 = vpop.f32.mrf.mxu0
        %2861 = vdwg.mxu0
        %s2862 = scalar_lea.vmem %s204, 48 [#allocation2]
        %v2863 = vld [vmem:[%s2862] sm:$0xff]
        %v2864 = vld [vmem:[%s2862 + $0x8] sm:$0xff]
        %2865 = vmatprep.subr.mxu0 0.0
        %v2866 = vand.u32 %v251, 4294901760
        %2867 = vmatpush1.msra.mxu0 %v2866
        %2868 = vmatprep.subr.mxu0 0.0
        %v2869 = vand.u32 %v250, 4294901760
        %2870 = vmatpush1.msra.mxu0 %v2869
        %2871 = vmatprep.subr.mxu0 0.0
        %v2872 = vand.u32 %v249, 4294901760
        %2873 = vmatpush1.msra.mxu0 %v2872
        %2874 = vmatprep.subr.mxu0 0.0
        %v2875 = vand.u32 %v248, 4294901760
        %2876 = vmatpush1.msra.mxu0 %v2875
        %2877 = vmatprep.subr.mxu0 0.0
        %v2878 = vand.u32 %v247, 4294901760
        %2879 = vmatpush1.msra.mxu0 %v2878
        %2880 = vmatprep.subr.mxu0 0.0
        %v2881 = vand.u32 %v246, 4294901760
        %2882 = vmatpush1.msra.mxu0 %v2881
        %2883 = vmatprep.subr.mxu0 0.0
        %v2884 = vand.u32 %v245, 4294901760
        %2885 = vmatpush1.msra.mxu0 %v2884
        %2886 = vmatprep.subr.mxu0 0.0
        %v2887 = vand.u32 %v244, 4294901760
        %2888 = vmatpush1.msra.mxu0 %v2887
        %2889 = vmatprep.subr.mxu0 0.0
        %v2890 = vand.u32 %v243, 4294901760
        %2891 = vmatpush1.msra.mxu0 %v2890
        %2892 = vmatprep.subr.mxu0 0.0
        %v2893 = vand.u32 %v242, 4294901760
        %2894 = vmatpush1.msra.mxu0 %v2893
        %2895 = vmatprep.subr.mxu0 0.0
        %v2896 = vand.u32 %v241, 4294901760
        %2897 = vmatpush1.msra.mxu0 %v2896
        %2898 = vmatprep.subr.mxu0 0.0
        %v2899 = vand.u32 %v240, 4294901760
        %2900 = vmatpush1.msra.mxu0 %v2899
        %2901 = vmatprep.subr.mxu0 0.0
        %v2902 = vand.u32 %v239, 4294901760
        %2903 = vmatpush1.msra.mxu0 %v2902
        %2904 = vmatprep.subr.mxu0 0.0
        %v2905 = vand.u32 %v238, 4294901760
        %2906 = vmatpush1.msra.mxu0 %v2905
        %2907 = vmatprep.subr.mxu0 0.0
        %v2908 = vand.u32 %v237, 4294901760
        %2909 = vmatpush1.msra.mxu0 %v2908
        %2910 = vmatprep.subr.mxu0 0.0
        %v2911 = vand.u32 %v236, 4294901760
        %2912 = vmatpush1.msra.mxu0 %v2911
        %2913 = vmatprep.subr.mxu0 0.0
        %v2914 = vand.u32 %v267, 4294901760
        %2915 = vmatpush2.msra.mxu0 %v2914
        %2916 = vmatprep.subr.mxu0 0.0
        %v2917 = vand.u32 %v266, 4294901760
        %2918 = vmatpush2.msra.mxu0 %v2917
        %2919 = vmatprep.subr.mxu0 0.0
        %v2920 = vand.u32 %v265, 4294901760
        %2921 = vmatpush2.msra.mxu0 %v2920
        %2922 = vmatprep.subr.mxu0 0.0
        %v2923 = vand.u32 %v264, 4294901760
        %2924 = vmatpush2.msra.mxu0 %v2923
        %2925 = vmatprep.subr.mxu0 0.0
        %v2926 = vand.u32 %v263, 4294901760
        %2927 = vmatpush2.msra.mxu0 %v2926
        %2928 = vmatprep.subr.mxu0 0.0
        %v2929 = vand.u32 %v262, 4294901760
        %2930 = vmatpush2.msra.mxu0 %v2929
        %2931 = vmatprep.subr.mxu0 0.0
        %v2932 = vand.u32 %v261, 4294901760
        %2933 = vmatpush2.msra.mxu0 %v2932
        %2934 = vmatprep.subr.mxu0 0.0
        %v2935 = vand.u32 %v260, 4294901760
        %2936 = vmatpush2.msra.mxu0 %v2935
        %2937 = vmatprep.subr.mxu0 0.0
        %v2938 = vand.u32 %v259, 4294901760
        %2939 = vmatpush2.msra.mxu0 %v2938
        %2940 = vmatprep.subr.mxu0 0.0
        %v2941 = vand.u32 %v258, 4294901760
        %2942 = vmatpush2.msra.mxu0 %v2941
        %2943 = vmatprep.subr.mxu0 0.0
        %v2944 = vand.u32 %v257, 4294901760
        %2945 = vmatpush2.msra.mxu0 %v2944
        %2946 = vmatprep.subr.mxu0 0.0
        %v2947 = vand.u32 %v256, 4294901760
        %2948 = vmatpush2.msra.mxu0 %v2947
        %2949 = vmatprep.subr.mxu0 0.0
        %v2950 = vand.u32 %v255, 4294901760
        %2951 = vmatpush2.msra.mxu0 %v2950
        %2952 = vmatprep.subr.mxu0 0.0
        %v2953 = vand.u32 %v254, 4294901760
        %2954 = vmatpush2.msra.mxu0 %v2953
        %2955 = vmatprep.subr.mxu0 0.0
        %v2956 = vand.u32 %v253, 4294901760
        %2957 = vmatpush2.msra.mxu0 %v2956
        %2958 = vmatprep.subr.mxu0 0.0
        %v2959 = vand.u32 %v252, 4294901760
        %2960 = vmatpush2.msra.mxu0 %v2959
        %v2961 = vand.u32 %v2864, 4294901760
        %v2962 = vsub.f32 %v2864, %v2961
        %v2963 = vand.u32 %v2962, 4294901760
        %v2964 = vsub.f32 %v2962, %v2963
        %v2965 = vand.u32 %v2964, 4294901760
        %2966 = vmatprep.mubr.f32.mxu0 %v2965
        %v2967 = vand.u32 %v2863, 4294901760
        %v2968 = vsub.f32 %v2863, %v2967
        %v2969 = vand.u32 %v2968, 4294901760
        %v2970 = vsub.f32 %v2968, %v2969
        %v2971 = vand.u32 %v2970, 4294901760
        %2972 = vmatmul.mubr.f32.gmra.mxu0 %v2971
        %v2973 = vpop.f32.mrf.mxu0
        %v2974 = vadd.f32 0.0, %v2973
        %v2975 = vpop.f32.mrf.mxu0
        %2976 = vdwg.mxu0
        %2977 = vmatprep.subr.mxu0 0.0
        %v2978 = vand.u32 %v251, 4294901760
        %v2979 = vsub.f32 %v251, %v2978
        %v2980 = vand.u32 %v2979, 4294901760
        %v2981 = vsub.f32 %v2979, %v2980
        %v2982 = vand.u32 %v2981, 4294901760
        %2983 = vmatpush1.msra.mxu0 %v2982
        %2984 = vmatprep.subr.mxu0 0.0
        %v2985 = vand.u32 %v250, 4294901760
        %v2986 = vsub.f32 %v250, %v2985
        %v2987 = vand.u32 %v2986, 4294901760
        %v2988 = vsub.f32 %v2986, %v2987
        %v2989 = vand.u32 %v2988, 4294901760
        %2990 = vmatpush1.msra.mxu0 %v2989
        %2991 = vmatprep.subr.mxu0 0.0
        %v2992 = vand.u32 %v249, 4294901760
        %v2993 = vsub.f32 %v249, %v2992
        %v2994 = vand.u32 %v2993, 4294901760
        %v2995 = vsub.f32 %v2993, %v2994
        %v2996 = vand.u32 %v2995, 4294901760
        %2997 = vmatpush1.msra.mxu0 %v2996
        %2998 = vmatprep.subr.mxu0 0.0
        %v2999 = vand.u32 %v248, 4294901760
        %v3000 = vsub.f32 %v248, %v2999
        %v3001 = vand.u32 %v3000, 4294901760
        %v3002 = vsub.f32 %v3000, %v3001
        %v3003 = vand.u32 %v3002, 4294901760
        %3004 = vmatpush1.msra.mxu0 %v3003
        %3005 = vmatprep.subr.mxu0 0.0
        %v3006 = vand.u32 %v247, 4294901760
        %v3007 = vsub.f32 %v247, %v3006
        %v3008 = vand.u32 %v3007, 4294901760
        %v3009 = vsub.f32 %v3007, %v3008
        %v3010 = vand.u32 %v3009, 4294901760
        %3011 = vmatpush1.msra.mxu0 %v3010
        %3012 = vmatprep.subr.mxu0 0.0
        %v3013 = vand.u32 %v246, 4294901760
        %v3014 = vsub.f32 %v246, %v3013
        %v3015 = vand.u32 %v3014, 4294901760
        %v3016 = vsub.f32 %v3014, %v3015
        %v3017 = vand.u32 %v3016, 4294901760
        %3018 = vmatpush1.msra.mxu0 %v3017
        %3019 = vmatprep.subr.mxu0 0.0
        %v3020 = vand.u32 %v245, 4294901760
        %v3021 = vsub.f32 %v245, %v3020
        %v3022 = vand.u32 %v3021, 4294901760
        %v3023 = vsub.f32 %v3021, %v3022
        %v3024 = vand.u32 %v3023, 4294901760
        %3025 = vmatpush1.msra.mxu0 %v3024
        %3026 = vmatprep.subr.mxu0 0.0
        %v3027 = vand.u32 %v244, 4294901760
        %v3028 = vsub.f32 %v244, %v3027
        %v3029 = vand.u32 %v3028, 4294901760
        %v3030 = vsub.f32 %v3028, %v3029
        %v3031 = vand.u32 %v3030, 4294901760
        %3032 = vmatpush1.msra.mxu0 %v3031
        %3033 = vmatprep.subr.mxu0 0.0
        %v3034 = vand.u32 %v243, 4294901760
        %v3035 = vsub.f32 %v243, %v3034
        %v3036 = vand.u32 %v3035, 4294901760
        %v3037 = vsub.f32 %v3035, %v3036
        %v3038 = vand.u32 %v3037, 4294901760
        %3039 = vmatpush1.msra.mxu0 %v3038
        %3040 = vmatprep.subr.mxu0 0.0
        %v3041 = vand.u32 %v242, 4294901760
        %v3042 = vsub.f32 %v242, %v3041
        %v3043 = vand.u32 %v3042, 4294901760
        %v3044 = vsub.f32 %v3042, %v3043
        %v3045 = vand.u32 %v3044, 4294901760
        %3046 = vmatpush1.msra.mxu0 %v3045
        %3047 = vmatprep.subr.mxu0 0.0
        %v3048 = vand.u32 %v241, 4294901760
        %v3049 = vsub.f32 %v241, %v3048
        %v3050 = vand.u32 %v3049, 4294901760
        %v3051 = vsub.f32 %v3049, %v3050
        %v3052 = vand.u32 %v3051, 4294901760
        %3053 = vmatpush1.msra.mxu0 %v3052
        %3054 = vmatprep.subr.mxu0 0.0
        %v3055 = vand.u32 %v240, 4294901760
        %v3056 = vsub.f32 %v240, %v3055
        %v3057 = vand.u32 %v3056, 4294901760
        %v3058 = vsub.f32 %v3056, %v3057
        %v3059 = vand.u32 %v3058, 4294901760
        %3060 = vmatpush1.msra.mxu0 %v3059
        %3061 = vmatprep.subr.mxu0 0.0
        %v3062 = vand.u32 %v239, 4294901760
        %v3063 = vsub.f32 %v239, %v3062
        %v3064 = vand.u32 %v3063, 4294901760
        %v3065 = vsub.f32 %v3063, %v3064
        %v3066 = vand.u32 %v3065, 4294901760
        %3067 = vmatpush1.msra.mxu0 %v3066
        %3068 = vmatprep.subr.mxu0 0.0
        %v3069 = vand.u32 %v238, 4294901760
        %v3070 = vsub.f32 %v238, %v3069
        %v3071 = vand.u32 %v3070, 4294901760
        %v3072 = vsub.f32 %v3070, %v3071
        %v3073 = vand.u32 %v3072, 4294901760
        %3074 = vmatpush1.msra.mxu0 %v3073
        %3075 = vmatprep.subr.mxu0 0.0
        %v3076 = vand.u32 %v237, 4294901760
        %v3077 = vsub.f32 %v237, %v3076
        %v3078 = vand.u32 %v3077, 4294901760
        %v3079 = vsub.f32 %v3077, %v3078
        %v3080 = vand.u32 %v3079, 4294901760
        %3081 = vmatpush1.msra.mxu0 %v3080
        %3082 = vmatprep.subr.mxu0 0.0
        %v3083 = vand.u32 %v236, 4294901760
        %v3084 = vsub.f32 %v236, %v3083
        %v3085 = vand.u32 %v3084, 4294901760
        %v3086 = vsub.f32 %v3084, %v3085
        %v3087 = vand.u32 %v3086, 4294901760
        %3088 = vmatpush1.msra.mxu0 %v3087
        %3089 = vmatprep.subr.mxu0 0.0
        %v3090 = vand.u32 %v267, 4294901760
        %v3091 = vsub.f32 %v267, %v3090
        %v3092 = vand.u32 %v3091, 4294901760
        %v3093 = vsub.f32 %v3091, %v3092
        %v3094 = vand.u32 %v3093, 4294901760
        %3095 = vmatpush2.msra.mxu0 %v3094
        %3096 = vmatprep.subr.mxu0 0.0
        %v3097 = vand.u32 %v266, 4294901760
        %v3098 = vsub.f32 %v266, %v3097
        %v3099 = vand.u32 %v3098, 4294901760
        %v3100 = vsub.f32 %v3098, %v3099
        %v3101 = vand.u32 %v3100, 4294901760
        %3102 = vmatpush2.msra.mxu0 %v3101
        %3103 = vmatprep.subr.mxu0 0.0
        %v3104 = vand.u32 %v265, 4294901760
        %v3105 = vsub.f32 %v265, %v3104
        %v3106 = vand.u32 %v3105, 4294901760
        %v3107 = vsub.f32 %v3105, %v3106
        %v3108 = vand.u32 %v3107, 4294901760
        %3109 = vmatpush2.msra.mxu0 %v3108
        %3110 = vmatprep.subr.mxu0 0.0
        %v3111 = vand.u32 %v264, 4294901760
        %v3112 = vsub.f32 %v264, %v3111
        %v3113 = vand.u32 %v3112, 4294901760
        %v3114 = vsub.f32 %v3112, %v3113
        %v3115 = vand.u32 %v3114, 4294901760
        %3116 = vmatpush2.msra.mxu0 %v3115
        %3117 = vmatprep.subr.mxu0 0.0
        %v3118 = vand.u32 %v263, 4294901760
        %v3119 = vsub.f32 %v263, %v3118
        %v3120 = vand.u32 %v3119, 4294901760
        %v3121 = vsub.f32 %v3119, %v3120
        %v3122 = vand.u32 %v3121, 4294901760
        %3123 = vmatpush2.msra.mxu0 %v3122
        %3124 = vmatprep.subr.mxu0 0.0
        %v3125 = vand.u32 %v262, 4294901760
        %v3126 = vsub.f32 %v262, %v3125
        %v3127 = vand.u32 %v3126, 4294901760
        %v3128 = vsub.f32 %v3126, %v3127
        %v3129 = vand.u32 %v3128, 4294901760
        %3130 = vmatpush2.msra.mxu0 %v3129
        %3131 = vmatprep.subr.mxu0 0.0
        %v3132 = vand.u32 %v261, 4294901760
        %v3133 = vsub.f32 %v261, %v3132
        %v3134 = vand.u32 %v3133, 4294901760
        %v3135 = vsub.f32 %v3133, %v3134
        %v3136 = vand.u32 %v3135, 4294901760
        %3137 = vmatpush2.msra.mxu0 %v3136
        %3138 = vmatprep.subr.mxu0 0.0
        %v3139 = vand.u32 %v260, 4294901760
        %v3140 = vsub.f32 %v260, %v3139
        %v3141 = vand.u32 %v3140, 4294901760
        %v3142 = vsub.f32 %v3140, %v3141
        %v3143 = vand.u32 %v3142, 4294901760
        %3144 = vmatpush2.msra.mxu0 %v3143
        %3145 = vmatprep.subr.mxu0 0.0
        %v3146 = vand.u32 %v259, 4294901760
        %v3147 = vsub.f32 %v259, %v3146
        %v3148 = vand.u32 %v3147, 4294901760
        %v3149 = vsub.f32 %v3147, %v3148
        %v3150 = vand.u32 %v3149, 4294901760
        %3151 = vmatpush2.msra.mxu0 %v3150
        %3152 = vmatprep.subr.mxu0 0.0
        %v3153 = vand.u32 %v258, 4294901760
        %v3154 = vsub.f32 %v258, %v3153
        %v3155 = vand.u32 %v3154, 4294901760
        %v3156 = vsub.f32 %v3154, %v3155
        %v3157 = vand.u32 %v3156, 4294901760
        %3158 = vmatpush2.msra.mxu0 %v3157
        %3159 = vmatprep.subr.mxu0 0.0
        %v3160 = vand.u32 %v257, 4294901760
        %v3161 = vsub.f32 %v257, %v3160
        %v3162 = vand.u32 %v3161, 4294901760
        %v3163 = vsub.f32 %v3161, %v3162
        %v3164 = vand.u32 %v3163, 4294901760
        %3165 = vmatpush2.msra.mxu0 %v3164
        %3166 = vmatprep.subr.mxu0 0.0
        %v3167 = vand.u32 %v256, 4294901760
        %v3168 = vsub.f32 %v256, %v3167
        %v3169 = vand.u32 %v3168, 4294901760
        %v3170 = vsub.f32 %v3168, %v3169
        %v3171 = vand.u32 %v3170, 4294901760
        %3172 = vmatpush2.msra.mxu0 %v3171
        %3173 = vmatprep.subr.mxu0 0.0
        %v3174 = vand.u32 %v255, 4294901760
        %v3175 = vsub.f32 %v255, %v3174
        %v3176 = vand.u32 %v3175, 4294901760
        %v3177 = vsub.f32 %v3175, %v3176
        %v3178 = vand.u32 %v3177, 4294901760
        %3179 = vmatpush2.msra.mxu0 %v3178
        %3180 = vmatprep.subr.mxu0 0.0
        %v3181 = vand.u32 %v254, 4294901760
        %v3182 = vsub.f32 %v254, %v3181
        %v3183 = vand.u32 %v3182, 4294901760
        %v3184 = vsub.f32 %v3182, %v3183
        %v3185 = vand.u32 %v3184, 4294901760
        %3186 = vmatpush2.msra.mxu0 %v3185
        %3187 = vmatprep.subr.mxu0 0.0
        %v3188 = vand.u32 %v253, 4294901760
        %v3189 = vsub.f32 %v253, %v3188
        %v3190 = vand.u32 %v3189, 4294901760
        %v3191 = vsub.f32 %v3189, %v3190
        %v3192 = vand.u32 %v3191, 4294901760
        %3193 = vmatpush2.msra.mxu0 %v3192
        %3194 = vmatprep.subr.mxu0 0.0
        %v3195 = vand.u32 %v252, 4294901760
        %v3196 = vsub.f32 %v252, %v3195
        %v3197 = vand.u32 %v3196, 4294901760
        %v3198 = vsub.f32 %v3196, %v3197
        %v3199 = vand.u32 %v3198, 4294901760
        %3200 = vmatpush2.msra.mxu0 %v3199
        %v3201 = vand.u32 %v2864, 4294901760
        %3202 = vmatprep.mubr.f32.mxu0 %v3201
        %v3203 = vand.u32 %v2863, 4294901760
        %3204 = vmatmul.mubr.f32.gmra.mxu0 %v3203
        %v3205 = vpop.f32.mrf.mxu0
        %v3206 = vadd.f32 %v2974, %v3205
        %v3207 = vpop.f32.mrf.mxu0
        %3208 = vdwg.mxu0
        %3209 = vmatprep.subr.mxu0 0.0
        %v3210 = vand.u32 %v251, 4294901760
        %v3211 = vsub.f32 %v251, %v3210
        %3212 = vmatpush1.msra.mxu0 %v3211
        %3213 = vmatprep.subr.mxu0 0.0
        %v3214 = vand.u32 %v250, 4294901760
        %v3215 = vsub.f32 %v250, %v3214
        %3216 = vmatpush1.msra.mxu0 %v3215
        %3217 = vmatprep.subr.mxu0 0.0
        %v3218 = vand.u32 %v249, 4294901760
        %v3219 = vsub.f32 %v249, %v3218
        %3220 = vmatpush1.msra.mxu0 %v3219
        %3221 = vmatprep.subr.mxu0 0.0
        %v3222 = vand.u32 %v248, 4294901760
        %v3223 = vsub.f32 %v248, %v3222
        %3224 = vmatpush1.msra.mxu0 %v3223
        %3225 = vmatprep.subr.mxu0 0.0
        %v3226 = vand.u32 %v247, 4294901760
        %v3227 = vsub.f32 %v247, %v3226
        %3228 = vmatpush1.msra.mxu0 %v3227
        %3229 = vmatprep.subr.mxu0 0.0
        %v3230 = vand.u32 %v246, 4294901760
        %v3231 = vsub.f32 %v246, %v3230
        %3232 = vmatpush1.msra.mxu0 %v3231
        %3233 = vmatprep.subr.mxu0 0.0
        %v3234 = vand.u32 %v245, 4294901760
        %v3235 = vsub.f32 %v245, %v3234
        %3236 = vmatpush1.msra.mxu0 %v3235
        %3237 = vmatprep.subr.mxu0 0.0
        %v3238 = vand.u32 %v244, 4294901760
        %v3239 = vsub.f32 %v244, %v3238
        %3240 = vmatpush1.msra.mxu0 %v3239
        %3241 = vmatprep.subr.mxu0 0.0
        %v3242 = vand.u32 %v243, 4294901760
        %v3243 = vsub.f32 %v243, %v3242
        %3244 = vmatpush1.msra.mxu0 %v3243
        %3245 = vmatprep.subr.mxu0 0.0
        %v3246 = vand.u32 %v242, 4294901760
        %v3247 = vsub.f32 %v242, %v3246
        %3248 = vmatpush1.msra.mxu0 %v3247
        %3249 = vmatprep.subr.mxu0 0.0
        %v3250 = vand.u32 %v241, 4294901760
        %v3251 = vsub.f32 %v241, %v3250
        %3252 = vmatpush1.msra.mxu0 %v3251
        %3253 = vmatprep.subr.mxu0 0.0
        %v3254 = vand.u32 %v240, 4294901760
        %v3255 = vsub.f32 %v240, %v3254
        %3256 = vmatpush1.msra.mxu0 %v3255
        %3257 = vmatprep.subr.mxu0 0.0
        %v3258 = vand.u32 %v239, 4294901760
        %v3259 = vsub.f32 %v239, %v3258
        %3260 = vmatpush1.msra.mxu0 %v3259
        %3261 = vmatprep.subr.mxu0 0.0
        %v3262 = vand.u32 %v238, 4294901760
        %v3263 = vsub.f32 %v238, %v3262
        %3264 = vmatpush1.msra.mxu0 %v3263
        %3265 = vmatprep.subr.mxu0 0.0
        %v3266 = vand.u32 %v237, 4294901760
        %v3267 = vsub.f32 %v237, %v3266
        %3268 = vmatpush1.msra.mxu0 %v3267
        %3269 = vmatprep.subr.mxu0 0.0
        %v3270 = vand.u32 %v236, 4294901760
        %v3271 = vsub.f32 %v236, %v3270
        %3272 = vmatpush1.msra.mxu0 %v3271
        %3273 = vmatprep.subr.mxu0 0.0
        %v3274 = vand.u32 %v267, 4294901760
        %v3275 = vsub.f32 %v267, %v3274
        %3276 = vmatpush2.msra.mxu0 %v3275
        %3277 = vmatprep.subr.mxu0 0.0
        %v3278 = vand.u32 %v266, 4294901760
        %v3279 = vsub.f32 %v266, %v3278
        %3280 = vmatpush2.msra.mxu0 %v3279
        %3281 = vmatprep.subr.mxu0 0.0
        %v3282 = vand.u32 %v265, 4294901760
        %v3283 = vsub.f32 %v265, %v3282
        %3284 = vmatpush2.msra.mxu0 %v3283
        %3285 = vmatprep.subr.mxu0 0.0
        %v3286 = vand.u32 %v264, 4294901760
        %v3287 = vsub.f32 %v264, %v3286
        %3288 = vmatpush2.msra.mxu0 %v3287
        %3289 = vmatprep.subr.mxu0 0.0
        %v3290 = vand.u32 %v263, 4294901760
        %v3291 = vsub.f32 %v263, %v3290
        %3292 = vmatpush2.msra.mxu0 %v3291
        %3293 = vmatprep.subr.mxu0 0.0
        %v3294 = vand.u32 %v262, 4294901760
        %v3295 = vsub.f32 %v262, %v3294
        %3296 = vmatpush2.msra.mxu0 %v3295
        %3297 = vmatprep.subr.mxu0 0.0
        %v3298 = vand.u32 %v261, 4294901760
        %v3299 = vsub.f32 %v261, %v3298
        %3300 = vmatpush2.msra.mxu0 %v3299
        %3301 = vmatprep.subr.mxu0 0.0
        %v3302 = vand.u32 %v260, 4294901760
        %v3303 = vsub.f32 %v260, %v3302
        %3304 = vmatpush2.msra.mxu0 %v3303
        %3305 = vmatprep.subr.mxu0 0.0
        %v3306 = vand.u32 %v259, 4294901760
        %v3307 = vsub.f32 %v259, %v3306
        %3308 = vmatpush2.msra.mxu0 %v3307
        %3309 = vmatprep.subr.mxu0 0.0
        %v3310 = vand.u32 %v258, 4294901760
        %v3311 = vsub.f32 %v258, %v3310
        %3312 = vmatpush2.msra.mxu0 %v3311
        %3313 = vmatprep.subr.mxu0 0.0
        %v3314 = vand.u32 %v257, 4294901760
        %v3315 = vsub.f32 %v257, %v3314
        %3316 = vmatpush2.msra.mxu0 %v3315
        %3317 = vmatprep.subr.mxu0 0.0
        %v3318 = vand.u32 %v256, 4294901760
        %v3319 = vsub.f32 %v256, %v3318
        %3320 = vmatpush2.msra.mxu0 %v3319
        %3321 = vmatprep.subr.mxu0 0.0
        %v3322 = vand.u32 %v255, 4294901760
        %v3323 = vsub.f32 %v255, %v3322
        %3324 = vmatpush2.msra.mxu0 %v3323
        %3325 = vmatprep.subr.mxu0 0.0
        %v3326 = vand.u32 %v254, 4294901760
        %v3327 = vsub.f32 %v254, %v3326
        %3328 = vmatpush2.msra.mxu0 %v3327
        %3329 = vmatprep.subr.mxu0 0.0
        %v3330 = vand.u32 %v253, 4294901760
        %v3331 = vsub.f32 %v253, %v3330
        %3332 = vmatpush2.msra.mxu0 %v3331
        %3333 = vmatprep.subr.mxu0 0.0
        %v3334 = vand.u32 %v252, 4294901760
        %v3335 = vsub.f32 %v252, %v3334
        %3336 = vmatpush2.msra.mxu0 %v3335
        %v3337 = vand.u32 %v2864, 4294901760
        %v3338 = vsub.f32 %v2864, %v3337
        %3339 = vmatprep.mubr.f32.mxu0 %v3338
        %v3340 = vand.u32 %v2863, 4294901760
        %v3341 = vsub.f32 %v2863, %v3340
        %3342 = vmatmul.mubr.f32.gmra.mxu0 %v3341
        %v3343 = vpop.f32.mrf.mxu0
        %v3344 = vadd.f32 %v3206, %v3343
        %v3345 = vpop.f32.mrf.mxu0
        %3346 = vdwg.mxu0
        %3347 = vmatprep.subr.mxu0 0.0
        %v3348 = vand.u32 %v251, 4294901760
        %3349 = vmatpush1.msra.mxu0 %v3348
        %3350 = vmatprep.subr.mxu0 0.0
        %v3351 = vand.u32 %v250, 4294901760
        %3352 = vmatpush1.msra.mxu0 %v3351
        %3353 = vmatprep.subr.mxu0 0.0
        %v3354 = vand.u32 %v249, 4294901760
        %3355 = vmatpush1.msra.mxu0 %v3354
        %3356 = vmatprep.subr.mxu0 0.0
        %v3357 = vand.u32 %v248, 4294901760
        %3358 = vmatpush1.msra.mxu0 %v3357
        %3359 = vmatprep.subr.mxu0 0.0
        %v3360 = vand.u32 %v247, 4294901760
        %3361 = vmatpush1.msra.mxu0 %v3360
        %3362 = vmatprep.subr.mxu0 0.0
        %v3363 = vand.u32 %v246, 4294901760
        %3364 = vmatpush1.msra.mxu0 %v3363
        %3365 = vmatprep.subr.mxu0 0.0
        %v3366 = vand.u32 %v245, 4294901760
        %3367 = vmatpush1.msra.mxu0 %v3366
        %3368 = vmatprep.subr.mxu0 0.0
        %v3369 = vand.u32 %v244, 4294901760
        %3370 = vmatpush1.msra.mxu0 %v3369
        %3371 = vmatprep.subr.mxu0 0.0
        %v3372 = vand.u32 %v243, 4294901760
        %3373 = vmatpush1.msra.mxu0 %v3372
        %3374 = vmatprep.subr.mxu0 0.0
        %v3375 = vand.u32 %v242, 4294901760
        %3376 = vmatpush1.msra.mxu0 %v3375
        %3377 = vmatprep.subr.mxu0 0.0
        %v3378 = vand.u32 %v241, 4294901760
        %3379 = vmatpush1.msra.mxu0 %v3378
        %3380 = vmatprep.subr.mxu0 0.0
        %v3381 = vand.u32 %v240, 4294901760
        %3382 = vmatpush1.msra.mxu0 %v3381
        %3383 = vmatprep.subr.mxu0 0.0
        %v3384 = vand.u32 %v239, 4294901760
        %3385 = vmatpush1.msra.mxu0 %v3384
        %3386 = vmatprep.subr.mxu0 0.0
        %v3387 = vand.u32 %v238, 4294901760
        %3388 = vmatpush1.msra.mxu0 %v3387
        %3389 = vmatprep.subr.mxu0 0.0
        %v3390 = vand.u32 %v237, 4294901760
        %3391 = vmatpush1.msra.mxu0 %v3390
        %3392 = vmatprep.subr.mxu0 0.0
        %v3393 = vand.u32 %v236, 4294901760
        %3394 = vmatpush1.msra.mxu0 %v3393
        %3395 = vmatprep.subr.mxu0 0.0
        %v3396 = vand.u32 %v267, 4294901760
        %3397 = vmatpush2.msra.mxu0 %v3396
        %3398 = vmatprep.subr.mxu0 0.0
        %v3399 = vand.u32 %v266, 4294901760
        %3400 = vmatpush2.msra.mxu0 %v3399
        %3401 = vmatprep.subr.mxu0 0.0
        %v3402 = vand.u32 %v265, 4294901760
        %3403 = vmatpush2.msra.mxu0 %v3402
        %3404 = vmatprep.subr.mxu0 0.0
        %v3405 = vand.u32 %v264, 4294901760
        %3406 = vmatpush2.msra.mxu0 %v3405
        %3407 = vmatprep.subr.mxu0 0.0
        %v3408 = vand.u32 %v263, 4294901760
        %3409 = vmatpush2.msra.mxu0 %v3408
        %3410 = vmatprep.subr.mxu0 0.0
        %v3411 = vand.u32 %v262, 4294901760
        %3412 = vmatpush2.msra.mxu0 %v3411
        %3413 = vmatprep.subr.mxu0 0.0
        %v3414 = vand.u32 %v261, 4294901760
        %3415 = vmatpush2.msra.mxu0 %v3414
        %3416 = vmatprep.subr.mxu0 0.0
        %v3417 = vand.u32 %v260, 4294901760
        %3418 = vmatpush2.msra.mxu0 %v3417
        %3419 = vmatprep.subr.mxu0 0.0
        %v3420 = vand.u32 %v259, 4294901760
        %3421 = vmatpush2.msra.mxu0 %v3420
        %3422 = vmatprep.subr.mxu0 0.0
        %v3423 = vand.u32 %v258, 4294901760
        %3424 = vmatpush2.msra.mxu0 %v3423
        %3425 = vmatprep.subr.mxu0 0.0
        %v3426 = vand.u32 %v257, 4294901760
        %3427 = vmatpush2.msra.mxu0 %v3426
        %3428 = vmatprep.subr.mxu0 0.0
        %v3429 = vand.u32 %v256, 4294901760
        %3430 = vmatpush2.msra.mxu0 %v3429
        %3431 = vmatprep.subr.mxu0 0.0
        %v3432 = vand.u32 %v255, 4294901760
        %3433 = vmatpush2.msra.mxu0 %v3432
        %3434 = vmatprep.subr.mxu0 0.0
        %v3435 = vand.u32 %v254, 4294901760
        %3436 = vmatpush2.msra.mxu0 %v3435
        %3437 = vmatprep.subr.mxu0 0.0
        %v3438 = vand.u32 %v253, 4294901760
        %3439 = vmatpush2.msra.mxu0 %v3438
        %3440 = vmatprep.subr.mxu0 0.0
        %v3441 = vand.u32 %v252, 4294901760
        %3442 = vmatpush2.msra.mxu0 %v3441
        %v3443 = vand.u32 %v2864, 4294901760
        %v3444 = vsub.f32 %v2864, %v3443
        %v3445 = vand.u32 %v3444, 4294901760
        %3446 = vmatprep.mubr.f32.mxu0 %v3445
        %v3447 = vand.u32 %v2863, 4294901760
        %v3448 = vsub.f32 %v2863, %v3447
        %v3449 = vand.u32 %v3448, 4294901760
        %3450 = vmatmul.mubr.f32.gmra.mxu0 %v3449
        %v3451 = vpop.f32.mrf.mxu0
        %v3452 = vadd.f32 %v3344, %v3451
        %v3453 = vpop.f32.mrf.mxu0
        %3454 = vdwg.mxu0
        %3455 = vmatprep.subr.mxu0 0.0
        %v3456 = vand.u32 %v251, 4294901760
        %v3457 = vsub.f32 %v251, %v3456
        %v3458 = vand.u32 %v3457, 4294901760
        %3459 = vmatpush1.msra.mxu0 %v3458
        %3460 = vmatprep.subr.mxu0 0.0
        %v3461 = vand.u32 %v250, 4294901760
        %v3462 = vsub.f32 %v250, %v3461
        %v3463 = vand.u32 %v3462, 4294901760
        %3464 = vmatpush1.msra.mxu0 %v3463
        %3465 = vmatprep.subr.mxu0 0.0
        %v3466 = vand.u32 %v249, 4294901760
        %v3467 = vsub.f32 %v249, %v3466
        %v3468 = vand.u32 %v3467, 4294901760
        %3469 = vmatpush1.msra.mxu0 %v3468
        %3470 = vmatprep.subr.mxu0 0.0
        %v3471 = vand.u32 %v248, 4294901760
        %v3472 = vsub.f32 %v248, %v3471
        %v3473 = vand.u32 %v3472, 4294901760
        %3474 = vmatpush1.msra.mxu0 %v3473
        %3475 = vmatprep.subr.mxu0 0.0
        %v3476 = vand.u32 %v247, 4294901760
        %v3477 = vsub.f32 %v247, %v3476
        %v3478 = vand.u32 %v3477, 4294901760
        %3479 = vmatpush1.msra.mxu0 %v3478
        %3480 = vmatprep.subr.mxu0 0.0
        %v3481 = vand.u32 %v246, 4294901760
        %v3482 = vsub.f32 %v246, %v3481
        %v3483 = vand.u32 %v3482, 4294901760
        %3484 = vmatpush1.msra.mxu0 %v3483
        %3485 = vmatprep.subr.mxu0 0.0
        %v3486 = vand.u32 %v245, 4294901760
        %v3487 = vsub.f32 %v245, %v3486
        %v3488 = vand.u32 %v3487, 4294901760
        %3489 = vmatpush1.msra.mxu0 %v3488
        %3490 = vmatprep.subr.mxu0 0.0
        %v3491 = vand.u32 %v244, 4294901760
        %v3492 = vsub.f32 %v244, %v3491
        %v3493 = vand.u32 %v3492, 4294901760
        %3494 = vmatpush1.msra.mxu0 %v3493
        %3495 = vmatprep.subr.mxu0 0.0
        %v3496 = vand.u32 %v243, 4294901760
        %v3497 = vsub.f32 %v243, %v3496
        %v3498 = vand.u32 %v3497, 4294901760
        %3499 = vmatpush1.msra.mxu0 %v3498
        %3500 = vmatprep.subr.mxu0 0.0
        %v3501 = vand.u32 %v242, 4294901760
        %v3502 = vsub.f32 %v242, %v3501
        %v3503 = vand.u32 %v3502, 4294901760
        %3504 = vmatpush1.msra.mxu0 %v3503
        %3505 = vmatprep.subr.mxu0 0.0
        %v3506 = vand.u32 %v241, 4294901760
        %v3507 = vsub.f32 %v241, %v3506
        %v3508 = vand.u32 %v3507, 4294901760
        %3509 = vmatpush1.msra.mxu0 %v3508
        %3510 = vmatprep.subr.mxu0 0.0
        %v3511 = vand.u32 %v240, 4294901760
        %v3512 = vsub.f32 %v240, %v3511
        %v3513 = vand.u32 %v3512, 4294901760
        %3514 = vmatpush1.msra.mxu0 %v3513
        %3515 = vmatprep.subr.mxu0 0.0
        %v3516 = vand.u32 %v239, 4294901760
        %v3517 = vsub.f32 %v239, %v3516
        %v3518 = vand.u32 %v3517, 4294901760
        %3519 = vmatpush1.msra.mxu0 %v3518
        %3520 = vmatprep.subr.mxu0 0.0
        %v3521 = vand.u32 %v238, 4294901760
        %v3522 = vsub.f32 %v238, %v3521
        %v3523 = vand.u32 %v3522, 4294901760
        %3524 = vmatpush1.msra.mxu0 %v3523
        %3525 = vmatprep.subr.mxu0 0.0
        %v3526 = vand.u32 %v237, 4294901760
        %v3527 = vsub.f32 %v237, %v3526
        %v3528 = vand.u32 %v3527, 4294901760
        %3529 = vmatpush1.msra.mxu0 %v3528
        %3530 = vmatprep.subr.mxu0 0.0
        %v3531 = vand.u32 %v236, 4294901760
        %v3532 = vsub.f32 %v236, %v3531
        %v3533 = vand.u32 %v3532, 4294901760
        %3534 = vmatpush1.msra.mxu0 %v3533
        %3535 = vmatprep.subr.mxu0 0.0
        %v3536 = vand.u32 %v267, 4294901760
        %v3537 = vsub.f32 %v267, %v3536
        %v3538 = vand.u32 %v3537, 4294901760
        %3539 = vmatpush2.msra.mxu0 %v3538
        %3540 = vmatprep.subr.mxu0 0.0
        %v3541 = vand.u32 %v266, 4294901760
        %v3542 = vsub.f32 %v266, %v3541
        %v3543 = vand.u32 %v3542, 4294901760
        %3544 = vmatpush2.msra.mxu0 %v3543
        %3545 = vmatprep.subr.mxu0 0.0
        %v3546 = vand.u32 %v265, 4294901760
        %v3547 = vsub.f32 %v265, %v3546
        %v3548 = vand.u32 %v3547, 4294901760
        %3549 = vmatpush2.msra.mxu0 %v3548
        %3550 = vmatprep.subr.mxu0 0.0
        %v3551 = vand.u32 %v264, 4294901760
        %v3552 = vsub.f32 %v264, %v3551
        %v3553 = vand.u32 %v3552, 4294901760
        %3554 = vmatpush2.msra.mxu0 %v3553
        %3555 = vmatprep.subr.mxu0 0.0
        %v3556 = vand.u32 %v263, 4294901760
        %v3557 = vsub.f32 %v263, %v3556
        %v3558 = vand.u32 %v3557, 4294901760
        %3559 = vmatpush2.msra.mxu0 %v3558
        %3560 = vmatprep.subr.mxu0 0.0
        %v3561 = vand.u32 %v262, 4294901760
        %v3562 = vsub.f32 %v262, %v3561
        %v3563 = vand.u32 %v3562, 4294901760
        %3564 = vmatpush2.msra.mxu0 %v3563
        %3565 = vmatprep.subr.mxu0 0.0
        %v3566 = vand.u32 %v261, 4294901760
        %v3567 = vsub.f32 %v261, %v3566
        %v3568 = vand.u32 %v3567, 4294901760
        %3569 = vmatpush2.msra.mxu0 %v3568
        %3570 = vmatprep.subr.mxu0 0.0
        %v3571 = vand.u32 %v260, 4294901760
        %v3572 = vsub.f32 %v260, %v3571
        %v3573 = vand.u32 %v3572, 4294901760
        %3574 = vmatpush2.msra.mxu0 %v3573
        %3575 = vmatprep.subr.mxu0 0.0
        %v3576 = vand.u32 %v259, 4294901760
        %v3577 = vsub.f32 %v259, %v3576
        %v3578 = vand.u32 %v3577, 4294901760
        %3579 = vmatpush2.msra.mxu0 %v3578
        %3580 = vmatprep.subr.mxu0 0.0
        %v3581 = vand.u32 %v258, 4294901760
        %v3582 = vsub.f32 %v258, %v3581
        %v3583 = vand.u32 %v3582, 4294901760
        %3584 = vmatpush2.msra.mxu0 %v3583
        %3585 = vmatprep.subr.mxu0 0.0
        %v3586 = vand.u32 %v257, 4294901760
        %v3587 = vsub.f32 %v257, %v3586
        %v3588 = vand.u32 %v3587, 4294901760
        %3589 = vmatpush2.msra.mxu0 %v3588
        %3590 = vmatprep.subr.mxu0 0.0
        %v3591 = vand.u32 %v256, 4294901760
        %v3592 = vsub.f32 %v256, %v3591
        %v3593 = vand.u32 %v3592, 4294901760
        %3594 = vmatpush2.msra.mxu0 %v3593
        %3595 = vmatprep.subr.mxu0 0.0
        %v3596 = vand.u32 %v255, 4294901760
        %v3597 = vsub.f32 %v255, %v3596
        %v3598 = vand.u32 %v3597, 4294901760
        %3599 = vmatpush2.msra.mxu0 %v3598
        %3600 = vmatprep.subr.mxu0 0.0
        %v3601 = vand.u32 %v254, 4294901760
        %v3602 = vsub.f32 %v254, %v3601
        %v3603 = vand.u32 %v3602, 4294901760
        %3604 = vmatpush2.msra.mxu0 %v3603
        %3605 = vmatprep.subr.mxu0 0.0
        %v3606 = vand.u32 %v253, 4294901760
        %v3607 = vsub.f32 %v253, %v3606
        %v3608 = vand.u32 %v3607, 4294901760
        %3609 = vmatpush2.msra.mxu0 %v3608
        %3610 = vmatprep.subr.mxu0 0.0
        %v3611 = vand.u32 %v252, 4294901760
        %v3612 = vsub.f32 %v252, %v3611
        %v3613 = vand.u32 %v3612, 4294901760
        %3614 = vmatpush2.msra.mxu0 %v3613
        %v3615 = vand.u32 %v2864, 4294901760
        %3616 = vmatprep.mubr.f32.mxu0 %v3615
        %v3617 = vand.u32 %v2863, 4294901760
        %3618 = vmatmul.mubr.f32.gmra.mxu0 %v3617
        %v3619 = vpop.f32.mrf.mxu0
        %v3620 = vadd.f32 %v3452, %v3619
        %v3621 = vpop.f32.mrf.mxu0
        %3622 = vdwg.mxu0
        %3623 = vmatprep.subr.mxu0 0.0
        %v3624 = vand.u32 %v251, 4294901760
        %3625 = vmatpush1.msra.mxu0 %v3624
        %3626 = vmatprep.subr.mxu0 0.0
        %v3627 = vand.u32 %v250, 4294901760
        %3628 = vmatpush1.msra.mxu0 %v3627
        %3629 = vmatprep.subr.mxu0 0.0
        %v3630 = vand.u32 %v249, 4294901760
        %3631 = vmatpush1.msra.mxu0 %v3630
        %3632 = vmatprep.subr.mxu0 0.0
        %v3633 = vand.u32 %v248, 4294901760
        %3634 = vmatpush1.msra.mxu0 %v3633
        %3635 = vmatprep.subr.mxu0 0.0
        %v3636 = vand.u32 %v247, 4294901760
        %3637 = vmatpush1.msra.mxu0 %v3636
        %3638 = vmatprep.subr.mxu0 0.0
        %v3639 = vand.u32 %v246, 4294901760
        %3640 = vmatpush1.msra.mxu0 %v3639
        %3641 = vmatprep.subr.mxu0 0.0
        %v3642 = vand.u32 %v245, 4294901760
        %3643 = vmatpush1.msra.mxu0 %v3642
        %3644 = vmatprep.subr.mxu0 0.0
        %v3645 = vand.u32 %v244, 4294901760
        %3646 = vmatpush1.msra.mxu0 %v3645
        %3647 = vmatprep.subr.mxu0 0.0
        %v3648 = vand.u32 %v243, 4294901760
        %3649 = vmatpush1.msra.mxu0 %v3648
        %3650 = vmatprep.subr.mxu0 0.0
        %v3651 = vand.u32 %v242, 4294901760
        %3652 = vmatpush1.msra.mxu0 %v3651
        %3653 = vmatprep.subr.mxu0 0.0
        %v3654 = vand.u32 %v241, 4294901760
        %3655 = vmatpush1.msra.mxu0 %v3654
        %3656 = vmatprep.subr.mxu0 0.0
        %v3657 = vand.u32 %v240, 4294901760
        %3658 = vmatpush1.msra.mxu0 %v3657
        %3659 = vmatprep.subr.mxu0 0.0
        %v3660 = vand.u32 %v239, 4294901760
        %3661 = vmatpush1.msra.mxu0 %v3660
        %3662 = vmatprep.subr.mxu0 0.0
        %v3663 = vand.u32 %v238, 4294901760
        %3664 = vmatpush1.msra.mxu0 %v3663
        %3665 = vmatprep.subr.mxu0 0.0
        %v3666 = vand.u32 %v237, 4294901760
        %3667 = vmatpush1.msra.mxu0 %v3666
        %3668 = vmatprep.subr.mxu0 0.0
        %v3669 = vand.u32 %v236, 4294901760
        %3670 = vmatpush1.msra.mxu0 %v3669
        %3671 = vmatprep.subr.mxu0 0.0
        %v3672 = vand.u32 %v267, 4294901760
        %3673 = vmatpush2.msra.mxu0 %v3672
        %3674 = vmatprep.subr.mxu0 0.0
        %v3675 = vand.u32 %v266, 4294901760
        %3676 = vmatpush2.msra.mxu0 %v3675
        %3677 = vmatprep.subr.mxu0 0.0
        %v3678 = vand.u32 %v265, 4294901760
        %3679 = vmatpush2.msra.mxu0 %v3678
        %3680 = vmatprep.subr.mxu0 0.0
        %v3681 = vand.u32 %v264, 4294901760
        %3682 = vmatpush2.msra.mxu0 %v3681
        %3683 = vmatprep.subr.mxu0 0.0
        %v3684 = vand.u32 %v263, 4294901760
        %3685 = vmatpush2.msra.mxu0 %v3684
        %3686 = vmatprep.subr.mxu0 0.0
        %v3687 = vand.u32 %v262, 4294901760
        %3688 = vmatpush2.msra.mxu0 %v3687
        %3689 = vmatprep.subr.mxu0 0.0
        %v3690 = vand.u32 %v261, 4294901760
        %3691 = vmatpush2.msra.mxu0 %v3690
        %3692 = vmatprep.subr.mxu0 0.0
        %v3693 = vand.u32 %v260, 4294901760
        %3694 = vmatpush2.msra.mxu0 %v3693
        %3695 = vmatprep.subr.mxu0 0.0
        %v3696 = vand.u32 %v259, 4294901760
        %3697 = vmatpush2.msra.mxu0 %v3696
        %3698 = vmatprep.subr.mxu0 0.0
        %v3699 = vand.u32 %v258, 4294901760
        %3700 = vmatpush2.msra.mxu0 %v3699
        %3701 = vmatprep.subr.mxu0 0.0
        %v3702 = vand.u32 %v257, 4294901760
        %3703 = vmatpush2.msra.mxu0 %v3702
        %3704 = vmatprep.subr.mxu0 0.0
        %v3705 = vand.u32 %v256, 4294901760
        %3706 = vmatpush2.msra.mxu0 %v3705
        %3707 = vmatprep.subr.mxu0 0.0
        %v3708 = vand.u32 %v255, 4294901760
        %3709 = vmatpush2.msra.mxu0 %v3708
        %3710 = vmatprep.subr.mxu0 0.0
        %v3711 = vand.u32 %v254, 4294901760
        %3712 = vmatpush2.msra.mxu0 %v3711
        %3713 = vmatprep.subr.mxu0 0.0
        %v3714 = vand.u32 %v253, 4294901760
        %3715 = vmatpush2.msra.mxu0 %v3714
        %3716 = vmatprep.subr.mxu0 0.0
        %v3717 = vand.u32 %v252, 4294901760
        %3718 = vmatpush2.msra.mxu0 %v3717
        %v3719 = vand.u32 %v2864, 4294901760
        %3720 = vmatprep.mubr.f32.mxu0 %v3719
        %v3721 = vand.u32 %v2863, 4294901760
        %3722 = vmatmul.mubr.f32.gmra.mxu0 %v3721
        %v3723 = vpop.f32.mrf.mxu0
        %v3724 = vadd.f32 %v3620, %v3723
        %v3725 = vpop.f32.mrf.mxu0
        %3726 = vdwg.mxu0
        %s3727 = sld [smem:[#allocation8]]
        %v3728 = vstv %s3727
        %v3729 = vmul.f32 %v3728, %v1129
        %s3730 = sld [smem:[#allocation8 + $0x1]]
        %v3731 = vstv %s3730
        %v3732 = vmul.f32 %v3731, %v1994
        %v3733 = vadd.f32 %v3729, %v3732
        %s3734 = sld [smem:[#allocation8 + $0x2]]
        %v3735 = vstv %s3734
        %v3736 = vmul.f32 %v3735, %v2859
        %v3737 = vadd.f32 %v3733, %v3736
        %s3738 = sld [smem:[#allocation8 + $0x3]]
        %v3739 = vstv %s3738
        %v3740 = vmul.f32 %v3739, %v3724
        %v3741 = vadd.f32 %v3737, %v3740
        %3742 = vst [vmem:[%s235] sm:$0xff] %v3741
        %s3743 = sld [smem:[#allocation8 + $0x80]]
        %v3744 = vstv %s3743
        %v3745 = vmul.f32 %v3744, %v1129
        %s3746 = sld [smem:[#allocation8 + $0x81]]
        %v3747 = vstv %s3746
        %v3748 = vmul.f32 %v3747, %v1994
        %v3749 = vadd.f32 %v3745, %v3748
        %s3750 = sld [smem:[#allocation8 + $0x82]]
        %v3751 = vstv %s3750
        %v3752 = vmul.f32 %v3751, %v2859
        %v3753 = vadd.f32 %v3749, %v3752
        %s3754 = sld [smem:[#allocation8 + $0x83]]
        %v3755 = vstv %s3754
        %v3756 = vmul.f32 %v3755, %v3724
        %v3757 = vadd.f32 %v3753, %v3756
        %s3758 = scalar_lea.vmem %s235, 8 [#allocation9]
        %3759 = vst [vmem:[%s3758] sm:$0xff] %v3757
        %s3760 = sld [smem:[#allocation8 + $0x100]]
        %v3761 = vstv %s3760
        %v3762 = vmul.f32 %v3761, %v1129
        %s3763 = sld [smem:[#allocation8 + $0x101]]
        %v3764 = vstv %s3763
        %v3765 = vmul.f32 %v3764, %v1994
        %v3766 = vadd.f32 %v3762, %v3765
        %s3767 = sld [smem:[#allocation8 + $0x102]]
        %v3768 = vstv %s3767
        %v3769 = vmul.f32 %v3768, %v2859
        %v3770 = vadd.f32 %v3766, %v3769
        %s3771 = sld [smem:[#allocation8 + $0x103]]
        %v3772 = vstv %s3771
        %v3773 = vmul.f32 %v3772, %v3724
        %v3774 = vadd.f32 %v3770, %v3773
        %s3775 = scalar_lea.vmem %s235, 16 [#allocation9]
        %3776 = vst [vmem:[%s3775] sm:$0xff] %v3774
        %s3777 = sld [smem:[#allocation8 + $0x180]]
        %v3778 = vstv %s3777
        %v3779 = vmul.f32 %v3778, %v1129
        %s3780 = sld [smem:[#allocation8 + $0x181]]
        %v3781 = vstv %s3780
        %v3782 = vmul.f32 %v3781, %v1994
        %v3783 = vadd.f32 %v3779, %v3782
        %s3784 = sld [smem:[#allocation8 + $0x182]]
        %v3785 = vstv %s3784
        %v3786 = vmul.f32 %v3785, %v2859
        %v3787 = vadd.f32 %v3783, %v3786
        %s3788 = sld [smem:[#allocation8 + $0x183]]
        %v3789 = vstv %s3788
        %v3790 = vmul.f32 %v3789, %v3724
        %v3791 = vadd.f32 %v3787, %v3790
        %s3792 = scalar_lea.vmem %s235, 24 [#allocation9]
        %3793 = vst [vmem:[%s3792] sm:$0xff] %v3791
        %s3794 = sld [smem:[#allocation8 + $0x200]]
        %v3795 = vstv %s3794
        %v3796 = vmul.f32 %v3795, %v1129
        %s3797 = sld [smem:[#allocation8 + $0x201]]
        %v3798 = vstv %s3797
        %v3799 = vmul.f32 %v3798, %v1994
        %v3800 = vadd.f32 %v3796, %v3799
        %s3801 = sld [smem:[#allocation8 + $0x202]]
        %v3802 = vstv %s3801
        %v3803 = vmul.f32 %v3802, %v2859
        %v3804 = vadd.f32 %v3800, %v3803
        %s3805 = sld [smem:[#allocation8 + $0x203]]
        %v3806 = vstv %s3805
        %v3807 = vmul.f32 %v3806, %v3724
        %v3808 = vadd.f32 %v3804, %v3807
        %s3809 = scalar_lea.vmem %s235, 32 [#allocation9]
        %3810 = vst [vmem:[%s3809] sm:$0xff] %v3808
        %s3811 = sld [smem:[#allocation8 + $0x280]]
        %v3812 = vstv %s3811
        %v3813 = vmul.f32 %v3812, %v1129
        %s3814 = sld [smem:[#allocation8 + $0x281]]
        %v3815 = vstv %s3814
        %v3816 = vmul.f32 %v3815, %v1994
        %v3817 = vadd.f32 %v3813, %v3816
        %s3818 = sld [smem:[#allocation8 + $0x282]]
        %v3819 = vstv %s3818
        %v3820 = vmul.f32 %v3819, %v2859
        %v3821 = vadd.f32 %v3817, %v3820
        %s3822 = sld [smem:[#allocation8 + $0x283]]
        %v3823 = vstv %s3822
        %v3824 = vmul.f32 %v3823, %v3724
        %v3825 = vadd.f32 %v3821, %v3824
        %s3826 = scalar_lea.vmem %s235, 40 [#allocation9]
        %3827 = vst [vmem:[%s3826] sm:$0xff] %v3825
        %s3828 = sld [smem:[#allocation8 + $0x300]]
        %v3829 = vstv %s3828
        %v3830 = vmul.f32 %v3829, %v1129
        %s3831 = sld [smem:[#allocation8 + $0x301]]
        %v3832 = vstv %s3831
        %v3833 = vmul.f32 %v3832, %v1994
        %v3834 = vadd.f32 %v3830, %v3833
        %s3835 = sld [smem:[#allocation8 + $0x302]]
        %v3836 = vstv %s3835
        %v3837 = vmul.f32 %v3836, %v2859
        %v3838 = vadd.f32 %v3834, %v3837
        %s3839 = sld [smem:[#allocation8 + $0x303]]
        %v3840 = vstv %s3839
        %v3841 = vmul.f32 %v3840, %v3724
        %v3842 = vadd.f32 %v3838, %v3841
        %s3843 = scalar_lea.vmem %s235, 48 [#allocation9]
        %3844 = vst [vmem:[%s3843] sm:$0xff] %v3842
        %s3845 = sld [smem:[#allocation8 + $0x380]]
        %v3846 = vstv %s3845
        %v3847 = vmul.f32 %v3846, %v1129
        %s3848 = sld [smem:[#allocation8 + $0x381]]
        %v3849 = vstv %s3848
        %v3850 = vmul.f32 %v3849, %v1994
        %v3851 = vadd.f32 %v3847, %v3850
        %s3852 = sld [smem:[#allocation8 + $0x382]]
        %v3853 = vstv %s3852
        %v3854 = vmul.f32 %v3853, %v2859
        %v3855 = vadd.f32 %v3851, %v3854
        %s3856 = sld [smem:[#allocation8 + $0x383]]
        %v3857 = vstv %s3856
        %v3858 = vmul.f32 %v3857, %v3724
        %v3859 = vadd.f32 %v3855, %v3858
        %s3860 = scalar_lea.vmem %s235, 56 [#allocation9]
        %3861 = vst [vmem:[%s3860] sm:$0xff] %v3859
        %s3862 = sand.u32 %s114, 1
        %s3863 = scalar_lea.sflag [#allocation4], %s3862
        %s3864 = sand.u32 %s114, 1
        %s3865 = smul.addr %s3864, 64
        %s3866 = scalar_lea.vmem [#allocation9], %s3865
        // Predicated region
        $region45: #{tpu_custom_call.1} parent=31 // pred_check
          %p3867 = pneg %p124
        $region46: #{tpu_custom_call.1} parent=31 // pred_check_branch
          %3869 = sbr.rel (%p3867) target = $region48
        $region47: #{tpu_custom_call.1} parent=31 // pred_region
          %s3871 = ssub.s32 1024, 1024
          %3872 = vsyncadd %s3863, %s3871
          %s3873 = smul.addr %s26, 8
          %s3874 = sadd.s32 %s27, %s3873
          %s3875 = smul.addr %s3874, 128
          %s3876 = scalar_lea.hbm %s3, %s3875
          %s3877 = sshll.u32 %s3866, 4
          %s3878 = int_to_ptr.vmem [resolvable:$true] %s3877
          %3883 = dma.vmem_to_hbm [thread:$0]  %s3878, 1024, %s3876, %s3863, 128, 128, 8
        $region48: #{tpu_custom_call.1} parent=31 // pred_fallthru
          _
      $region32: #{tpu_custom_call.1} parent=5 // pred_fallthru
        _
      %p3884 = scmp.le.s32.totalorder 2, %s17
      // Predicated region
      $region49: #{tpu_custom_call.1} parent=5 // pred_check
        %p3885 = pneg %p3884
      $region50: #{tpu_custom_call.1} parent=5 // pred_check_branch
        %3887 = sbr.rel (%p3885) target = $region52
      $region51: #{tpu_custom_call.1} parent=5 // pred_region
        %s3888 = ssub.s32 %s17, 2
        // Predicated region
        $region53: #{tpu_custom_call.1} parent=51 // pred_check
          %p3889 = pneg %p130
        $region54: #{tpu_custom_call.1} parent=51 // pred_check_branch
          %3891 = sbr.rel (%p3889) target = $region56
        $region55: #{tpu_custom_call.1} parent=51 // pred_region
          %s3892 = sand.u32 %s115, 1
          %s3893 = scalar_lea.sflag [#allocation4], %s3892
          %s3894 = sand.u32 %s115, 1
          %s3895 = smul.addr %s3894, 64
          %s3896 = scalar_lea.vmem [#allocation9], %s3895
          %3897 = dma.done %s3893, 1024
        $region56: #{tpu_custom_call.1} parent=51 // pred_fallthru
          _
      $region52: #{tpu_custom_call.1} parent=5 // pred_fallthru
        _
    $region6: #{tpu_custom_call.1} parent=1 // loop_footer
      %s21 = sadd.s32 1, %s17
    $region7: #{tpu_custom_call.1} parent=1 // loop_footer_branch
      %16 = sbr.rel target = $region3
    $region8: #{tpu_custom_call.1} parent=1 // loop_exit
      _
    %3898 = vsyncpa [#allocation3], 1
    %s3899 = scalar_lea.sflag [#allocation3], 1
    %3900 = vsyncpa %s3899, 1
    %3901 = vsyncpa [#allocation7], 1
    %3902 = vsyncpa [#allocation4], 1
    %s3903 = scalar_lea.sflag [#allocation4], 1
    %3904 = vsyncpa %s3903, 1
    %3905 = vsyncpa [#allocation5], 1
    %s3906 = scalar_lea.sflag [#allocation5], 1
    %3907 = vsyncpa %s3906, 1

</llo_original>
